<compile_context>
chip_gen: v5e
topology: v5e:2x2
jax: 0.10.0
libtpu: 0.0.40
codegen_flags: <defaults>
</compile_context>

<pallas_src>
import functools

import jax
import jax.numpy as jnp
from jax import lax
from jax.experimental import pallas as pl
from jax.experimental.pallas import tpu as pltpu


def _round_up(x, m):
    return (x + m - 1) // m * m


def _lstmp_kernel(x_ref, h0_ref, c0_ref, b_ref, wx_hbm, wh_hbm, wr_hbm,
                  y_ref, h_out_ref, c_out_ref,
                  h_scr, c_scr, gx_scr, wx_vmem, wh_vmem, wr_vmem, copy_sem,
                  *, seq_len, time_block, compute_dtype):
    t_blk = pl.program_id(1)   # time axis is the inner ("arbitrary") grid axis

    # One-time (per batch block, hence per core under megacore sharding)
    # residency copy of the weights into single-buffered VMEM scratch, and
    # seeding of the recurrent state. The state seeding overlaps the DMAs.
    @pl.when(t_blk == 0)
    def _():
        cpx = pltpu.make_async_copy(wx_hbm, wx_vmem, copy_sem.at[0])
        cph = pltpu.make_async_copy(wh_hbm, wh_vmem, copy_sem.at[1])
        cpr = pltpu.make_async_copy(wr_hbm, wr_vmem, copy_sem.at[2])
        cpx.start(); cph.start(); cpr.start()
        h_scr[...] = h0_ref[...]
        c_scr[...] = c0_ref[...]
        cpx.wait(); cph.wait(); cpr.wait()

    tb, bn, ip = x_ref.shape
    pp = h_scr.shape[-1]          # padded proj size   (multiple of 128)
    hp = c_scr.shape[-1]          # padded hidden size (multiple of 128)

    # Hoisted, batched input projection: one tall (TB*BN, Ip) MXU matmul per
    # grid step, with the bias folded in once (not per time step).
    xb = x_ref[...].reshape(tb * bn, ip).astype(compute_dtype)
    gx = jnp.dot(xb, wx_vmem[...], preferred_element_type=jnp.float32)
    gx = gx + b_ref[...]                              # broadcast (1, 4Hp)
    gx_scr[...] = gx.reshape(tb, bn, 4 * hp)

    wh = wh_vmem[...]                                 # (Pp, 4Hp)
    wr = wr_vmem[...]                                 # (Hp, Pp)

    def step(s, carry):
        h_prev, c_prev = carry                        # (BN,Pp) f32, (BN,Hp) f32
        # Serial-path matmul is only the recurrent part now.
        gates = gx_scr[s] + jnp.dot(h_prev.astype(compute_dtype), wh,
                                    preferred_element_type=jnp.float32)

        i = jax.nn.sigmoid(gates[:, 0 * hp:1 * hp])
        f = jax.nn.sigmoid(gates[:, 1 * hp:2 * hp])
        g = jnp.tanh(gates[:, 2 * hp:3 * hp])
        o = jax.nn.sigmoid(gates[:, 3 * hp:4 * hp])

        c_new = f * c_prev + i * g                    # (BN, Hp) f32
        h_full = o * jnp.tanh(c_new)                  # (BN, Hp) f32
        h_new = jnp.dot(h_full.astype(compute_dtype), wr,
                        preferred_element_type=jnp.float32)   # (BN, Pp)

        y_ref[s] = h_new.astype(y_ref.dtype)

        # Snapshot the final state exactly at the last valid time step; padded
        # tail steps (if any) never touch h_out/c_out, so no per-step freeze
        # selects are needed anywhere.
        @pl.when(t_blk * time_block + s == seq_len - 1)
        def _():
            h_out_ref[...] = h_new.astype(h_out_ref.dtype)
            c_out_ref[...] = c_new.astype(c_out_ref.dtype)

        return (h_new, c_new)

    h_fin, c_fin = lax.fori_loop(0, tb, step, (h_scr[...], c_scr[...]),
                                 unroll=True)

    # Carry the recurrent state across time blocks (scratch persists across
    # grid iterations; time axis MUST stay "arbitrary").
    h_scr[...] = h_fin
    c_scr[...] = c_fin


def pack_lstmp_params(w_ih, w_hh, w_hr, b, *, compute_dtype=jnp.float32):
    """One-time weight plumbing (call once per parameter set, not per forward).

    Returns gate-padded, pre-transposed weights:
      Wx (Ip, 4Hp), Wh (Pp, 4Hp), Wr (Hp, Pp) in `compute_dtype`,
      bias (1, 4Hp) in f32. Padding lanes are zero and numerically inert.
    """
    P, H = w_hr.shape
    I = w_ih.shape[1]
    assert w_ih.shape == (4 * H, I)
    assert w_hh.shape == (4 * H, P)
    assert b.shape == (4 * H,)

    Ip, Pp, Hp = _round_up(I, 128), _round_up(P, 128), _round_up(H, 128)
    w_ih_t = w_ih.T.astype(compute_dtype)   # (I, 4H)
    w_hh_t = w_hh.T.astype(compute_dtype)   # (P, 4H)

    Wx = jnp.zeros((Ip, 4 * Hp), compute_dtype)
    Wh = jnp.zeros((Pp, 4 * Hp), compute_dtype)
    b_p = jnp.zeros((1, 4 * Hp), jnp.float32)
    for g in range(4):
        Wx = Wx.at[:I, g * Hp:g * Hp + H].set(w_ih_t[:, g * H:(g + 1) * H])
        Wh = Wh.at[:P, g * Hp:g * Hp + H].set(w_hh_t[:, g * H:(g + 1) * H])
        b_p = b_p.at[0, g * Hp:g * Hp + H].set(
            b[g * H:(g + 1) * H].astype(jnp.float32))
    Wr = jnp.zeros((Hp, Pp), compute_dtype).at[:H, :P].set(
        w_hr.T.astype(compute_dtype))

    return dict(Wx=Wx, Wh=Wh, Wr=Wr, b=b_p,
                sizes=(I, H, P, Ip, Hp, Pp),
                compute_dtype=compute_dtype)


def lstmp_forward_packed(x, h0, c0, params, *, time_block=32, batch_block=None):
    """Pallas LSTMP forward on pre-packed params.

    x:  (T, N, input_size) time-major; h0: (1, N, P); c0: (1, N, H).
    Returns (y (T,N,P), h (1,N,P), c (1,N,H)).

    batch_block: rows per batch grid block (multiple of 8). Default: whole
    (padded) batch in one block. On v7x, choosing it so there are >= 2 batch
    blocks lets the "parallel" batch axis shard across the 2 TensorCores.
    """
    T, N, I_in = x.shape
    I, H, P, Ip, Hp, Pp = params["sizes"]
    assert I_in == I
    compute_dtype = params["compute_dtype"]
    out_dtype = x.dtype

    # Sublane-aligned batch, lane-aligned feature dims, blocked time.
    Np = _round_up(N, 8)
    BN = Np if batch_block is None else min(_round_up(batch_block, 8), Np)
    Np = _round_up(Np, BN)
    TB = min(time_block, T)
    T_pad = _round_up(T, TB)

    # Padded inputs / initial state (padding rows/lanes are zero, stay zero).
    x_p = jnp.zeros((T_pad, Np, Ip), compute_dtype).at[:T, :N, :I].set(
        x.astype(compute_dtype))
    h0_p = jnp.zeros((Np, Pp), jnp.float32).at[:N, :P].set(
        h0[0].astype(jnp.float32))
    c0_p = jnp.zeros((Np, Hp), jnp.float32).at[:N, :H].set(
        c0[0].astype(jnp.float32))

    kernel = functools.partial(_lstmp_kernel, seq_len=T, time_block=TB,
                               compute_dtype=compute_dtype)

    # Explicit VMEM budget: blocks (double-buffered) + resident scratch,
    # with generous headroom, clamped to the v7x physical ceiling.
    wbytes = jnp.dtype(compute_dtype).itemsize
    f32b = 4
    block_bytes = 2 * (TB * BN * Ip * wbytes          # x block
                       + TB * BN * Pp * f32b          # y block
                       + BN * Pp * f32b + BN * Hp * f32b   # h0 / c0
                       + 4 * Hp * f32b)               # bias
    scratch_bytes = ((BN * Pp + BN * Hp + TB * BN * 4 * Hp) * f32b
                     + (Ip * 4 * Hp + Pp * 4 * Hp + Hp * Pp) * wbytes)
    vmem_limit = int(min(64 * 1024 * 1024,
                         max(2 * (block_bytes + scratch_bytes) + (2 << 20),
                             32 * 1024 * 1024)))

    grid_spec = pltpu.PrefetchScalarGridSpec(
        num_scalar_prefetch=0,
        grid=(Np // BN, T_pad // TB),                 # (batch blocks, time blocks)
        in_specs=[
            pl.BlockSpec((TB, BN, Ip), lambda b, t: (t, b, 0)),   # x block
            pl.BlockSpec((BN, Pp), lambda b, t: (b, 0)),          # h0
            pl.BlockSpec((BN, Hp), lambda b, t: (b, 0)),          # c0
            pl.BlockSpec((1, 4 * Hp), lambda b, t: (0, 0)),       # bias
            pl.BlockSpec(memory_space=pl.ANY),                    # W_x (HBM)
            pl.BlockSpec(memory_space=pl.ANY),                    # W_h (HBM)
            pl.BlockSpec(memory_space=pl.ANY),                    # W_r (HBM)
        ],
        out_specs=(
            pl.BlockSpec((TB, BN, Pp), lambda b, t: (t, b, 0)),   # y block
            pl.BlockSpec((BN, Pp), lambda b, t: (b, 0)),          # final h
            pl.BlockSpec((BN, Hp), lambda b, t: (b, 0)),          # final c
        ),
        scratch_shapes=[
            pltpu.VMEM((BN, Pp), jnp.float32),                    # h carry
            pltpu.VMEM((BN, Hp), jnp.float32),                    # c carry
            pltpu.VMEM((TB, BN, 4 * Hp), jnp.float32),            # gates_x
            pltpu.VMEM((Ip, 4 * Hp), compute_dtype),              # W_x resident
            pltpu.VMEM((Pp, 4 * Hp), compute_dtype),              # W_h resident
            pltpu.VMEM((Hp, Pp), compute_dtype),                  # W_r resident
            pltpu.SemaphoreType.DMA((3,)),                        # weight DMAs
        ],
    )

    out_shape = (
        jax.ShapeDtypeStruct((T_pad, Np, Pp), out_dtype),
        jax.ShapeDtypeStruct((Np, Pp), out_dtype),
        jax.ShapeDtypeStruct((Np, Hp), out_dtype),
    )

    y_pad, h_pad, c_pad = pl.pallas_call(
        kernel,
        out_shape=out_shape,
        grid_spec=grid_spec,
        compiler_params=pltpu.CompilerParams(
            # batch blocks are independent ("parallel", v7x 2-TC split);
            # the time recurrence must stay sequential ("arbitrary").
            dimension_semantics=("parallel", "arbitrary"),
            vmem_limit_bytes=vmem_limit),
    )(x_p, h0_p, c0_p, params["b"], params["Wx"], params["Wh"], params["Wr"])

    # Strip padding (free wrapper-side plumbing).
    y = y_pad[:T, :N, :P]
    h_fin = h_pad[:N, :P][None]
    c_fin = c_pad[:N, :H][None]
    return y, h_fin, c_fin


def lstmp_forward(x, h0, c0, w_ih, w_hh, w_hr, b, *, time_block=32,
                  batch_block=None, compute_dtype=jnp.float32):
    """Convenience wrapper: packs weights then runs the kernel."""
    params = pack_lstmp_params(w_ih, w_hh, w_hr, b, compute_dtype=compute_dtype)
    return lstmp_forward_packed(x, h0, c0, params, time_block=time_block,
                                batch_block=batch_block)


def lstmp_reference(x, h0, c0, w_ih, w_hh, w_hr, b):
    """Pure-JAX reference mirroring the PyTorch forward."""
    h = h0[0]
    c = c0[0]
    H = c.shape[-1]
    ys = []
    for t in range(x.shape[0]):
        gates = x[t] @ w_ih.T + b + h @ w_hh.T
        i = jax.nn.sigmoid(gates[:, 0 * H:1 * H])
        f = jax.nn.sigmoid(gates[:, 1 * H:2 * H])
        g = jnp.tanh(gates[:, 2 * H:3 * H])
        o = jax.nn.sigmoid(gates[:, 3 * H:4 * H])
        c = f * c + i * g
        h = (o * jnp.tanh(c)) @ w_hr.T
        ys.append(h)
    return jnp.stack(ys, axis=0), h[None], c[None]


if __name__ == "__main__":
    # Small shapes consistent with the module: 1-layer uni-directional LSTM
    # with projection, time-major input. T=12 with time_block=8 exercises the
    # cross-block state carry and the padded-tail snapshot; N=12 with
    # batch_block=8 exercises batch padding (12->16) and two "parallel"
    # batch grid blocks.
    T, N = 12, 12
    input_size, hidden_size, proj_size = 16, 32, 16

    key = jax.random.PRNGKey(0)
    ks = jax.random.split(key, 8)
    scale = 0.1
    x = jax.random.normal(ks[0], (T, N, input_size), jnp.float32)
    h0 = jax.random.normal(ks[1], (1, N, proj_size), jnp.float32)
    c0 = jax.random.normal(ks[2], (1, N, hidden_size), jnp.float32)
    w_ih = scale * jax.random.normal(ks[3], (4 * hidden_size, input_size), jnp.float32)
    w_hh = scale * jax.random.normal(ks[4], (4 * hidden_size, proj_size), jnp.float32)
    b_ih = scale * jax.random.normal(ks[5], (4 * hidden_size,), jnp.float32)
    b_hh = scale * jax.random.normal(ks[6], (4 * hidden_size,), jnp.float32)
    w_hr = scale * jax.random.normal(ks[7], (proj_size, hidden_size), jnp.float32)
    b = b_ih + b_hh  # matches self.b = b_ih + b_hh in the module

    y_ref, h_ref, c_ref = lstmp_reference(x, h0, c0, w_ih, w_hh, w_hr, b)

    # f32 matmul operands: exact-tolerance check.
    params_f32 = pack_lstmp_params(w_ih, w_hh, w_hr, b,
                                   compute_dtype=jnp.float32)
    y, h_fin, c_fin = lstmp_forward_packed(x, h0, c0, params_f32,
                                           time_block=8, batch_block=8)
    jax.block_until_ready((y, h_fin, c_fin))
    assert y.shape == (T, N, proj_size)
    assert h_fin.shape == (1, N, proj_size)
    assert c_fin.shape == (1, N, hidden_size)
    assert jnp.allclose(y, y_ref, atol=1e-5, rtol=1e-5)
    assert jnp.allclose(h_fin, h_ref, atol=1e-5, rtol=1e-5)
    assert jnp.allclose(c_fin, c_ref, atol=1e-5, rtol=1e-5)

    # bf16 matmul operands (f32 accumulation): the recommended v7x config
    # (halves weight VMEM / DMA, native MXU rate); looser tolerance.
    params_bf16 = pack_lstmp_params(w_ih, w_hh, w_hr, b,
                                    compute_dtype=jnp.bfloat16)
    y16, h16, c16 = lstmp_forward_packed(x, h0, c0, params_bf16,
                                         time_block=8, batch_block=8)
    jax.block_until_ready((y16, h16, c16))
    assert jnp.allclose(y16, y_ref, atol=5e-2, rtol=5e-2)
    assert jnp.allclose(h16, h_ref, atol=5e-2, rtol=5e-2)
    assert jnp.allclose(c16, c_ref, atol=5e-2, rtol=5e-2)

    print("KERNEL_OK")
</pallas_src>

<mosaic_0001>
module attributes {stable_mosaic.version = 11 : i64} {
  func.func @_lstmp_kernel(%arg0: i32, %arg1: i32, %arg2: memref<8x8x128xf32, #tpu.memory_space<vmem>>, %arg3: memref<8x128xf32, #tpu.memory_space<vmem>>, %arg4: memref<8x128xf32, #tpu.memory_space<vmem>>, %arg5: memref<1x512xf32, #tpu.memory_space<vmem>>, %arg6: memref<128x512xf32, #tpu.memory_space<any>>, %arg7: memref<128x512xf32, #tpu.memory_space<any>>, %arg8: memref<128x128xf32, #tpu.memory_space<any>>, %arg9: memref<8x8x128xf32, #tpu.memory_space<vmem>>, %arg10: memref<8x128xf32, #tpu.memory_space<vmem>>, %arg11: memref<8x128xf32, #tpu.memory_space<vmem>>, %arg12: memref<8x128xf32, #tpu.memory_space<vmem>>, %arg13: memref<8x128xf32, #tpu.memory_space<vmem>>, %arg14: memref<8x8x512xf32, #tpu.memory_space<vmem>>, %arg15: memref<128x512xf32, #tpu.memory_space<vmem>>, %arg16: memref<128x512xf32, #tpu.memory_space<vmem>>, %arg17: memref<128x128xf32, #tpu.memory_space<vmem>>, %arg18: memref<3x!tpu.dma_semaphore, #tpu.memory_space<semaphore_mem>>) attributes {dimension_semantics = [#tpu.dimension_semantics<parallel>, #tpu.dimension_semantics<arbitrary>], iteration_bounds = array<i64: 2, 2>, scalar_prefetch = 0 : i64, scratch_operands = 7 : i64, tpu.core_type = #tpu.core_type<tc>, window_params = [{transform_indices = @transform_0, window_bounds = array<i64: 8, 8, 128>}, {transform_indices = @transform_1, window_bounds = array<i64: 8, 128>}, {transform_indices = @transform_2, window_bounds = array<i64: 8, 128>}, {pipeline_mode = #tpu.pipeline_mode<synchronous>, transform_indices = @transform_3, window_bounds = array<i64: 1, 512>}, {}, {}, {}, {transform_indices = @transform_7, window_bounds = array<i64: 8, 8, 128>}, {transform_indices = @transform_8, window_bounds = array<i64: 8, 128>}, {transform_indices = @transform_9, window_bounds = array<i64: 8, 128>}]} {
    %c0_i32 = arith.constant 0 : i32
    %0 = arith.cmpi eq, %arg1, %c0_i32 : i32
    %1 = arith.extui %0 : i1 to i32
    %c0_i32_0 = arith.constant 0 : i32
    %2 = arith.cmpi ne, %1, %c0_i32_0 : i32
    scf.if %2 {
      %c0_i32_118 = arith.constant 0 : i32
      %338 = tpu.memref_slice %arg18[%c0_i32_118] : memref<3x!tpu.dma_semaphore, #tpu.memory_space<semaphore_mem>> -> memref<1x!tpu.dma_semaphore, #tpu.memory_space<semaphore_mem>>
      %339 = tpu.memref_squeeze %338 : memref<1x!tpu.dma_semaphore, #tpu.memory_space<semaphore_mem>> -> memref<!tpu.dma_semaphore, #tpu.memory_space<semaphore_mem>>
      tpu.enqueue_dma source(%arg6 : memref<128x512xf32, #tpu.memory_space<any>>) target(%arg15 : memref<128x512xf32, #tpu.memory_space<vmem>>) target_semaphore(%339 : memref<!tpu.dma_semaphore, #tpu.memory_space<semaphore_mem>>)
      %c1_i32_119 = arith.constant 1 : i32
      %340 = tpu.memref_slice %arg18[%c1_i32_119] : memref<3x!tpu.dma_semaphore, #tpu.memory_space<semaphore_mem>> -> memref<1x!tpu.dma_semaphore, #tpu.memory_space<semaphore_mem>>
      %341 = tpu.memref_squeeze %340 : memref<1x!tpu.dma_semaphore, #tpu.memory_space<semaphore_mem>> -> memref<!tpu.dma_semaphore, #tpu.memory_space<semaphore_mem>>
      tpu.enqueue_dma source(%arg7 : memref<128x512xf32, #tpu.memory_space<any>>) target(%arg16 : memref<128x512xf32, #tpu.memory_space<vmem>>) target_semaphore(%341 : memref<!tpu.dma_semaphore, #tpu.memory_space<semaphore_mem>>)
      %c2_i32_120 = arith.constant 2 : i32
      %342 = tpu.memref_slice %arg18[%c2_i32_120] : memref<3x!tpu.dma_semaphore, #tpu.memory_space<semaphore_mem>> -> memref<1x!tpu.dma_semaphore, #tpu.memory_space<semaphore_mem>>
      %343 = tpu.memref_squeeze %342 : memref<1x!tpu.dma_semaphore, #tpu.memory_space<semaphore_mem>> -> memref<!tpu.dma_semaphore, #tpu.memory_space<semaphore_mem>>
      tpu.enqueue_dma source(%arg8 : memref<128x128xf32, #tpu.memory_space<any>>) target(%arg17 : memref<128x128xf32, #tpu.memory_space<vmem>>) target_semaphore(%343 : memref<!tpu.dma_semaphore, #tpu.memory_space<semaphore_mem>>)
      %c0_121 = arith.constant 0 : index
      %c0_122 = arith.constant 0 : index
      %344 = vector.load %arg3[%c0_121, %c0_122] : memref<8x128xf32, #tpu.memory_space<vmem>>, vector<8x128xf32>
      %c0_123 = arith.constant 0 : index
      %c0_124 = arith.constant 0 : index
      %345 = vector.load %arg12[%c0_123, %c0_124] : memref<8x128xf32, #tpu.memory_space<vmem>>, vector<8x128xf32>
      tpu.vector_store %arg12[%c0_123, %c0_124], %344 {strides = array<i32>} : memref<8x128xf32, #tpu.memory_space<vmem>>, vector<8x128xf32>,
      %c0_125 = arith.constant 0 : index
      %c0_126 = arith.constant 0 : index
      %346 = vector.load %arg4[%c0_125, %c0_126] : memref<8x128xf32, #tpu.memory_space<vmem>>, vector<8x128xf32>
      %c0_127 = arith.constant 0 : index
      %c0_128 = arith.constant 0 : index
      %347 = vector.load %arg13[%c0_127, %c0_128] : memref<8x128xf32, #tpu.memory_space<vmem>>, vector<8x128xf32>
      tpu.vector_store %arg13[%c0_127, %c0_128], %346 {strides = array<i32>} : memref<8x128xf32, #tpu.memory_space<vmem>>, vector<8x128xf32>,
      %c0_i32_129 = arith.constant 0 : i32
      %348 = tpu.memref_slice %arg18[%c0_i32_129] : memref<3x!tpu.dma_semaphore, #tpu.memory_space<semaphore_mem>> -> memref<1x!tpu.dma_semaphore, #tpu.memory_space<semaphore_mem>>
      %349 = tpu.memref_squeeze %348 : memref<1x!tpu.dma_semaphore, #tpu.memory_space<semaphore_mem>> -> memref<!tpu.dma_semaphore, #tpu.memory_space<semaphore_mem>>
      tpu.wait_dma2 semaphore(%349 : memref<!tpu.dma_semaphore, #tpu.memory_space<semaphore_mem>>) src(%arg6 : memref<128x512xf32, #tpu.memory_space<any>>) dst(%arg15 : memref<128x512xf32, #tpu.memory_space<vmem>>)
      %c1_i32_130 = arith.constant 1 : i32
      %350 = tpu.memref_slice %arg18[%c1_i32_130] : memref<3x!tpu.dma_semaphore, #tpu.memory_space<semaphore_mem>> -> memref<1x!tpu.dma_semaphore, #tpu.memory_space<semaphore_mem>>
      %351 = tpu.memref_squeeze %350 : memref<1x!tpu.dma_semaphore, #tpu.memory_space<semaphore_mem>> -> memref<!tpu.dma_semaphore, #tpu.memory_space<semaphore_mem>>
      tpu.wait_dma2 semaphore(%351 : memref<!tpu.dma_semaphore, #tpu.memory_space<semaphore_mem>>) src(%arg7 : memref<128x512xf32, #tpu.memory_space<any>>) dst(%arg16 : memref<128x512xf32, #tpu.memory_space<vmem>>)
      %c2_i32_131 = arith.constant 2 : i32
      %352 = tpu.memref_slice %arg18[%c2_i32_131] : memref<3x!tpu.dma_semaphore, #tpu.memory_space<semaphore_mem>> -> memref<1x!tpu.dma_semaphore, #tpu.memory_space<semaphore_mem>>
      %353 = tpu.memref_squeeze %352 : memref<1x!tpu.dma_semaphore, #tpu.memory_space<semaphore_mem>> -> memref<!tpu.dma_semaphore, #tpu.memory_space<semaphore_mem>>
      tpu.wait_dma2 semaphore(%353 : memref<!tpu.dma_semaphore, #tpu.memory_space<semaphore_mem>>) src(%arg8 : memref<128x128xf32, #tpu.memory_space<any>>) dst(%arg17 : memref<128x128xf32, #tpu.memory_space<vmem>>)
    } else {
    }
    %c0 = arith.constant 0 : index
    %c0_1 = arith.constant 0 : index
    %c0_2 = arith.constant 0 : index
    %3 = vector.load %arg2[%c0, %c0_1, %c0_2] : memref<8x8x128xf32, #tpu.memory_space<vmem>>, vector<8x8x128xf32>
    %4 = vector.shape_cast %3 : vector<8x8x128xf32> to vector<64x128xf32>
    %c0_3 = arith.constant 0 : index
    %c0_4 = arith.constant 0 : index
    %5 = vector.load %arg15[%c0_3, %c0_4] : memref<128x512xf32, #tpu.memory_space<vmem>>, vector<128x512xf32>
    %cst = arith.constant dense<0.000000e+00> : vector<64x512xf32>
    %6 = tpu.matmul %4, %5, %cst {dimension_numbers = #tpu.dot_dimension_numbers<[1], [0], [0], [1], [0, 0, 1, 1], [], []>} : vector<64x128xf32>, vector<128x512xf32>, vector<64x512xf32> -> vector<64x512xf32>
    %c0_5 = arith.constant 0 : index
    %c0_6 = arith.constant 0 : index
    %7 = vector.load %arg5[%c0_5, %c0_6] : memref<1x512xf32, #tpu.memory_space<vmem>>, vector<1x512xf32>
    %8 = vector.broadcast %7 : vector<1x512xf32> to vector<64x512xf32>
    %9 = arith.addf %6, %8 : vector<64x512xf32>
    %10 = vector.shape_cast %9 : vector<64x512xf32> to vector<8x8x512xf32>
    %c0_7 = arith.constant 0 : index
    %c0_8 = arith.constant 0 : index
    %c0_9 = arith.constant 0 : index
    %11 = vector.load %arg14[%c0_7, %c0_8, %c0_9] : memref<8x8x512xf32, #tpu.memory_space<vmem>>, vector<8x8x512xf32>
    tpu.vector_store %arg14[%c0_7, %c0_8, %c0_9], %10 {strides = array<i32>} : memref<8x8x512xf32, #tpu.memory_space<vmem>>, vector<8x8x512xf32>,
    %c0_10 = arith.constant 0 : index
    %c0_11 = arith.constant 0 : index
    %12 = vector.load %arg16[%c0_10, %c0_11] : memref<128x512xf32, #tpu.memory_space<vmem>>, vector<128x512xf32>
    %c0_12 = arith.constant 0 : index
    %c0_13 = arith.constant 0 : index
    %13 = vector.load %arg17[%c0_12, %c0_13] : memref<128x128xf32, #tpu.memory_space<vmem>>, vector<128x128xf32>
    %c0_14 = arith.constant 0 : index
    %c0_15 = arith.constant 0 : index
    %14 = vector.load %arg12[%c0_14, %c0_15] : memref<8x128xf32, #tpu.memory_space<vmem>>, vector<8x128xf32>
    %c0_16 = arith.constant 0 : index
    %c0_17 = arith.constant 0 : index
    %15 = vector.load %arg13[%c0_16, %c0_17] : memref<8x128xf32, #tpu.memory_space<vmem>>, vector<8x128xf32>
    %c0_i32_18 = arith.constant 0 : i32
    %16 = arith.index_cast %c0_i32_18 : i32 to index
    %c0_19 = arith.constant 0 : index
    %c0_20 = arith.constant 0 : index
    %17 = vector.load %arg14[%16, %c0_19, %c0_20] : memref<8x8x512xf32, #tpu.memory_space<vmem>>, vector<1x8x512xf32>
    %18 = vector.shape_cast %17 : vector<1x8x512xf32> to vector<8x512xf32>
    %cst_21 = arith.constant dense<0.000000e+00> : vector<8x512xf32>
    %19 = tpu.matmul %14, %12, %cst_21 {dimension_numbers = #tpu.dot_dimension_numbers<[1], [0], [0], [1], [0, 0, 1, 1], [], []>} : vector<8x128xf32>, vector<128x512xf32>, vector<8x512xf32> -> vector<8x512xf32>
    %20 = arith.addf %18, %19 : vector<8x512xf32>
    %21 = vector.extract_strided_slice %20 {offsets = [0, 0], sizes = [8, 128], strides = [1, 1]} : vector<8x512xf32> to vector<8x128xf32>
    %22 = arith.negf %21 : vector<8x128xf32>
    %23 = math.exp %22 : vector<8x128xf32>
    %cst_22 = arith.constant 1.000000e+00 : f32
    %24 = vector.broadcast %cst_22 : f32 to vector<8x128xf32>
    %25 = arith.addf %24, %23 : vector<8x128xf32>
    %26 = arith.divf %24, %25 : vector<8x128xf32>
    %27 = vector.extract_strided_slice %20 {offsets = [0, 128], sizes = [8, 128], strides = [1, 1]} : vector<8x512xf32> to vector<8x128xf32>
    %28 = arith.negf %27 : vector<8x128xf32>
    %29 = math.exp %28 : vector<8x128xf32>
    %cst_23 = arith.constant 1.000000e+00 : f32
    %30 = vector.broadcast %cst_23 : f32 to vector<8x128xf32>
    %31 = arith.addf %30, %29 : vector<8x128xf32>
    %32 = arith.divf %30, %31 : vector<8x128xf32>
    %33 = vector.extract_strided_slice %20 {offsets = [0, 256], sizes = [8, 128], strides = [1, 1]} : vector<8x512xf32> to vector<8x128xf32>
    %34 = math.tanh %33 : vector<8x128xf32>
    %35 = vector.extract_strided_slice %20 {offsets = [0, 384], sizes = [8, 128], strides = [1, 1]} : vector<8x512xf32> to vector<8x128xf32>
    %36 = arith.negf %35 : vector<8x128xf32>
    %37 = math.exp %36 : vector<8x128xf32>
    %cst_24 = arith.constant 1.000000e+00 : f32
    %38 = vector.broadcast %cst_24 : f32 to vector<8x128xf32>
    %39 = arith.addf %38, %37 : vector<8x128xf32>
    %40 = arith.divf %38, %39 : vector<8x128xf32>
    %41 = arith.mulf %32, %15 : vector<8x128xf32>
    %42 = arith.mulf %26, %34 : vector<8x128xf32>
    %43 = arith.addf %41, %42 : vector<8x128xf32>
    %44 = math.tanh %43 : vector<8x128xf32>
    %45 = arith.mulf %40, %44 : vector<8x128xf32>
    %cst_25 = arith.constant dense<0.000000e+00> : vector<8x128xf32>
    %46 = tpu.matmul %45, %13, %cst_25 {dimension_numbers = #tpu.dot_dimension_numbers<[1], [0], [0], [1], [0, 0, 1, 1], [], []>} : vector<8x128xf32>, vector<128x128xf32>, vector<8x128xf32> -> vector<8x128xf32>
    %47 = arith.index_cast %c0_i32_18 : i32 to index
    %c0_26 = arith.constant 0 : index
    %c0_27 = arith.constant 0 : index
    %48 = vector.load %arg9[%47, %c0_26, %c0_27] : memref<8x8x128xf32, #tpu.memory_space<vmem>>, vector<1x8x128xf32>
    %49 = vector.shape_cast %48 : vector<1x8x128xf32> to vector<8x128xf32>
    %50 = vector.shape_cast %46 : vector<8x128xf32> to vector<1x8x128xf32>
    tpu.vector_store %arg9[%47, %c0_26, %c0_27], %50 {strides = array<i32>} : memref<8x8x128xf32, #tpu.memory_space<vmem>>, vector<1x8x128xf32>,
    %c8_i32 = arith.constant 8 : i32
    %51 = arith.muli %arg1, %c8_i32 : i32
    %52 = arith.addi %51, %c0_i32_18 : i32
    %c11_i32 = arith.constant 11 : i32
    %53 = arith.cmpi eq, %52, %c11_i32 : i32
    %54 = arith.extui %53 : i1 to i32
    %c0_i32_28 = arith.constant 0 : i32
    %55 = arith.cmpi ne, %54, %c0_i32_28 : i32
    scf.if %55 {
      %c0_118 = arith.constant 0 : index
      %c0_119 = arith.constant 0 : index
      %338 = vector.load %arg10[%c0_118, %c0_119] : memref<8x128xf32, #tpu.memory_space<vmem>>, vector<8x128xf32>
      tpu.vector_store %arg10[%c0_118, %c0_119], %46 {strides = array<i32>} : memref<8x128xf32, #tpu.memory_space<vmem>>, vector<8x128xf32>,
      %c0_120 = arith.constant 0 : index
      %c0_121 = arith.constant 0 : index
      %339 = vector.load %arg11[%c0_120, %c0_121] : memref<8x128xf32, #tpu.memory_space<vmem>>, vector<8x128xf32>
      tpu.vector_store %arg11[%c0_120, %c0_121], %43 {strides = array<i32>} : memref<8x128xf32, #tpu.memory_space<vmem>>, vector<8x128xf32>,
    } else {
    }
    %c1_i32 = arith.constant 1 : i32
    %56 = arith.index_cast %c1_i32 : i32 to index
    %c0_29 = arith.constant 0 : index
    %c0_30 = arith.constant 0 : index
    %57 = vector.load %arg14[%56, %c0_29, %c0_30] : memref<8x8x512xf32, #tpu.memory_space<vmem>>, vector<1x8x512xf32>
    %58 = vector.shape_cast %57 : vector<1x8x512xf32> to vector<8x512xf32>
    %cst_31 = arith.constant dense<0.000000e+00> : vector<8x512xf32>
    %59 = tpu.matmul %46, %12, %cst_31 {dimension_numbers = #tpu.dot_dimension_numbers<[1], [0], [0], [1], [0, 0, 1, 1], [], []>} : vector<8x128xf32>, vector<128x512xf32>, vector<8x512xf32> -> vector<8x512xf32>
    %60 = arith.addf %58, %59 : vector<8x512xf32>
    %61 = vector.extract_strided_slice %60 {offsets = [0, 0], sizes = [8, 128], strides = [1, 1]} : vector<8x512xf32> to vector<8x128xf32>
    %62 = arith.negf %61 : vector<8x128xf32>
    %63 = math.exp %62 : vector<8x128xf32>
    %cst_32 = arith.constant 1.000000e+00 : f32
    %64 = vector.broadcast %cst_32 : f32 to vector<8x128xf32>
    %65 = arith.addf %64, %63 : vector<8x128xf32>
    %66 = arith.divf %64, %65 : vector<8x128xf32>
    %67 = vector.extract_strided_slice %60 {offsets = [0, 128], sizes = [8, 128], strides = [1, 1]} : vector<8x512xf32> to vector<8x128xf32>
    %68 = arith.negf %67 : vector<8x128xf32>
    %69 = math.exp %68 : vector<8x128xf32>
    %cst_33 = arith.constant 1.000000e+00 : f32
    %70 = vector.broadcast %cst_33 : f32 to vector<8x128xf32>
    %71 = arith.addf %70, %69 : vector<8x128xf32>
    %72 = arith.divf %70, %71 : vector<8x128xf32>
    %73 = vector.extract_strided_slice %60 {offsets = [0, 256], sizes = [8, 128], strides = [1, 1]} : vector<8x512xf32> to vector<8x128xf32>
    %74 = math.tanh %73 : vector<8x128xf32>
    %75 = vector.extract_strided_slice %60 {offsets = [0, 384], sizes = [8, 128], strides = [1, 1]} : vector<8x512xf32> to vector<8x128xf32>
    %76 = arith.negf %75 : vector<8x128xf32>
    %77 = math.exp %76 : vector<8x128xf32>
    %cst_34 = arith.constant 1.000000e+00 : f32
    %78 = vector.broadcast %cst_34 : f32 to vector<8x128xf32>
    %79 = arith.addf %78, %77 : vector<8x128xf32>
    %80 = arith.divf %78, %79 : vector<8x128xf32>
    %81 = arith.mulf %72, %43 : vector<8x128xf32>
    %82 = arith.mulf %66, %74 : vector<8x128xf32>
    %83 = arith.addf %81, %82 : vector<8x128xf32>
    %84 = math.tanh %83 : vector<8x128xf32>
    %85 = arith.mulf %80, %84 : vector<8x128xf32>
    %cst_35 = arith.constant dense<0.000000e+00> : vector<8x128xf32>
    %86 = tpu.matmul %85, %13, %cst_35 {dimension_numbers = #tpu.dot_dimension_numbers<[1], [0], [0], [1], [0, 0, 1, 1], [], []>} : vector<8x128xf32>, vector<128x128xf32>, vector<8x128xf32> -> vector<8x128xf32>
    %87 = arith.index_cast %c1_i32 : i32 to index
    %c0_36 = arith.constant 0 : index
    %c0_37 = arith.constant 0 : index
    %88 = vector.load %arg9[%87, %c0_36, %c0_37] : memref<8x8x128xf32, #tpu.memory_space<vmem>>, vector<1x8x128xf32>
    %89 = vector.shape_cast %88 : vector<1x8x128xf32> to vector<8x128xf32>
    %90 = vector.shape_cast %86 : vector<8x128xf32> to vector<1x8x128xf32>
    tpu.vector_store %arg9[%87, %c0_36, %c0_37], %90 {strides = array<i32>} : memref<8x8x128xf32, #tpu.memory_space<vmem>>, vector<1x8x128xf32>,
    %c8_i32_38 = arith.constant 8 : i32
    %91 = arith.muli %arg1, %c8_i32_38 : i32
    %92 = arith.addi %91, %c1_i32 : i32
    %c11_i32_39 = arith.constant 11 : i32
    %93 = arith.cmpi eq, %92, %c11_i32_39 : i32
    %94 = arith.extui %93 : i1 to i32
    %c0_i32_40 = arith.constant 0 : i32
    %95 = arith.cmpi ne, %94, %c0_i32_40 : i32
    scf.if %95 {
      %c0_118 = arith.constant 0 : index
      %c0_119 = arith.constant 0 : index
      %338 = vector.load %arg10[%c0_118, %c0_119] : memref<8x128xf32, #tpu.memory_space<vmem>>, vector<8x128xf32>
      tpu.vector_store %arg10[%c0_118, %c0_119], %86 {strides = array<i32>} : memref<8x128xf32, #tpu.memory_space<vmem>>, vector<8x128xf32>,
      %c0_120 = arith.constant 0 : index
      %c0_121 = arith.constant 0 : index
      %339 = vector.load %arg11[%c0_120, %c0_121] : memref<8x128xf32, #tpu.memory_space<vmem>>, vector<8x128xf32>
      tpu.vector_store %arg11[%c0_120, %c0_121], %83 {strides = array<i32>} : memref<8x128xf32, #tpu.memory_space<vmem>>, vector<8x128xf32>,
    } else {
    }
    %c2_i32 = arith.constant 2 : i32
    %96 = arith.index_cast %c2_i32 : i32 to index
    %c0_41 = arith.constant 0 : index
    %c0_42 = arith.constant 0 : index
    %97 = vector.load %arg14[%96, %c0_41, %c0_42] : memref<8x8x512xf32, #tpu.memory_space<vmem>>, vector<1x8x512xf32>
    %98 = vector.shape_cast %97 : vector<1x8x512xf32> to vector<8x512xf32>
    %cst_43 = arith.constant dense<0.000000e+00> : vector<8x512xf32>
    %99 = tpu.matmul %86, %12, %cst_43 {dimension_numbers = #tpu.dot_dimension_numbers<[1], [0], [0], [1], [0, 0, 1, 1], [], []>} : vector<8x128xf32>, vector<128x512xf32>, vector<8x512xf32> -> vector<8x512xf32>
    %100 = arith.addf %98, %99 : vector<8x512xf32>
    %101 = vector.extract_strided_slice %100 {offsets = [0, 0], sizes = [8, 128], strides = [1, 1]} : vector<8x512xf32> to vector<8x128xf32>
    %102 = arith.negf %101 : vector<8x128xf32>
    %103 = math.exp %102 : vector<8x128xf32>
    %cst_44 = arith.constant 1.000000e+00 : f32
    %104 = vector.broadcast %cst_44 : f32 to vector<8x128xf32>
    %105 = arith.addf %104, %103 : vector<8x128xf32>
    %106 = arith.divf %104, %105 : vector<8x128xf32>
    %107 = vector.extract_strided_slice %100 {offsets = [0, 128], sizes = [8, 128], strides = [1, 1]} : vector<8x512xf32> to vector<8x128xf32>
    %108 = arith.negf %107 : vector<8x128xf32>
    %109 = math.exp %108 : vector<8x128xf32>
    %cst_45 = arith.constant 1.000000e+00 : f32
    %110 = vector.broadcast %cst_45 : f32 to vector<8x128xf32>
    %111 = arith.addf %110, %109 : vector<8x128xf32>
    %112 = arith.divf %110, %111 : vector<8x128xf32>
    %113 = vector.extract_strided_slice %100 {offsets = [0, 256], sizes = [8, 128], strides = [1, 1]} : vector<8x512xf32> to vector<8x128xf32>
    %114 = math.tanh %113 : vector<8x128xf32>
    %115 = vector.extract_strided_slice %100 {offsets = [0, 384], sizes = [8, 128], strides = [1, 1]} : vector<8x512xf32> to vector<8x128xf32>
    %116 = arith.negf %115 : vector<8x128xf32>
    %117 = math.exp %116 : vector<8x128xf32>
    %cst_46 = arith.constant 1.000000e+00 : f32
    %118 = vector.broadcast %cst_46 : f32 to vector<8x128xf32>
    %119 = arith.addf %118, %117 : vector<8x128xf32>
    %120 = arith.divf %118, %119 : vector<8x128xf32>
    %121 = arith.mulf %112, %83 : vector<8x128xf32>
    %122 = arith.mulf %106, %114 : vector<8x128xf32>
    %123 = arith.addf %121, %122 : vector<8x128xf32>
    %124 = math.tanh %123 : vector<8x128xf32>
    %125 = arith.mulf %120, %124 : vector<8x128xf32>
    %cst_47 = arith.constant dense<0.000000e+00> : vector<8x128xf32>
    %126 = tpu.matmul %125, %13, %cst_47 {dimension_numbers = #tpu.dot_dimension_numbers<[1], [0], [0], [1], [0, 0, 1, 1], [], []>} : vector<8x128xf32>, vector<128x128xf32>, vector<8x128xf32> -> vector<8x128xf32>
    %127 = arith.index_cast %c2_i32 : i32 to index
    %c0_48 = arith.constant 0 : index
    %c0_49 = arith.constant 0 : index
    %128 = vector.load %arg9[%127, %c0_48, %c0_49] : memref<8x8x128xf32, #tpu.memory_space<vmem>>, vector<1x8x128xf32>
    %129 = vector.shape_cast %128 : vector<1x8x128xf32> to vector<8x128xf32>
    %130 = vector.shape_cast %126 : vector<8x128xf32> to vector<1x8x128xf32>
    tpu.vector_store %arg9[%127, %c0_48, %c0_49], %130 {strides = array<i32>} : memref<8x8x128xf32, #tpu.memory_space<vmem>>, vector<1x8x128xf32>,
    %c8_i32_50 = arith.constant 8 : i32
    %131 = arith.muli %arg1, %c8_i32_50 : i32
    %132 = arith.addi %131, %c2_i32 : i32
    %c11_i32_51 = arith.constant 11 : i32
    %133 = arith.cmpi eq, %132, %c11_i32_51 : i32
    %134 = arith.extui %133 : i1 to i32
    %c0_i32_52 = arith.constant 0 : i32
    %135 = arith.cmpi ne, %134, %c0_i32_52 : i32
    scf.if %135 {
      %c0_118 = arith.constant 0 : index
      %c0_119 = arith.constant 0 : index
      %338 = vector.load %arg10[%c0_118, %c0_119] : memref<8x128xf32, #tpu.memory_space<vmem>>, vector<8x128xf32>
      tpu.vector_store %arg10[%c0_118, %c0_119], %126 {strides = array<i32>} : memref<8x128xf32, #tpu.memory_space<vmem>>, vector<8x128xf32>,
      %c0_120 = arith.constant 0 : index
      %c0_121 = arith.constant 0 : index
      %339 = vector.load %arg11[%c0_120, %c0_121] : memref<8x128xf32, #tpu.memory_space<vmem>>, vector<8x128xf32>
      tpu.vector_store %arg11[%c0_120, %c0_121], %123 {strides = array<i32>} : memref<8x128xf32, #tpu.memory_space<vmem>>, vector<8x128xf32>,
    } else {
    }
    %c3_i32 = arith.constant 3 : i32
    %136 = arith.index_cast %c3_i32 : i32 to index
    %c0_53 = arith.constant 0 : index
    %c0_54 = arith.constant 0 : index
    %137 = vector.load %arg14[%136, %c0_53, %c0_54] : memref<8x8x512xf32, #tpu.memory_space<vmem>>, vector<1x8x512xf32>
    %138 = vector.shape_cast %137 : vector<1x8x512xf32> to vector<8x512xf32>
    %cst_55 = arith.constant dense<0.000000e+00> : vector<8x512xf32>
    %139 = tpu.matmul %126, %12, %cst_55 {dimension_numbers = #tpu.dot_dimension_numbers<[1], [0], [0], [1], [0, 0, 1, 1], [], []>} : vector<8x128xf32>, vector<128x512xf32>, vector<8x512xf32> -> vector<8x512xf32>
    %140 = arith.addf %138, %139 : vector<8x512xf32>
    %141 = vector.extract_strided_slice %140 {offsets = [0, 0], sizes = [8, 128], strides = [1, 1]} : vector<8x512xf32> to vector<8x128xf32>
    %142 = arith.negf %141 : vector<8x128xf32>
    %143 = math.exp %142 : vector<8x128xf32>
    %cst_56 = arith.constant 1.000000e+00 : f32
    %144 = vector.broadcast %cst_56 : f32 to vector<8x128xf32>
    %145 = arith.addf %144, %143 : vector<8x128xf32>
    %146 = arith.divf %144, %145 : vector<8x128xf32>
    %147 = vector.extract_strided_slice %140 {offsets = [0, 128], sizes = [8, 128], strides = [1, 1]} : vector<8x512xf32> to vector<8x128xf32>
    %148 = arith.negf %147 : vector<8x128xf32>
    %149 = math.exp %148 : vector<8x128xf32>
    %cst_57 = arith.constant 1.000000e+00 : f32
    %150 = vector.broadcast %cst_57 : f32 to vector<8x128xf32>
    %151 = arith.addf %150, %149 : vector<8x128xf32>
    %152 = arith.divf %150, %151 : vector<8x128xf32>
    %153 = vector.extract_strided_slice %140 {offsets = [0, 256], sizes = [8, 128], strides = [1, 1]} : vector<8x512xf32> to vector<8x128xf32>
    %154 = math.tanh %153 : vector<8x128xf32>
    %155 = vector.extract_strided_slice %140 {offsets = [0, 384], sizes = [8, 128], strides = [1, 1]} : vector<8x512xf32> to vector<8x128xf32>
    %156 = arith.negf %155 : vector<8x128xf32>
    %157 = math.exp %156 : vector<8x128xf32>
    %cst_58 = arith.constant 1.000000e+00 : f32
    %158 = vector.broadcast %cst_58 : f32 to vector<8x128xf32>
    %159 = arith.addf %158, %157 : vector<8x128xf32>
    %160 = arith.divf %158, %159 : vector<8x128xf32>
    %161 = arith.mulf %152, %123 : vector<8x128xf32>
    %162 = arith.mulf %146, %154 : vector<8x128xf32>
    %163 = arith.addf %161, %162 : vector<8x128xf32>
    %164 = math.tanh %163 : vector<8x128xf32>
    %165 = arith.mulf %160, %164 : vector<8x128xf32>
    %cst_59 = arith.constant dense<0.000000e+00> : vector<8x128xf32>
    %166 = tpu.matmul %165, %13, %cst_59 {dimension_numbers = #tpu.dot_dimension_numbers<[1], [0], [0], [1], [0, 0, 1, 1], [], []>} : vector<8x128xf32>, vector<128x128xf32>, vector<8x128xf32> -> vector<8x128xf32>
    %167 = arith.index_cast %c3_i32 : i32 to index
    %c0_60 = arith.constant 0 : index
    %c0_61 = arith.constant 0 : index
    %168 = vector.load %arg9[%167, %c0_60, %c0_61] : memref<8x8x128xf32, #tpu.memory_space<vmem>>, vector<1x8x128xf32>
    %169 = vector.shape_cast %168 : vector<1x8x128xf32> to vector<8x128xf32>
    %170 = vector.shape_cast %166 : vector<8x128xf32> to vector<1x8x128xf32>
    tpu.vector_store %arg9[%167, %c0_60, %c0_61], %170 {strides = array<i32>} : memref<8x8x128xf32, #tpu.memory_space<vmem>>, vector<1x8x128xf32>,
    %c8_i32_62 = arith.constant 8 : i32
    %171 = arith.muli %arg1, %c8_i32_62 : i32
    %172 = arith.addi %171, %c3_i32 : i32
    %c11_i32_63 = arith.constant 11 : i32
    %173 = arith.cmpi eq, %172, %c11_i32_63 : i32
    %174 = arith.extui %173 : i1 to i32
    %c0_i32_64 = arith.constant 0 : i32
    %175 = arith.cmpi ne, %174, %c0_i32_64 : i32
    scf.if %175 {
      %c0_118 = arith.constant 0 : index
      %c0_119 = arith.constant 0 : index
      %338 = vector.load %arg10[%c0_118, %c0_119] : memref<8x128xf32, #tpu.memory_space<vmem>>, vector<8x128xf32>
      tpu.vector_store %arg10[%c0_118, %c0_119], %166 {strides = array<i32>} : memref<8x128xf32, #tpu.memory_space<vmem>>, vector<8x128xf32>,
      %c0_120 = arith.constant 0 : index
      %c0_121 = arith.constant 0 : index
      %339 = vector.load %arg11[%c0_120, %c0_121] : memref<8x128xf32, #tpu.memory_space<vmem>>, vector<8x128xf32>
      tpu.vector_store %arg11[%c0_120, %c0_121], %163 {strides = array<i32>} : memref<8x128xf32, #tpu.memory_space<vmem>>, vector<8x128xf32>,
    } else {
    }
    %c4_i32 = arith.constant 4 : i32
    %176 = arith.index_cast %c4_i32 : i32 to index
    %c0_65 = arith.constant 0 : index
    %c0_66 = arith.constant 0 : index
    %177 = vector.load %arg14[%176, %c0_65, %c0_66] : memref<8x8x512xf32, #tpu.memory_space<vmem>>, vector<1x8x512xf32>
    %178 = vector.shape_cast %177 : vector<1x8x512xf32> to vector<8x512xf32>
    %cst_67 = arith.constant dense<0.000000e+00> : vector<8x512xf32>
    %179 = tpu.matmul %166, %12, %cst_67 {dimension_numbers = #tpu.dot_dimension_numbers<[1], [0], [0], [1], [0, 0, 1, 1], [], []>} : vector<8x128xf32>, vector<128x512xf32>, vector<8x512xf32> -> vector<8x512xf32>
    %180 = arith.addf %178, %179 : vector<8x512xf32>
    %181 = vector.extract_strided_slice %180 {offsets = [0, 0], sizes = [8, 128], strides = [1, 1]} : vector<8x512xf32> to vector<8x128xf32>
    %182 = arith.negf %181 : vector<8x128xf32>
    %183 = math.exp %182 : vector<8x128xf32>
    %cst_68 = arith.constant 1.000000e+00 : f32
    %184 = vector.broadcast %cst_68 : f32 to vector<8x128xf32>
    %185 = arith.addf %184, %183 : vector<8x128xf32>
    %186 = arith.divf %184, %185 : vector<8x128xf32>
    %187 = vector.extract_strided_slice %180 {offsets = [0, 128], sizes = [8, 128], strides = [1, 1]} : vector<8x512xf32> to vector<8x128xf32>
    %188 = arith.negf %187 : vector<8x128xf32>
    %189 = math.exp %188 : vector<8x128xf32>
    %cst_69 = arith.constant 1.000000e+00 : f32
    %190 = vector.broadcast %cst_69 : f32 to vector<8x128xf32>
    %191 = arith.addf %190, %189 : vector<8x128xf32>
    %192 = arith.divf %190, %191 : vector<8x128xf32>
    %193 = vector.extract_strided_slice %180 {offsets = [0, 256], sizes = [8, 128], strides = [1, 1]} : vector<8x512xf32> to vector<8x128xf32>
    %194 = math.tanh %193 : vector<8x128xf32>
    %195 = vector.extract_strided_slice %180 {offsets = [0, 384], sizes = [8, 128], strides = [1, 1]} : vector<8x512xf32> to vector<8x128xf32>
    %196 = arith.negf %195 : vector<8x128xf32>
    %197 = math.exp %196 : vector<8x128xf32>
    %cst_70 = arith.constant 1.000000e+00 : f32
    %198 = vector.broadcast %cst_70 : f32 to vector<8x128xf32>
    %199 = arith.addf %198, %197 : vector<8x128xf32>
    %200 = arith.divf %198, %199 : vector<8x128xf32>
    %201 = arith.mulf %192, %163 : vector<8x128xf32>
    %202 = arith.mulf %186, %194 : vector<8x128xf32>
    %203 = arith.addf %201, %202 : vector<8x128xf32>
    %204 = math.tanh %203 : vector<8x128xf32>
    %205 = arith.mulf %200, %204 : vector<8x128xf32>
    %cst_71 = arith.constant dense<0.000000e+00> : vector<8x128xf32>
    %206 = tpu.matmul %205, %13, %cst_71 {dimension_numbers = #tpu.dot_dimension_numbers<[1], [0], [0], [1], [0, 0, 1, 1], [], []>} : vector<8x128xf32>, vector<128x128xf32>, vector<8x128xf32> -> vector<8x128xf32>
    %207 = arith.index_cast %c4_i32 : i32 to index
    %c0_72 = arith.constant 0 : index
    %c0_73 = arith.constant 0 : index
    %208 = vector.load %arg9[%207, %c0_72, %c0_73] : memref<8x8x128xf32, #tpu.memory_space<vmem>>, vector<1x8x128xf32>
    %209 = vector.shape_cast %208 : vector<1x8x128xf32> to vector<8x128xf32>
    %210 = vector.shape_cast %206 : vector<8x128xf32> to vector<1x8x128xf32>
    tpu.vector_store %arg9[%207, %c0_72, %c0_73], %210 {strides = array<i32>} : memref<8x8x128xf32, #tpu.memory_space<vmem>>, vector<1x8x128xf32>,
    %c8_i32_74 = arith.constant 8 : i32
    %211 = arith.muli %arg1, %c8_i32_74 : i32
    %212 = arith.addi %211, %c4_i32 : i32
    %c11_i32_75 = arith.constant 11 : i32
    %213 = arith.cmpi eq, %212, %c11_i32_75 : i32
    %214 = arith.extui %213 : i1 to i32
    %c0_i32_76 = arith.constant 0 : i32
    %215 = arith.cmpi ne, %214, %c0_i32_76 : i32
    scf.if %215 {
      %c0_118 = arith.constant 0 : index
      %c0_119 = arith.constant 0 : index
      %338 = vector.load %arg10[%c0_118, %c0_119] : memref<8x128xf32, #tpu.memory_space<vmem>>, vector<8x128xf32>
      tpu.vector_store %arg10[%c0_118, %c0_119], %206 {strides = array<i32>} : memref<8x128xf32, #tpu.memory_space<vmem>>, vector<8x128xf32>,
      %c0_120 = arith.constant 0 : index
      %c0_121 = arith.constant 0 : index
      %339 = vector.load %arg11[%c0_120, %c0_121] : memref<8x128xf32, #tpu.memory_space<vmem>>, vector<8x128xf32>
      tpu.vector_store %arg11[%c0_120, %c0_121], %203 {strides = array<i32>} : memref<8x128xf32, #tpu.memory_space<vmem>>, vector<8x128xf32>,
    } else {
    }
    %c5_i32 = arith.constant 5 : i32
    %216 = arith.index_cast %c5_i32 : i32 to index
    %c0_77 = arith.constant 0 : index
    %c0_78 = arith.constant 0 : index
    %217 = vector.load %arg14[%216, %c0_77, %c0_78] : memref<8x8x512xf32, #tpu.memory_space<vmem>>, vector<1x8x512xf32>
    %218 = vector.shape_cast %217 : vector<1x8x512xf32> to vector<8x512xf32>
    %cst_79 = arith.constant dense<0.000000e+00> : vector<8x512xf32>
    %219 = tpu.matmul %206, %12, %cst_79 {dimension_numbers = #tpu.dot_dimension_numbers<[1], [0], [0], [1], [0, 0, 1, 1], [], []>} : vector<8x128xf32>, vector<128x512xf32>, vector<8x512xf32> -> vector<8x512xf32>
    %220 = arith.addf %218, %219 : vector<8x512xf32>
    %221 = vector.extract_strided_slice %220 {offsets = [0, 0], sizes = [8, 128], strides = [1, 1]} : vector<8x512xf32> to vector<8x128xf32>
    %222 = arith.negf %221 : vector<8x128xf32>
    %223 = math.exp %222 : vector<8x128xf32>
    %cst_80 = arith.constant 1.000000e+00 : f32
    %224 = vector.broadcast %cst_80 : f32 to vector<8x128xf32>
    %225 = arith.addf %224, %223 : vector<8x128xf32>
    %226 = arith.divf %224, %225 : vector<8x128xf32>
    %227 = vector.extract_strided_slice %220 {offsets = [0, 128], sizes = [8, 128], strides = [1, 1]} : vector<8x512xf32> to vector<8x128xf32>
    %228 = arith.negf %227 : vector<8x128xf32>
    %229 = math.exp %228 : vector<8x128xf32>
    %cst_81 = arith.constant 1.000000e+00 : f32
    %230 = vector.broadcast %cst_81 : f32 to vector<8x128xf32>
    %231 = arith.addf %230, %229 : vector<8x128xf32>
    %232 = arith.divf %230, %231 : vector<8x128xf32>
    %233 = vector.extract_strided_slice %220 {offsets = [0, 256], sizes = [8, 128], strides = [1, 1]} : vector<8x512xf32> to vector<8x128xf32>
    %234 = math.tanh %233 : vector<8x128xf32>
    %235 = vector.extract_strided_slice %220 {offsets = [0, 384], sizes = [8, 128], strides = [1, 1]} : vector<8x512xf32> to vector<8x128xf32>
    %236 = arith.negf %235 : vector<8x128xf32>
    %237 = math.exp %236 : vector<8x128xf32>
    %cst_82 = arith.constant 1.000000e+00 : f32
    %238 = vector.broadcast %cst_82 : f32 to vector<8x128xf32>
    %239 = arith.addf %238, %237 : vector<8x128xf32>
    %240 = arith.divf %238, %239 : vector<8x128xf32>
    %241 = arith.mulf %232, %203 : vector<8x128xf32>
    %242 = arith.mulf %226, %234 : vector<8x128xf32>
    %243 = arith.addf %241, %242 : vector<8x128xf32>
    %244 = math.tanh %243 : vector<8x128xf32>
    %245 = arith.mulf %240, %244 : vector<8x128xf32>
    %cst_83 = arith.constant dense<0.000000e+00> : vector<8x128xf32>
    %246 = tpu.matmul %245, %13, %cst_83 {dimension_numbers = #tpu.dot_dimension_numbers<[1], [0], [0], [1], [0, 0, 1, 1], [], []>} : vector<8x128xf32>, vector<128x128xf32>, vector<8x128xf32> -> vector<8x128xf32>
    %247 = arith.index_cast %c5_i32 : i32 to index
    %c0_84 = arith.constant 0 : index
    %c0_85 = arith.constant 0 : index
    %248 = vector.load %arg9[%247, %c0_84, %c0_85] : memref<8x8x128xf32, #tpu.memory_space<vmem>>, vector<1x8x128xf32>
    %249 = vector.shape_cast %248 : vector<1x8x128xf32> to vector<8x128xf32>
    %250 = vector.shape_cast %246 : vector<8x128xf32> to vector<1x8x128xf32>
    tpu.vector_store %arg9[%247, %c0_84, %c0_85], %250 {strides = array<i32>} : memref<8x8x128xf32, #tpu.memory_space<vmem>>, vector<1x8x128xf32>,
    %c8_i32_86 = arith.constant 8 : i32
    %251 = arith.muli %arg1, %c8_i32_86 : i32
    %252 = arith.addi %251, %c5_i32 : i32
    %c11_i32_87 = arith.constant 11 : i32
    %253 = arith.cmpi eq, %252, %c11_i32_87 : i32
    %254 = arith.extui %253 : i1 to i32
    %c0_i32_88 = arith.constant 0 : i32
    %255 = arith.cmpi ne, %254, %c0_i32_88 : i32
    scf.if %255 {
      %c0_118 = arith.constant 0 : index
      %c0_119 = arith.constant 0 : index
      %338 = vector.load %arg10[%c0_118, %c0_119] : memref<8x128xf32, #tpu.memory_space<vmem>>, vector<8x128xf32>
      tpu.vector_store %arg10[%c0_118, %c0_119], %246 {strides = array<i32>} : memref<8x128xf32, #tpu.memory_space<vmem>>, vector<8x128xf32>,
      %c0_120 = arith.constant 0 : index
      %c0_121 = arith.constant 0 : index
      %339 = vector.load %arg11[%c0_120, %c0_121] : memref<8x128xf32, #tpu.memory_space<vmem>>, vector<8x128xf32>
      tpu.vector_store %arg11[%c0_120, %c0_121], %243 {strides = array<i32>} : memref<8x128xf32, #tpu.memory_space<vmem>>, vector<8x128xf32>,
    } else {
    }
    %c6_i32 = arith.constant 6 : i32
    %256 = arith.index_cast %c6_i32 : i32 to index
    %c0_89 = arith.constant 0 : index
    %c0_90 = arith.constant 0 : index
    %257 = vector.load %arg14[%256, %c0_89, %c0_90] : memref<8x8x512xf32, #tpu.memory_space<vmem>>, vector<1x8x512xf32>
    %258 = vector.shape_cast %257 : vector<1x8x512xf32> to vector<8x512xf32>
    %cst_91 = arith.constant dense<0.000000e+00> : vector<8x512xf32>
    %259 = tpu.matmul %246, %12, %cst_91 {dimension_numbers = #tpu.dot_dimension_numbers<[1], [0], [0], [1], [0, 0, 1, 1], [], []>} : vector<8x128xf32>, vector<128x512xf32>, vector<8x512xf32> -> vector<8x512xf32>
    %260 = arith.addf %258, %259 : vector<8x512xf32>
    %261 = vector.extract_strided_slice %260 {offsets = [0, 0], sizes = [8, 128], strides = [1, 1]} : vector<8x512xf32> to vector<8x128xf32>
    %262 = arith.negf %261 : vector<8x128xf32>
    %263 = math.exp %262 : vector<8x128xf32>
    %cst_92 = arith.constant 1.000000e+00 : f32
    %264 = vector.broadcast %cst_92 : f32 to vector<8x128xf32>
    %265 = arith.addf %264, %263 : vector<8x128xf32>
    %266 = arith.divf %264, %265 : vector<8x128xf32>
    %267 = vector.extract_strided_slice %260 {offsets = [0, 128], sizes = [8, 128], strides = [1, 1]} : vector<8x512xf32> to vector<8x128xf32>
    %268 = arith.negf %267 : vector<8x128xf32>
    %269 = math.exp %268 : vector<8x128xf32>
    %cst_93 = arith.constant 1.000000e+00 : f32
    %270 = vector.broadcast %cst_93 : f32 to vector<8x128xf32>
    %271 = arith.addf %270, %269 : vector<8x128xf32>
    %272 = arith.divf %270, %271 : vector<8x128xf32>
    %273 = vector.extract_strided_slice %260 {offsets = [0, 256], sizes = [8, 128], strides = [1, 1]} : vector<8x512xf32> to vector<8x128xf32>
    %274 = math.tanh %273 : vector<8x128xf32>
    %275 = vector.extract_strided_slice %260 {offsets = [0, 384], sizes = [8, 128], strides = [1, 1]} : vector<8x512xf32> to vector<8x128xf32>
    %276 = arith.negf %275 : vector<8x128xf32>
    %277 = math.exp %276 : vector<8x128xf32>
    %cst_94 = arith.constant 1.000000e+00 : f32
    %278 = vector.broadcast %cst_94 : f32 to vector<8x128xf32>
    %279 = arith.addf %278, %277 : vector<8x128xf32>
    %280 = arith.divf %278, %279 : vector<8x128xf32>
    %281 = arith.mulf %272, %243 : vector<8x128xf32>
    %282 = arith.mulf %266, %274 : vector<8x128xf32>
    %283 = arith.addf %281, %282 : vector<8x128xf32>
    %284 = math.tanh %283 : vector<8x128xf32>
    %285 = arith.mulf %280, %284 : vector<8x128xf32>
    %cst_95 = arith.constant dense<0.000000e+00> : vector<8x128xf32>
    %286 = tpu.matmul %285, %13, %cst_95 {dimension_numbers = #tpu.dot_dimension_numbers<[1], [0], [0], [1], [0, 0, 1, 1], [], []>} : vector<8x128xf32>, vector<128x128xf32>, vector<8x128xf32> -> vector<8x128xf32>
    %287 = arith.index_cast %c6_i32 : i32 to index
    %c0_96 = arith.constant 0 : index
    %c0_97 = arith.constant 0 : index
    %288 = vector.load %arg9[%287, %c0_96, %c0_97] : memref<8x8x128xf32, #tpu.memory_space<vmem>>, vector<1x8x128xf32>
    %289 = vector.shape_cast %288 : vector<1x8x128xf32> to vector<8x128xf32>
    %290 = vector.shape_cast %286 : vector<8x128xf32> to vector<1x8x128xf32>
    tpu.vector_store %arg9[%287, %c0_96, %c0_97], %290 {strides = array<i32>} : memref<8x8x128xf32, #tpu.memory_space<vmem>>, vector<1x8x128xf32>,
    %c8_i32_98 = arith.constant 8 : i32
    %291 = arith.muli %arg1, %c8_i32_98 : i32
    %292 = arith.addi %291, %c6_i32 : i32
    %c11_i32_99 = arith.constant 11 : i32
    %293 = arith.cmpi eq, %292, %c11_i32_99 : i32
    %294 = arith.extui %293 : i1 to i32
    %c0_i32_100 = arith.constant 0 : i32
    %295 = arith.cmpi ne, %294, %c0_i32_100 : i32
    scf.if %295 {
      %c0_118 = arith.constant 0 : index
      %c0_119 = arith.constant 0 : index
      %338 = vector.load %arg10[%c0_118, %c0_119] : memref<8x128xf32, #tpu.memory_space<vmem>>, vector<8x128xf32>
      tpu.vector_store %arg10[%c0_118, %c0_119], %286 {strides = array<i32>} : memref<8x128xf32, #tpu.memory_space<vmem>>, vector<8x128xf32>,
      %c0_120 = arith.constant 0 : index
      %c0_121 = arith.constant 0 : index
      %339 = vector.load %arg11[%c0_120, %c0_121] : memref<8x128xf32, #tpu.memory_space<vmem>>, vector<8x128xf32>
      tpu.vector_store %arg11[%c0_120, %c0_121], %283 {strides = array<i32>} : memref<8x128xf32, #tpu.memory_space<vmem>>, vector<8x128xf32>,
    } else {
    }
    %c7_i32 = arith.constant 7 : i32
    %296 = arith.index_cast %c7_i32 : i32 to index
    %c0_101 = arith.constant 0 : index
    %c0_102 = arith.constant 0 : index
    %297 = vector.load %arg14[%296, %c0_101, %c0_102] : memref<8x8x512xf32, #tpu.memory_space<vmem>>, vector<1x8x512xf32>
    %298 = vector.shape_cast %297 : vector<1x8x512xf32> to vector<8x512xf32>
    %cst_103 = arith.constant dense<0.000000e+00> : vector<8x512xf32>
    %299 = tpu.matmul %286, %12, %cst_103 {dimension_numbers = #tpu.dot_dimension_numbers<[1], [0], [0], [1], [0, 0, 1, 1], [], []>} : vector<8x128xf32>, vector<128x512xf32>, vector<8x512xf32> -> vector<8x512xf32>
    %300 = arith.addf %298, %299 : vector<8x512xf32>
    %301 = vector.extract_strided_slice %300 {offsets = [0, 0], sizes = [8, 128], strides = [1, 1]} : vector<8x512xf32> to vector<8x128xf32>
    %302 = arith.negf %301 : vector<8x128xf32>
    %303 = math.exp %302 : vector<8x128xf32>
    %cst_104 = arith.constant 1.000000e+00 : f32
    %304 = vector.broadcast %cst_104 : f32 to vector<8x128xf32>
    %305 = arith.addf %304, %303 : vector<8x128xf32>
    %306 = arith.divf %304, %305 : vector<8x128xf32>
    %307 = vector.extract_strided_slice %300 {offsets = [0, 128], sizes = [8, 128], strides = [1, 1]} : vector<8x512xf32> to vector<8x128xf32>
    %308 = arith.negf %307 : vector<8x128xf32>
    %309 = math.exp %308 : vector<8x128xf32>
    %cst_105 = arith.constant 1.000000e+00 : f32
    %310 = vector.broadcast %cst_105 : f32 to vector<8x128xf32>
    %311 = arith.addf %310, %309 : vector<8x128xf32>
    %312 = arith.divf %310, %311 : vector<8x128xf32>
    %313 = vector.extract_strided_slice %300 {offsets = [0, 256], sizes = [8, 128], strides = [1, 1]} : vector<8x512xf32> to vector<8x128xf32>
    %314 = math.tanh %313 : vector<8x128xf32>
    %315 = vector.extract_strided_slice %300 {offsets = [0, 384], sizes = [8, 128], strides = [1, 1]} : vector<8x512xf32> to vector<8x128xf32>
    %316 = arith.negf %315 : vector<8x128xf32>
    %317 = math.exp %316 : vector<8x128xf32>
    %cst_106 = arith.constant 1.000000e+00 : f32
    %318 = vector.broadcast %cst_106 : f32 to vector<8x128xf32>
    %319 = arith.addf %318, %317 : vector<8x128xf32>
    %320 = arith.divf %318, %319 : vector<8x128xf32>
    %321 = arith.mulf %312, %283 : vector<8x128xf32>
    %322 = arith.mulf %306, %314 : vector<8x128xf32>
    %323 = arith.addf %321, %322 : vector<8x128xf32>
    %324 = math.tanh %323 : vector<8x128xf32>
    %325 = arith.mulf %320, %324 : vector<8x128xf32>
    %cst_107 = arith.constant dense<0.000000e+00> : vector<8x128xf32>
    %326 = tpu.matmul %325, %13, %cst_107 {dimension_numbers = #tpu.dot_dimension_numbers<[1], [0], [0], [1], [0, 0, 1, 1], [], []>} : vector<8x128xf32>, vector<128x128xf32>, vector<8x128xf32> -> vector<8x128xf32>
    %327 = arith.index_cast %c7_i32 : i32 to index
    %c0_108 = arith.constant 0 : index
    %c0_109 = arith.constant 0 : index
    %328 = vector.load %arg9[%327, %c0_108, %c0_109] : memref<8x8x128xf32, #tpu.memory_space<vmem>>, vector<1x8x128xf32>
    %329 = vector.shape_cast %328 : vector<1x8x128xf32> to vector<8x128xf32>
    %330 = vector.shape_cast %326 : vector<8x128xf32> to vector<1x8x128xf32>
    tpu.vector_store %arg9[%327, %c0_108, %c0_109], %330 {strides = array<i32>} : memref<8x8x128xf32, #tpu.memory_space<vmem>>, vector<1x8x128xf32>,
    %c8_i32_110 = arith.constant 8 : i32
    %331 = arith.muli %arg1, %c8_i32_110 : i32
    %332 = arith.addi %331, %c7_i32 : i32
    %c11_i32_111 = arith.constant 11 : i32
    %333 = arith.cmpi eq, %332, %c11_i32_111 : i32
    %334 = arith.extui %333 : i1 to i32
    %c0_i32_112 = arith.constant 0 : i32
    %335 = arith.cmpi ne, %334, %c0_i32_112 : i32
    scf.if %335 {
      %c0_118 = arith.constant 0 : index
      %c0_119 = arith.constant 0 : index
      %338 = vector.load %arg10[%c0_118, %c0_119] : memref<8x128xf32, #tpu.memory_space<vmem>>, vector<8x128xf32>
      tpu.vector_store %arg10[%c0_118, %c0_119], %326 {strides = array<i32>} : memref<8x128xf32, #tpu.memory_space<vmem>>, vector<8x128xf32>,
      %c0_120 = arith.constant 0 : index
      %c0_121 = arith.constant 0 : index
      %339 = vector.load %arg11[%c0_120, %c0_121] : memref<8x128xf32, #tpu.memory_space<vmem>>, vector<8x128xf32>
      tpu.vector_store %arg11[%c0_120, %c0_121], %323 {strides = array<i32>} : memref<8x128xf32, #tpu.memory_space<vmem>>, vector<8x128xf32>,
    } else {
    }
    %c8_i32_113 = arith.constant 8 : i32
    %c0_114 = arith.constant 0 : index
    %c0_115 = arith.constant 0 : index
    %336 = vector.load %arg12[%c0_114, %c0_115] : memref<8x128xf32, #tpu.memory_space<vmem>>, vector<8x128xf32>
    tpu.vector_store %arg12[%c0_114, %c0_115], %326 {strides = array<i32>} : memref<8x128xf32, #tpu.memory_space<vmem>>, vector<8x128xf32>,
    %c0_116 = arith.constant 0 : index
    %c0_117 = arith.constant 0 : index
    %337 = vector.load %arg13[%c0_116, %c0_117] : memref<8x128xf32, #tpu.memory_space<vmem>>, vector<8x128xf32>
    tpu.vector_store %arg13[%c0_116, %c0_117], %323 {strides = array<i32>} : memref<8x128xf32, #tpu.memory_space<vmem>>, vector<8x128xf32>,
    return
  }
  func.func @transform_0(%arg0: i32, %arg1: i32) -> (i32, i32, i32) {
    %c0_i32 = arith.constant 0 : i32
    %c0_i32_0 = arith.constant 0 : i32
    return %arg1, %arg0, %c0_i32 : i32, i32, i32
  }
  func.func @transform_1(%arg0: i32, %arg1: i32) -> (i32, i32) {
    %c0_i32 = arith.constant 0 : i32
    %c0_i32_0 = arith.constant 0 : i32
    return %arg0, %c0_i32 : i32, i32
  }
  func.func @transform_2(%arg0: i32, %arg1: i32) -> (i32, i32) {
    %c0_i32 = arith.constant 0 : i32
    %c0_i32_0 = arith.constant 0 : i32
    return %arg0, %c0_i32 : i32, i32
  }
  func.func @transform_3(%arg0: i32, %arg1: i32) -> (i32, i32) {
    %c0_i32 = arith.constant 0 : i32
    %c0_i32_0 = arith.constant 0 : i32
    %c0_i32_1 = arith.constant 0 : i32
    return %c0_i32, %c0_i32_0 : i32, i32
  }
  func.func @transform_7(%arg0: i32, %arg1: i32) -> (i32, i32, i32) {
    %c0_i32 = arith.constant 0 : i32
    %c0_i32_0 = arith.constant 0 : i32
    return %arg1, %arg0, %c0_i32 : i32, i32, i32
  }
  func.func @transform_8(%arg0: i32, %arg1: i32) -> (i32, i32) {
    %c0_i32 = arith.constant 0 : i32
    %c0_i32_0 = arith.constant 0 : i32
    return %arg0, %c0_i32 : i32, i32
  }
  func.func @transform_9(%arg0: i32, %arg1: i32) -> (i32, i32) {
    %c0_i32 = arith.constant 0 : i32
    %c0_i32_0 = arith.constant 0 : i32
    return %arg0, %c0_i32 : i32, i32
  }
}

</mosaic_0001>

<llo_original>
// kernel: tpu_custom_call.1
$region0: #{tpu_custom_call.1}
  #allocation0 [shape = 'u32[]', space=smem, size = 0x4, offset = 0x4, fixed_abs, tag = 'smem constant byte address 0x4 - core index']
  #allocation1 [shape = 'u32[72,128]{1,0:T(1,128)}', space=vmem, size = 0x9000, scoped, tag = 'internal scratch']
  #allocation2 [shape = 'f32[8,128]{1,0:T(8,128)}', space=vmem, size = 0x1000, scoped, tag = 'scratch operand']
  #allocation3 [shape = 'f32[8,128]{1,0:T(8,128)}', space=vmem, size = 0x1000, scoped, tag = 'scratch operand']
  #allocation4 [shape = 'f32[8,8,512]{2,1,0:T(8,128)}', space=vmem, size = 0x20000, scoped, tag = 'scratch operand']
  #allocation5 [shape = 'f32[128,512]{1,0:T(8,128)}', space=vmem, size = 0x40000, scoped, tag = 'scratch operand']
  #allocation6 [shape = 'f32[128,512]{1,0:T(8,128)}', space=vmem, size = 0x40000, scoped, tag = 'scratch operand']
  #allocation7 [shape = 'f32[128,128]{1,0:T(8,128)}', space=vmem, size = 0x10000, scoped, tag = 'scratch operand']
  #allocation8 [shape = 's32[3]{0}', space=sflag, size = 0xc, scoped, tag = 'scratch operand']
  #allocation21 [shape = 's32[]', space=sflag, size = 0x4, offset = 0, fixed_abs, tag = 'sflag constant byte address 0x0 - dummy sync flag']
  #allocation22 [shape = 's32[]', space=sflag, size = 0x4, offset = 0, fixed_abs, tag = 'sflag constant byte address 0x0 - dummy sync flag']
  #allocation23 [shape = 'u32[]', space=smem, size = 0x4, offset = 0x44, fixed_abs, tag = 'smem constant byte address 0x44 - assertion arg 0']
  #allocation24 [shape = 'u32[]', space=smem, size = 0x4, offset = 0x48, fixed_abs, tag = 'smem constant byte address 0x48 - assertion arg 1']
  #allocation25 [shape = 's32[]', space=sflag, size = 0x4, offset = 0, fixed_abs, tag = 'sflag constant byte address 0x0 - dummy sync flag']
  #allocation26 [shape = 's32[]', space=sflag, size = 0x4, offset = 0, fixed_abs, tag = 'sflag constant byte address 0x0 - dummy sync flag']
  #allocation27 [shape = 's32[]', space=sflag, size = 0x4, offset = 0, fixed_abs, tag = 'sflag constant byte address 0x0 - dummy sync flag']
  #allocation28 [shape = 's32[]', space=sflag, size = 0x4, offset = 0, fixed_abs, tag = 'sflag constant byte address 0x0 - dummy sync flag']
  %s0 = inlined_call_operand.hbm [shape: f32[16,16,128], index: 0, kind: input, shape index: {}]
  %s1 = inlined_call_operand.hbm [shape: f32[16,128], index: 1, kind: input, shape index: {}]
  %s2 = inlined_call_operand.hbm [shape: f32[16,128], index: 2, kind: input, shape index: {}]
  %s3 = inlined_call_operand.hbm [shape: f32[1,512], index: 3, kind: input, shape index: {}]
  %s4 = inlined_call_operand.hbm [shape: f32[128,512], index: 4, kind: input, shape index: {}]
  %s5 = inlined_call_operand.hbm [shape: f32[128,512], index: 5, kind: input, shape index: {}]
  %s6 = inlined_call_operand.hbm [shape: f32[128,128], index: 6, kind: input, shape index: {}]
  %s7 = inlined_call_operand.hbm [shape: f32[16,16,128], index: 7, kind: output, shape index: {0}]
  %s8 = inlined_call_operand.hbm [shape: f32[16,128], index: 8, kind: output, shape index: {1}]
  %s9 = inlined_call_operand.hbm [shape: f32[16,128], index: 9, kind: output, shape index: {2}]
  %10 = xla_tuple %s7, %s8, %s9
  %s11 = sld [smem:[#allocation0]]
  $region129: #{tpu_custom_call.1} parent=0
    _
  %s13 = ssub.s32 1, %s11
  %s14 = scalar_select 0, %s13, %s11
  $region1: #{tpu_custom_call.1} parent=0
    #allocation9 [shape = 'u8[65536]{0}', space=vmem, size = 0x10000, scoped, tag = 'input window, operand 0']
    #allocation10 [shape = 's32[2]{0}', space=sflag, size = 0x8, scoped, tag = 'scoped memory for tpu_custom_call.1']
    #allocation11 [shape = 's32[2]{0}', space=sflag, size = 0x8, scoped, tag = 'scoped memory for tpu_custom_call.1']
    #allocation12 [shape = 'u8[8192]{0}', space=vmem, size = 0x2000, scoped, tag = 'input window, operand 1']
    #allocation13 [shape = 's32[2]{0}', space=sflag, size = 0x8, scoped, tag = 'scoped memory for tpu_custom_call.1']
    #allocation14 [shape = 'u8[8192]{0}', space=vmem, size = 0x2000, scoped, tag = 'input window, operand 2']
    #allocation15 [shape = 'u8[2048]{0}', space=vmem, size = 0x800, scoped, tag = 'input window, operand 3, single buffered']
    #allocation16 [shape = 's32[1]{0}', space=sflag, size = 0x4, scoped, tag = 'scoped memory for tpu_custom_call.1']
    #allocation17 [shape = 'u8[65536]{0}', space=vmem, size = 0x10000, scoped, tag = 'output window, operand 0']
    #allocation18 [shape = 'u8[8192]{0}', space=vmem, size = 0x2000, scoped, tag = 'output window, operand 1']
    #allocation19 [shape = 's32[2]{0}', space=sflag, size = 0x8, scoped, tag = 'scoped memory for tpu_custom_call.1']
    #allocation20 [shape = 'u8[8192]{0}', space=vmem, size = 0x2000, scoped, tag = 'output window, operand 2']
    %15 = vsyncpa [#allocation10], 0
    %s16 = scalar_lea.sflag [#allocation10], 1
    %17 = vsyncpa %s16, 0
    %18 = vsyncpa [#allocation13], 0
    %s19 = scalar_lea.sflag [#allocation13], 1
    %20 = vsyncpa %s19, 0
    %21 = vsyncpa [#allocation16], 0
    %22 = vsyncpa [#allocation11], 0
    %s23 = scalar_lea.sflag [#allocation11], 1
    %24 = vsyncpa %s23, 0
    %25 = vsyncpa [#allocation19], 0
    %s26 = scalar_lea.sflag [#allocation19], 1
    %27 = vsyncpa %s26, 0
    loop: start=0, step=1, limit=6
    $region2: #{tpu_custom_call.1} parent=1 // loop_pre_header
      _
    $region3: #{tpu_custom_call.1} parent=1 // loop_header
      %s29 = sphi 0, %s33
      %p30 = scmp.ge.s32.totalorder %s29, 6
      %s36 = sphi 0, %s48
      %s37 = sphi 0, %s44
      %s38 = sphi 0, %s36
      %s39 = sphi 0, %s37
      %s40 = sphi 0, %s38
      %s41 = sphi 0, %s39
      %s53 = sphi 0, %s55
      %s56 = sphi 0, %s53
      %s57 = sphi 0, %s56
      %s73 = sphi 0, %s57
      %s79 = sphi 0, %s81
      %s82 = sphi 0, %s79
      %s83 = sphi 0, %s82
      %s99 = sphi 0, %s83
      %s105 = sphi 0, %s107
      %s108 = sphi 0, %s105
      %s109 = sphi 0, %s108
      %s125 = sphi 0, %s109
      %s129 = sphi 0, %s129
      %s131 = sphi 0, %s129
      %s132 = sphi 0, %s131
      %s146 = sphi 0, %s132
      %s154 = sphi 0, %s156
      %s157 = sphi 0, %s154
      %s158 = sphi 0, %s157
      %s174 = sphi 0, %s158
      %s180 = sphi 0, %s182
      %s183 = sphi 0, %s180
      %s184 = sphi 0, %s183
      %s200 = sphi 0, %s184
      %s206 = sphi 0, %s208
      %s209 = sphi 0, %s206
      %s210 = sphi 0, %s209
      %s226 = sphi 0, %s210
    $region4: #{tpu_custom_call.1} parent=1 // loop_header_branch
      %32 = sbr.rel (%p30) target = $region8
    $region5: #{tpu_custom_call.1} parent=1 // loop_body
      %s34 = ssub.s32 %s29, 1
      %s35 = ssub.s32 %s29, 2
      %s42 = sadd.s32 1, %s37
      %p43 = scmp.ge.s32.totalorder %s42, 2
      %s44 = scalar_select %p43, 0, %s42
      %s45 = sadd.s32 1, %s36
      %s46 = scalar_select %p43, %s45, %s36
      %p47 = scmp.ge.s32.totalorder %s46, 2
      %s48 = scalar_select %p47, 0, %s46
      %s49 = ssub.s32 %s37, %s44
      %s50 = ssub.s32 %s36, %s48
      %s51 = sor.u32 %s49, %s50
      %p52 = scmp.eq.s32.totalorder %s51, 0
      %s54 = sadd.s32 %s53, 1
      %s55 = scalar_select %p52, %s53, %s54
      %p58 = pneg %p52
      %p59 = scmp.eq.s32.totalorder %s29, 3
      %p60 = por %p58, %p59
      %p61 = scmp.ne.s32.totalorder %s53, %s56
      %p62 = scmp.eq.s32.totalorder %s29, 0
      %p63 = por %p61, %p62
      %p64 = scmp.ne.s32.totalorder %s53, %s56
      %p65 = scmp.eq.s32.totalorder %s34, 3
      %p66 = por %p64, %p65
      %p67 = scmp.ne.s32.totalorder %s56, %s57
      %p68 = scmp.eq.s32.totalorder %s34, 0
      %p69 = por %p67, %p68
      %p70 = scmp.ne.s32.totalorder %s56, %s57
      %p71 = scmp.eq.s32.totalorder %s35, 3
      %p72 = por %p70, %p71
      %p74 = scmp.ne.s32.totalorder %s57, %s73
      %p75 = scmp.eq.s32.totalorder %s35, 0
      %p76 = por %p74, %p75
      %s77 = ssub.s32 %s36, %s48
      %p78 = scmp.eq.s32.totalorder %s77, 0
      %s80 = sadd.s32 %s79, 1
      %s81 = scalar_select %p78, %s79, %s80
      %p84 = pneg %p78
      %p85 = scmp.eq.s32.totalorder %s29, 3
      %p86 = por %p84, %p85
      %p87 = scmp.ne.s32.totalorder %s79, %s82
      %p88 = scmp.eq.s32.totalorder %s29, 0
      %p89 = por %p87, %p88
      %p90 = scmp.ne.s32.totalorder %s79, %s82
      %p91 = scmp.eq.s32.totalorder %s34, 3
      %p92 = por %p90, %p91
      %p93 = scmp.ne.s32.totalorder %s82, %s83
      %p94 = scmp.eq.s32.totalorder %s34, 0
      %p95 = por %p93, %p94
      %p96 = scmp.ne.s32.totalorder %s82, %s83
      %p97 = scmp.eq.s32.totalorder %s35, 3
      %p98 = por %p96, %p97
      %p100 = scmp.ne.s32.totalorder %s83, %s99
      %p101 = scmp.eq.s32.totalorder %s35, 0
      %p102 = por %p100, %p101
      %s103 = ssub.s32 %s36, %s48
      %p104 = scmp.eq.s32.totalorder %s103, 0
      %s106 = sadd.s32 %s105, 1
      %s107 = scalar_select %p104, %s105, %s106
      %p110 = pneg %p104
      %p111 = scmp.eq.s32.totalorder %s29, 3
      %p112 = por %p110, %p111
      %p113 = scmp.ne.s32.totalorder %s105, %s108
      %p114 = scmp.eq.s32.totalorder %s29, 0
      %p115 = por %p113, %p114
      %p116 = scmp.ne.s32.totalorder %s105, %s108
      %p117 = scmp.eq.s32.totalorder %s34, 3
      %p118 = por %p116, %p117
      %p119 = scmp.ne.s32.totalorder %s108, %s109
      %p120 = scmp.eq.s32.totalorder %s34, 0
      %p121 = por %p119, %p120
      %p122 = scmp.ne.s32.totalorder %s108, %s109
      %p123 = scmp.eq.s32.totalorder %s35, 3
      %p124 = por %p122, %p123
      %p126 = scmp.ne.s32.totalorder %s109, %s125
      %p127 = scmp.eq.s32.totalorder %s35, 0
      %p128 = por %p126, %p127
      %s130 = sadd.s32 %s129, 1
      %p133 = scmp.eq.s32.totalorder %s29, 3
      %p134 = scmp.ne.s32.totalorder %s129, %s131
      %p135 = scmp.eq.s32.totalorder %s29, 0
      %p136 = por %p134, %p135
      %p137 = scmp.ne.s32.totalorder %s129, %s131
      %p138 = scmp.eq.s32.totalorder %s34, 3
      %p139 = por %p137, %p138
      %p140 = scmp.ne.s32.totalorder %s131, %s132
      %p141 = scmp.eq.s32.totalorder %s34, 0
      %p142 = por %p140, %p141
      %p143 = scmp.ne.s32.totalorder %s131, %s132
      %p144 = scmp.eq.s32.totalorder %s35, 3
      %p145 = por %p143, %p144
      %p147 = scmp.ne.s32.totalorder %s132, %s146
      %p148 = scmp.eq.s32.totalorder %s35, 0
      %p149 = por %p147, %p148
      %s150 = ssub.s32 %s37, %s44
      %s151 = ssub.s32 %s36, %s48
      %s152 = sor.u32 %s150, %s151
      %p153 = scmp.eq.s32.totalorder %s152, 0
      %s155 = sadd.s32 %s154, 1
      %s156 = scalar_select %p153, %s154, %s155
      %p159 = pneg %p153
      %p160 = scmp.eq.s32.totalorder %s29, 3
      %p161 = por %p159, %p160
      %p162 = scmp.ne.s32.totalorder %s154, %s157
      %p163 = scmp.eq.s32.totalorder %s29, 0
      %p164 = por %p162, %p163
      %p165 = scmp.ne.s32.totalorder %s154, %s157
      %p166 = scmp.eq.s32.totalorder %s34, 3
      %p167 = por %p165, %p166
      %p168 = scmp.ne.s32.totalorder %s157, %s158
      %p169 = scmp.eq.s32.totalorder %s34, 0
      %p170 = por %p168, %p169
      %p171 = scmp.ne.s32.totalorder %s157, %s158
      %p172 = scmp.eq.s32.totalorder %s35, 3
      %p173 = por %p171, %p172
      %p175 = scmp.ne.s32.totalorder %s158, %s174
      %p176 = scmp.eq.s32.totalorder %s35, 0
      %p177 = por %p175, %p176
      %s178 = ssub.s32 %s36, %s48
      %p179 = scmp.eq.s32.totalorder %s178, 0
      %s181 = sadd.s32 %s180, 1
      %s182 = scalar_select %p179, %s180, %s181
      %p185 = pneg %p179
      %p186 = scmp.eq.s32.totalorder %s29, 3
      %p187 = por %p185, %p186
      %p188 = scmp.ne.s32.totalorder %s180, %s183
      %p189 = scmp.eq.s32.totalorder %s29, 0
      %p190 = por %p188, %p189
      %p191 = scmp.ne.s32.totalorder %s180, %s183
      %p192 = scmp.eq.s32.totalorder %s34, 3
      %p193 = por %p191, %p192
      %p194 = scmp.ne.s32.totalorder %s183, %s184
      %p195 = scmp.eq.s32.totalorder %s34, 0
      %p196 = por %p194, %p195
      %p197 = scmp.ne.s32.totalorder %s183, %s184
      %p198 = scmp.eq.s32.totalorder %s35, 3
      %p199 = por %p197, %p198
      %p201 = scmp.ne.s32.totalorder %s184, %s200
      %p202 = scmp.eq.s32.totalorder %s35, 0
      %p203 = por %p201, %p202
      %s204 = ssub.s32 %s36, %s48
      %p205 = scmp.eq.s32.totalorder %s204, 0
      %s207 = sadd.s32 %s206, 1
      %s208 = scalar_select %p205, %s206, %s207
      %p211 = pneg %p205
      %p212 = scmp.eq.s32.totalorder %s29, 3
      %p213 = por %p211, %p212
      %p214 = scmp.ne.s32.totalorder %s206, %s209
      %p215 = scmp.eq.s32.totalorder %s29, 0
      %p216 = por %p214, %p215
      %p217 = scmp.ne.s32.totalorder %s206, %s209
      %p218 = scmp.eq.s32.totalorder %s34, 3
      %p219 = por %p217, %p218
      %p220 = scmp.ne.s32.totalorder %s209, %s210
      %p221 = scmp.eq.s32.totalorder %s34, 0
      %p222 = por %p220, %p221
      %p223 = scmp.ne.s32.totalorder %s209, %s210
      %p224 = scmp.eq.s32.totalorder %s35, 3
      %p225 = por %p223, %p224
      %p227 = scmp.ne.s32.totalorder %s210, %s226
      %p228 = scmp.eq.s32.totalorder %s35, 0
      %p229 = por %p227, %p228
      %p230 = scmp.le.s32.totalorder 1, %s29
      %p231 = scmp.lt.s32.totalorder %s29, 5
      %p232 = pnand %p230, %p231
      %p233 = pneg %p232
      // Predicated region
      $region9: #{tpu_custom_call.1} parent=5 // pred_check
        _
      $region10: #{tpu_custom_call.1} parent=5 // pred_check_branch
        %235 = sbr.rel (%p232) target = $region12
      $region11: #{tpu_custom_call.1} parent=5 // pred_region
        %s236 = ssub.s32 %s29, 1
        // Predicated region
        $region13: #{tpu_custom_call.1} parent=11 // pred_check
          %p237 = pneg %p142
        $region14: #{tpu_custom_call.1} parent=11 // pred_check_branch
          %239 = sbr.rel (%p237) target = $region16
        $region15: #{tpu_custom_call.1} parent=11 // pred_region
          %241 = vsyncadd [#allocation16], 0
          %s243 = sshll.u32 %s3, 4
          %s244 = int_to_ptr.hbm [resolvable:$true] %s243
          %s245 = sshll.u32 [#allocation15], 4
          %s246 = int_to_ptr.vmem [resolvable:$true] %s245
          %248 = dma.hbm_to_vmem [thread:$0]  %s244, 64, %s246, [#allocation16]
        $region16: #{tpu_custom_call.1} parent=11 // pred_fallthru
          _
      $region12: #{tpu_custom_call.1} parent=5 // pred_fallthru
        _
      %p249 = scmp.lt.s32.totalorder %s29, 4
      // Predicated region
      $region17: #{tpu_custom_call.1} parent=5 // pred_check
        %p250 = pneg %p249
      $region18: #{tpu_custom_call.1} parent=5 // pred_check_branch
        %252 = sbr.rel (%p250) target = $region20
      $region19: #{tpu_custom_call.1} parent=5 // pred_region
        // Predicated region
        $region21: #{tpu_custom_call.1} parent=19 // pred_check
          %p253 = pneg %p63
        $region22: #{tpu_custom_call.1} parent=19 // pred_check_branch
          %255 = sbr.rel (%p253) target = $region24
        $region23: #{tpu_custom_call.1} parent=19 // pred_region
          %s256 = sand.u32 %s53, 1
          %s257 = scalar_lea.sflag [#allocation10], %s256
          %s258 = sand.u32 %s53, 1
          %s259 = smul.addr %s258, 64
          %s260 = scalar_lea.vmem [#allocation9], %s259
          %s261 = smul.u32 8, %s37
          %263 = vsyncadd %s257, 0
          %s264 = smul.addr %s261, 2
          %s265 = sadd.s32 %s36, %s264
          %s266 = smul.addr %s265, 8
          %s267 = scalar_lea.hbm %s0, %s266
          %s268 = sshll.u32 %s267, 4
          %s269 = int_to_ptr.hbm [resolvable:$true] %s268
          %s270 = sshll.u32 %s260, 4
          %s271 = int_to_ptr.vmem [resolvable:$true] %s270
          %276 = dma.hbm_to_vmem [thread:$0]  %s269, 1024, %s271, %s257, 256, 128, 8
        $region24: #{tpu_custom_call.1} parent=19 // pred_fallthru
          _
        // Predicated region
        $region25: #{tpu_custom_call.1} parent=19 // pred_check
          %p277 = pneg %p89
        $region26: #{tpu_custom_call.1} parent=19 // pred_check_branch
          %279 = sbr.rel (%p277) target = $region28
        $region27: #{tpu_custom_call.1} parent=19 // pred_region
          %s280 = sand.u32 %s29, 1
          %s281 = scalar_lea.sflag [#allocation13], %s280
          %s282 = sand.u32 %s79, 1
          %s283 = smul.addr %s282, 8
          %s284 = scalar_lea.vmem [#allocation12], %s283
          %286 = vsyncadd %s281, 0
          %s287 = smul.addr %s36, 8
          %s288 = scalar_lea.hbm %s1, %s287
          %s290 = sshll.u32 %s288, 4
          %s291 = int_to_ptr.hbm [resolvable:$true] %s290
          %s292 = sshll.u32 %s284, 4
          %s293 = int_to_ptr.vmem [resolvable:$true] %s292
          %295 = dma.hbm_to_vmem [thread:$0]  %s291, 128, %s293, %s281
        $region28: #{tpu_custom_call.1} parent=19 // pred_fallthru
          _
        // Predicated region
        $region29: #{tpu_custom_call.1} parent=19 // pred_check
          %p296 = pneg %p115
        $region30: #{tpu_custom_call.1} parent=19 // pred_check_branch
          %298 = sbr.rel (%p296) target = $region32
        $region31: #{tpu_custom_call.1} parent=19 // pred_region
          %s299 = sand.u32 %s29, 1
          %s300 = scalar_lea.sflag [#allocation13], %s299
          %s301 = sand.u32 %s105, 1
          %s302 = smul.addr %s301, 8
          %s303 = scalar_lea.vmem [#allocation14], %s302
          %305 = vsyncadd %s300, 0
          %s306 = smul.addr %s36, 8
          %s307 = scalar_lea.hbm %s2, %s306
          %s309 = sshll.u32 %s307, 4
          %s310 = int_to_ptr.hbm [resolvable:$true] %s309
          %s311 = sshll.u32 %s303, 4
          %s312 = int_to_ptr.vmem [resolvable:$true] %s311
          %314 = dma.hbm_to_vmem [thread:$0]  %s310, 128, %s312, %s300
        $region32: #{tpu_custom_call.1} parent=19 // pred_fallthru
          _
      $region20: #{tpu_custom_call.1} parent=5 // pred_fallthru
        _
      %p315 = scmp.le.s32.totalorder 1, %s29
      %p316 = scmp.lt.s32.totalorder %s29, 5
      %p317 = pnand %p315, %p316
      %p318 = pneg %p317
      // Predicated region
      $region33: #{tpu_custom_call.1} parent=5 // pred_check
        _
      $region34: #{tpu_custom_call.1} parent=5 // pred_check_branch
        %320 = sbr.rel (%p317) target = $region36
      $region35: #{tpu_custom_call.1} parent=5 // pred_region
        %s321 = ssub.s32 %s29, 1
        %s322 = sand.u32 %s56, 1
        %s323 = scalar_lea.sflag [#allocation10], %s322
        %s324 = sand.u32 %s56, 1
        %s325 = smul.addr %s324, 64
        %s326 = scalar_lea.vmem [#allocation9], %s325
        // Predicated region
        $region37: #{tpu_custom_call.1} parent=35 // pred_check
          %p327 = pneg %p69
        $region38: #{tpu_custom_call.1} parent=35 // pred_check_branch
          %329 = sbr.rel (%p327) target = $region40
        $region39: #{tpu_custom_call.1} parent=35 // pred_region
          %331 = dma.done %s323, 1024
        $region40: #{tpu_custom_call.1} parent=35 // pred_fallthru
          _
        %s332 = sand.u32 %s34, 1
        %s333 = scalar_lea.sflag [#allocation13], %s332
        %s334 = sand.u32 %s82, 1
        %s335 = smul.addr %s334, 8
        %s336 = scalar_lea.vmem [#allocation12], %s335
        // Predicated region
        $region41: #{tpu_custom_call.1} parent=35 // pred_check
          %p337 = pneg %p95
        $region42: #{tpu_custom_call.1} parent=35 // pred_check_branch
          %339 = sbr.rel (%p337) target = $region44
        $region43: #{tpu_custom_call.1} parent=35 // pred_region
          %341 = dma.done %s333, 128
        $region44: #{tpu_custom_call.1} parent=35 // pred_fallthru
          _
        %s342 = sand.u32 %s34, 1
        %s343 = scalar_lea.sflag [#allocation13], %s342
        %s344 = sand.u32 %s108, 1
        %s345 = smul.addr %s344, 8
        %s346 = scalar_lea.vmem [#allocation14], %s345
        // Predicated region
        $region45: #{tpu_custom_call.1} parent=35 // pred_check
          %p347 = pneg %p121
        $region46: #{tpu_custom_call.1} parent=35 // pred_check_branch
          %349 = sbr.rel (%p347) target = $region48
        $region47: #{tpu_custom_call.1} parent=35 // pred_region
          %351 = dma.done %s343, 128
        $region48: #{tpu_custom_call.1} parent=35 // pred_fallthru
          _
        // Predicated region
        $region49: #{tpu_custom_call.1} parent=35 // pred_check
          %p352 = pneg %p142
        $region50: #{tpu_custom_call.1} parent=35 // pred_check_branch
          %354 = sbr.rel (%p352) target = $region52
        $region51: #{tpu_custom_call.1} parent=35 // pred_region
          %356 = dma.done [#allocation16], 64
        $region52: #{tpu_custom_call.1} parent=35 // pred_fallthru
          _
        %s357 = sand.u32 %s56, 1
        %s358 = scalar_lea.sflag [#allocation10], %s357
        %s359 = sand.u32 %s56, 1
        %s360 = smul.addr %s359, 64
        %s361 = scalar_lea.vmem [#allocation9], %s360
        %p362 = pneg %p69
        %p363 = pneg %p66
        %s364 = sand.u32 %s34, 1
        %s365 = scalar_lea.sflag [#allocation13], %s364
        %s366 = sand.u32 %s82, 1
        %s367 = smul.addr %s366, 8
        %s368 = scalar_lea.vmem [#allocation12], %s367
        %p369 = pneg %p95
        %p370 = pneg %p92
        %s371 = sand.u32 %s34, 1
        %s372 = scalar_lea.sflag [#allocation13], %s371
        %s373 = sand.u32 %s108, 1
        %s374 = smul.addr %s373, 8
        %s375 = scalar_lea.vmem [#allocation14], %s374
        %p376 = pneg %p121
        %p377 = pneg %p118
        %p378 = pneg %p142
        %p379 = pneg %p139
        %p380 = pneg %p170
        %p381 = pneg %p167
        %s382 = sand.u32 %s157, 1
        %s383 = scalar_lea.sflag [#allocation11], %s382
        %s384 = sand.u32 %s157, 1
        %s385 = smul.addr %s384, 64
        %s386 = scalar_lea.vmem [#allocation17], %s385
        %p387 = pneg %p196
        %p388 = pneg %p193
        %s389 = sand.u32 %s34, 1
        %s390 = scalar_lea.sflag [#allocation19], %s389
        %s391 = sand.u32 %s183, 1
        %s392 = smul.addr %s391, 8
        %s393 = scalar_lea.vmem [#allocation18], %s392
        %p394 = pneg %p222
        %p395 = pneg %p219
        %s396 = sand.u32 %s34, 1
        %s397 = scalar_lea.sflag [#allocation19], %s396
        %s398 = sand.u32 %s209, 1
        %s399 = smul.addr %s398, 8
        %s400 = scalar_lea.vmem [#allocation20], %s399
        %s401 = smul.u32 8, %s39
        %s402 = smul.u32 8, %s39
        %p403 = scmp.eq.s32.totalorder %s39, 0
        // Predicated region
        $region53: #{tpu_custom_call.1} parent=35 // pred_check
          %p404 = pneg %p403
        $region54: #{tpu_custom_call.1} parent=35 // pred_check_branch
          %406 = sbr.rel (%p404) target = $region56
        $region55: #{tpu_custom_call.1} parent=35 // pred_region
          // Predicated region
          $region57: #{tpu_custom_call.1} parent=55 // pred_check
            _
          $region58: #{tpu_custom_call.1} parent=55 // pred_check_branch
            %408 = sbr.rel target = $region60
          $region59: #{tpu_custom_call.1} parent=55 // pred_region
            %409 = sst [smem:[#allocation23]] [#allocation22]
            %410 = sst [smem:[#allocation24]] [#allocation21]
          $region60: #{tpu_custom_call.1} parent=55 // pred_fallthru
            _
          %412 = shalt.err (0)
          %s414 = sshll.u32 %s4, 4
          %s415 = int_to_ptr.hbm [resolvable:$true] %s414
          %s416 = sshll.u32 [#allocation5], 4
          %s417 = int_to_ptr.vmem [resolvable:$true] %s416
          %419 = dma.hbm_to_vmem [thread:$0]  %s415, 8192, %s417, [#allocation8]
          %s420 = scalar_lea.sflag [#allocation8], 1
          // Predicated region
          $region61: #{tpu_custom_call.1} parent=55 // pred_check
            _
          $region62: #{tpu_custom_call.1} parent=55 // pred_check_branch
            %422 = sbr.rel target = $region64
          $region63: #{tpu_custom_call.1} parent=55 // pred_region
            %423 = sst [smem:[#allocation23]] [#allocation26]
            %424 = sst [smem:[#allocation24]] [#allocation25]
          $region64: #{tpu_custom_call.1} parent=55 // pred_fallthru
            _
          %426 = shalt.err (0)
          %s428 = sshll.u32 %s5, 4
          %s429 = int_to_ptr.hbm [resolvable:$true] %s428
          %s430 = sshll.u32 [#allocation6], 4
          %s431 = int_to_ptr.vmem [resolvable:$true] %s430
          %433 = dma.hbm_to_vmem [thread:$0]  %s429, 8192, %s431, %s420
          %s434 = scalar_lea.sflag [#allocation8], 2
          // Predicated region
          $region65: #{tpu_custom_call.1} parent=55 // pred_check
            _
          $region66: #{tpu_custom_call.1} parent=55 // pred_check_branch
            %436 = sbr.rel target = $region68
          $region67: #{tpu_custom_call.1} parent=55 // pred_region
            %437 = sst [smem:[#allocation23]] [#allocation28]
            %438 = sst [smem:[#allocation24]] [#allocation27]
          $region68: #{tpu_custom_call.1} parent=55 // pred_fallthru
            _
          %440 = shalt.err (0)
          %s442 = sshll.u32 %s6, 4
          %s443 = int_to_ptr.hbm [resolvable:$true] %s442
          %s444 = sshll.u32 [#allocation7], 4
          %s445 = int_to_ptr.vmem [resolvable:$true] %s444
          %447 = dma.hbm_to_vmem [thread:$0]  %s443, 2048, %s445, %s434
          %v448 = vld [vmem:[%s336] sm:$0xff]
          %449 = vst [vmem:[#allocation2] sm:$0xff] %v448
          %v450 = vld [vmem:[%s346] sm:$0xff]
          %451 = vst [vmem:[#allocation3] sm:$0xff] %v450
          %s452 = smul.u32 8, 16
          %s453 = smul.u32 %s452, 4
          %s454 = sshll.u32 %s453, 4
          %455 = dma.done [#allocation8], %s454
          %s456 = sshll.u32 %s453, 4
          %457 = dma.done %s420, %s456
          %s458 = smul.u32 128, 1
          %s459 = sshll.u32 %s458, 4
          %460 = dma.done %s434, %s459
        $region56: #{tpu_custom_call.1} parent=35 // pred_fallthru
          _
        %v461 = vld [vmem:[%s326] sm:$0xff]
        %v462 = vld [vmem:[%s326 + $0x8] sm:$0xff]
        %v463 = vld [vmem:[%s326 + $0x10] sm:$0xff]
        %v464 = vld [vmem:[%s326 + $0x18] sm:$0xff]
        %v465 = vld [vmem:[%s326 + $0x20] sm:$0xff]
        %v466 = vld [vmem:[%s326 + $0x28] sm:$0xff]
        %v467 = vld [vmem:[%s326 + $0x30] sm:$0xff]
        %v468 = vld [vmem:[%s326 + $0x38] sm:$0xff]
        %v469 = vld [vmem:[#allocation5] sm:$0xff]
        %v470 = vld [vmem:[#allocation5 + $0x8] sm:$0xff]
        %v471 = vld [vmem:[#allocation5 + $0x10] sm:$0xff]
        %v472 = vld [vmem:[#allocation5 + $0x18] sm:$0xff]
        %v473 = vld [vmem:[#allocation5 + $0x20] sm:$0xff]
        %v474 = vld [vmem:[#allocation5 + $0x28] sm:$0xff]
        %v475 = vld [vmem:[#allocation5 + $0x30] sm:$0xff]
        %v476 = vld [vmem:[#allocation5 + $0x38] sm:$0xff]
        %v477 = vld [vmem:[#allocation5 + $0x40] sm:$0xff]
        %v478 = vld [vmem:[#allocation5 + $0x48] sm:$0xff]
        %v479 = vld [vmem:[#allocation5 + $0x50] sm:$0xff]
        %v480 = vld [vmem:[#allocation5 + $0x58] sm:$0xff]
        %v481 = vld [vmem:[#allocation5 + $0x60] sm:$0xff]
        %v482 = vld [vmem:[#allocation5 + $0x68] sm:$0xff]
        %v483 = vld [vmem:[#allocation5 + $0x70] sm:$0xff]
        %v484 = vld [vmem:[#allocation5 + $0x78] sm:$0xff]
        %v485 = vld [vmem:[#allocation5 + $0x80] sm:$0xff]
        %v486 = vld [vmem:[#allocation5 + $0x88] sm:$0xff]
        %v487 = vld [vmem:[#allocation5 + $0x90] sm:$0xff]
        %v488 = vld [vmem:[#allocation5 + $0x98] sm:$0xff]
        %v489 = vld [vmem:[#allocation5 + $0xa0] sm:$0xff]
        %v490 = vld [vmem:[#allocation5 + $0xa8] sm:$0xff]
        %v491 = vld [vmem:[#allocation5 + $0xb0] sm:$0xff]
        %v492 = vld [vmem:[#allocation5 + $0xb8] sm:$0xff]
        %v493 = vld [vmem:[#allocation5 + $0xc0] sm:$0xff]
        %v494 = vld [vmem:[#allocation5 + $0xc8] sm:$0xff]
        %v495 = vld [vmem:[#allocation5 + $0xd0] sm:$0xff]
        %v496 = vld [vmem:[#allocation5 + $0xd8] sm:$0xff]
        %v497 = vld [vmem:[#allocation5 + $0xe0] sm:$0xff]
        %v498 = vld [vmem:[#allocation5 + $0xe8] sm:$0xff]
        %v499 = vld [vmem:[#allocation5 + $0xf0] sm:$0xff]
        %v500 = vld [vmem:[#allocation5 + $0xf8] sm:$0xff]
        %v501 = vld [vmem:[#allocation5 + $0x100] sm:$0xff]
        %v502 = vld [vmem:[#allocation5 + $0x108] sm:$0xff]
        %v503 = vld [vmem:[#allocation5 + $0x110] sm:$0xff]
        %v504 = vld [vmem:[#allocation5 + $0x118] sm:$0xff]
        %v505 = vld [vmem:[#allocation5 + $0x120] sm:$0xff]
        %v506 = vld [vmem:[#allocation5 + $0x128] sm:$0xff]
        %v507 = vld [vmem:[#allocation5 + $0x130] sm:$0xff]
        %v508 = vld [vmem:[#allocation5 + $0x138] sm:$0xff]
        %v509 = vld [vmem:[#allocation5 + $0x140] sm:$0xff]
        %v510 = vld [vmem:[#allocation5 + $0x148] sm:$0xff]
        %v511 = vld [vmem:[#allocation5 + $0x150] sm:$0xff]
        %v512 = vld [vmem:[#allocation5 + $0x158] sm:$0xff]
        %v513 = vld [vmem:[#allocation5 + $0x160] sm:$0xff]
        %v514 = vld [vmem:[#allocation5 + $0x168] sm:$0xff]
        %v515 = vld [vmem:[#allocation5 + $0x170] sm:$0xff]
        %v516 = vld [vmem:[#allocation5 + $0x178] sm:$0xff]
        %v517 = vld [vmem:[#allocation5 + $0x180] sm:$0xff]
        %v518 = vld [vmem:[#allocation5 + $0x188] sm:$0xff]
        %v519 = vld [vmem:[#allocation5 + $0x190] sm:$0xff]
        %v520 = vld [vmem:[#allocation5 + $0x198] sm:$0xff]
        %v521 = vld [vmem:[#allocation5 + $0x1a0] sm:$0xff]
        %v522 = vld [vmem:[#allocation5 + $0x1a8] sm:$0xff]
        %v523 = vld [vmem:[#allocation5 + $0x1b0] sm:$0xff]
        %v524 = vld [vmem:[#allocation5 + $0x1b8] sm:$0xff]
        %v525 = vld [vmem:[#allocation5 + $0x1c0] sm:$0xff]
        %v526 = vld [vmem:[#allocation5 + $0x1c8] sm:$0xff]
        %v527 = vld [vmem:[#allocation5 + $0x1d0] sm:$0xff]
        %v528 = vld [vmem:[#allocation5 + $0x1d8] sm:$0xff]
        %v529 = vld [vmem:[#allocation5 + $0x1e0] sm:$0xff]
        %v530 = vld [vmem:[#allocation5 + $0x1e8] sm:$0xff]
        %v531 = vld [vmem:[#allocation5 + $0x1f0] sm:$0xff]
        %v532 = vld [vmem:[#allocation5 + $0x1f8] sm:$0xff]
        %v533 = vld [vmem:[#allocation15] sm:$0xf]
        %v535 = vperm.slane %v533, 0
        %v536 = vperm.slane %v533, 1
        %v537 = vperm.slane %v533, 2
        %v538 = vperm.slane %v533, 3
        %543 = vmatpush.msra.mxu0 %v529
        %544 = vmatpush.msra.mxu0 %v525
        %545 = vmatpush.msra.mxu0 %v521
        %546 = vmatpush.msra.mxu0 %v517
        %547 = vmatpush.msra.mxu0 %v513
        %548 = vmatpush.msra.mxu0 %v509
        %549 = vmatpush.msra.mxu0 %v505
        %550 = vmatpush.msra.mxu0 %v501
        %551 = vmatpush.msra.mxu0 %v497
        %552 = vmatpush.msra.mxu0 %v493
        %553 = vmatpush.msra.mxu0 %v489
        %554 = vmatpush.msra.mxu0 %v485
        %555 = vmatpush.msra.mxu0 %v481
        %556 = vmatpush.msra.mxu0 %v477
        %557 = vmatpush.msra.mxu0 %v473
        %558 = vmatpush.msra.mxu0 %v469
        %559 = vmatmul.f32.gmra.mxu0 %v461
        %v560 = vpop.f32.mrf.mxu0
        %v561 = vadd.f32 %v535, %v560
        %562 = vmatmul.f32.gmra.mxu0 %v462
        %v563 = vpop.f32.mrf.mxu0
        %v564 = vadd.f32 %v535, %v563
        %565 = vmatmul.f32.gmra.mxu0 %v463
        %v566 = vpop.f32.mrf.mxu0
        %v567 = vadd.f32 %v535, %v566
        %568 = vmatmul.f32.gmra.mxu0 %v464
        %v569 = vpop.f32.mrf.mxu0
        %v570 = vadd.f32 %v535, %v569
        %571 = vmatmul.f32.gmra.mxu0 %v465
        %v572 = vpop.f32.mrf.mxu0
        %v573 = vadd.f32 %v535, %v572
        %574 = vmatmul.f32.gmra.mxu0 %v466
        %v575 = vpop.f32.mrf.mxu0
        %v576 = vadd.f32 %v535, %v575
        %577 = vmatmul.f32.gmra.mxu0 %v467
        %v578 = vpop.f32.mrf.mxu0
        %v579 = vadd.f32 %v535, %v578
        %580 = vmatmul.f32.gmra.mxu0 %v468
        %v581 = vpop.f32.mrf.mxu0
        %v582 = vadd.f32 %v535, %v581
        %583 = vdwg.mxu0
        %584 = vmatpush.msra.mxu0 %v530
        %585 = vmatpush.msra.mxu0 %v526
        %586 = vmatpush.msra.mxu0 %v522
        %587 = vmatpush.msra.mxu0 %v518
        %588 = vmatpush.msra.mxu0 %v514
        %589 = vmatpush.msra.mxu0 %v510
        %590 = vmatpush.msra.mxu0 %v506
        %591 = vmatpush.msra.mxu0 %v502
        %592 = vmatpush.msra.mxu0 %v498
        %593 = vmatpush.msra.mxu0 %v494
        %594 = vmatpush.msra.mxu0 %v490
        %595 = vmatpush.msra.mxu0 %v486
        %596 = vmatpush.msra.mxu0 %v482
        %597 = vmatpush.msra.mxu0 %v478
        %598 = vmatpush.msra.mxu0 %v474
        %599 = vmatpush.msra.mxu0 %v470
        %600 = vmatmul.f32.gmra.mxu0 %v461
        %v601 = vpop.f32.mrf.mxu0
        %v602 = vadd.f32 %v536, %v601
        %603 = vmatmul.f32.gmra.mxu0 %v462
        %v604 = vpop.f32.mrf.mxu0
        %v605 = vadd.f32 %v536, %v604
        %606 = vmatmul.f32.gmra.mxu0 %v463
        %v607 = vpop.f32.mrf.mxu0
        %v608 = vadd.f32 %v536, %v607
        %609 = vmatmul.f32.gmra.mxu0 %v464
        %v610 = vpop.f32.mrf.mxu0
        %v611 = vadd.f32 %v536, %v610
        %612 = vmatmul.f32.gmra.mxu0 %v465
        %v613 = vpop.f32.mrf.mxu0
        %v614 = vadd.f32 %v536, %v613
        %615 = vmatmul.f32.gmra.mxu0 %v466
        %v616 = vpop.f32.mrf.mxu0
        %v617 = vadd.f32 %v536, %v616
        %618 = vmatmul.f32.gmra.mxu0 %v467
        %v619 = vpop.f32.mrf.mxu0
        %v620 = vadd.f32 %v536, %v619
        %621 = vmatmul.f32.gmra.mxu0 %v468
        %v622 = vpop.f32.mrf.mxu0
        %v623 = vadd.f32 %v536, %v622
        %624 = vdwg.mxu0
        %625 = vmatpush.msra.mxu0 %v531
        %626 = vmatpush.msra.mxu0 %v527
        %627 = vmatpush.msra.mxu0 %v523
        %628 = vmatpush.msra.mxu0 %v519
        %629 = vmatpush.msra.mxu0 %v515
        %630 = vmatpush.msra.mxu0 %v511
        %631 = vmatpush.msra.mxu0 %v507
        %632 = vmatpush.msra.mxu0 %v503
        %633 = vmatpush.msra.mxu0 %v499
        %634 = vmatpush.msra.mxu0 %v495
        %635 = vmatpush.msra.mxu0 %v491
        %636 = vmatpush.msra.mxu0 %v487
        %637 = vmatpush.msra.mxu0 %v483
        %638 = vmatpush.msra.mxu0 %v479
        %639 = vmatpush.msra.mxu0 %v475
        %640 = vmatpush.msra.mxu0 %v471
        %641 = vmatmul.f32.gmra.mxu0 %v461
        %v642 = vpop.f32.mrf.mxu0
        %v643 = vadd.f32 %v537, %v642
        %644 = vmatmul.f32.gmra.mxu0 %v462
        %v645 = vpop.f32.mrf.mxu0
        %v646 = vadd.f32 %v537, %v645
        %647 = vmatmul.f32.gmra.mxu0 %v463
        %v648 = vpop.f32.mrf.mxu0
        %v649 = vadd.f32 %v537, %v648
        %650 = vmatmul.f32.gmra.mxu0 %v464
        %v651 = vpop.f32.mrf.mxu0
        %v652 = vadd.f32 %v537, %v651
        %653 = vmatmul.f32.gmra.mxu0 %v465
        %v654 = vpop.f32.mrf.mxu0
        %v655 = vadd.f32 %v537, %v654
        %656 = vmatmul.f32.gmra.mxu0 %v466
        %v657 = vpop.f32.mrf.mxu0
        %v658 = vadd.f32 %v537, %v657
        %659 = vmatmul.f32.gmra.mxu0 %v467
        %v660 = vpop.f32.mrf.mxu0
        %v661 = vadd.f32 %v537, %v660
        %662 = vmatmul.f32.gmra.mxu0 %v468
        %v663 = vpop.f32.mrf.mxu0
        %v664 = vadd.f32 %v537, %v663
        %665 = vdwg.mxu0
        %666 = vmatpush.msra.mxu0 %v532
        %667 = vmatpush.msra.mxu0 %v528
        %668 = vmatpush.msra.mxu0 %v524
        %669 = vmatpush.msra.mxu0 %v520
        %670 = vmatpush.msra.mxu0 %v516
        %671 = vmatpush.msra.mxu0 %v512
        %672 = vmatpush.msra.mxu0 %v508
        %673 = vmatpush.msra.mxu0 %v504
        %674 = vmatpush.msra.mxu0 %v500
        %675 = vmatpush.msra.mxu0 %v496
        %676 = vmatpush.msra.mxu0 %v492
        %677 = vmatpush.msra.mxu0 %v488
        %678 = vmatpush.msra.mxu0 %v484
        %679 = vmatpush.msra.mxu0 %v480
        %680 = vmatpush.msra.mxu0 %v476
        %681 = vmatpush.msra.mxu0 %v472
        %682 = vmatmul.f32.gmra.mxu0 %v461
        %v683 = vpop.f32.mrf.mxu0
        %v684 = vadd.f32 %v538, %v683
        %685 = vmatmul.f32.gmra.mxu0 %v462
        %v686 = vpop.f32.mrf.mxu0
        %v687 = vadd.f32 %v538, %v686
        %688 = vmatmul.f32.gmra.mxu0 %v463
        %v689 = vpop.f32.mrf.mxu0
        %v690 = vadd.f32 %v538, %v689
        %691 = vmatmul.f32.gmra.mxu0 %v464
        %v692 = vpop.f32.mrf.mxu0
        %v693 = vadd.f32 %v538, %v692
        %694 = vmatmul.f32.gmra.mxu0 %v465
        %v695 = vpop.f32.mrf.mxu0
        %v696 = vadd.f32 %v538, %v695
        %697 = vmatmul.f32.gmra.mxu0 %v466
        %v698 = vpop.f32.mrf.mxu0
        %v699 = vadd.f32 %v538, %v698
        %700 = vmatmul.f32.gmra.mxu0 %v467
        %v701 = vpop.f32.mrf.mxu0
        %v702 = vadd.f32 %v538, %v701
        %703 = vmatmul.f32.gmra.mxu0 %v468
        %v704 = vpop.f32.mrf.mxu0
        %v705 = vadd.f32 %v538, %v704
        %706 = vdwg.mxu0
        %707 = vst [vmem:[#allocation4] sm:$0xff] %v561
        %708 = vst [vmem:[#allocation4 + $0x8] sm:$0xff] %v602
        %709 = vst [vmem:[#allocation4 + $0x10] sm:$0xff] %v643
        %710 = vst [vmem:[#allocation4 + $0x18] sm:$0xff] %v684
        %711 = vst [vmem:[#allocation4 + $0x20] sm:$0xff] %v564
        %712 = vst [vmem:[#allocation4 + $0x28] sm:$0xff] %v605
        %713 = vst [vmem:[#allocation4 + $0x30] sm:$0xff] %v646
        %714 = vst [vmem:[#allocation4 + $0x38] sm:$0xff] %v687
        %715 = vst [vmem:[#allocation4 + $0x40] sm:$0xff] %v567
        %716 = vst [vmem:[#allocation4 + $0x48] sm:$0xff] %v608
        %717 = vst [vmem:[#allocation4 + $0x50] sm:$0xff] %v649
        %718 = vst [vmem:[#allocation4 + $0x58] sm:$0xff] %v690
        %719 = vst [vmem:[#allocation4 + $0x60] sm:$0xff] %v570
        %720 = vst [vmem:[#allocation4 + $0x68] sm:$0xff] %v611
        %721 = vst [vmem:[#allocation4 + $0x70] sm:$0xff] %v652
        %722 = vst [vmem:[#allocation4 + $0x78] sm:$0xff] %v693
        %723 = vst [vmem:[#allocation4 + $0x80] sm:$0xff] %v573
        %724 = vst [vmem:[#allocation4 + $0x88] sm:$0xff] %v614
        %725 = vst [vmem:[#allocation4 + $0x90] sm:$0xff] %v655
        %726 = vst [vmem:[#allocation4 + $0x98] sm:$0xff] %v696
        %727 = vst [vmem:[#allocation4 + $0xa0] sm:$0xff] %v576
        %728 = vst [vmem:[#allocation4 + $0xa8] sm:$0xff] %v617
        %729 = vst [vmem:[#allocation4 + $0xb0] sm:$0xff] %v658
        %730 = vst [vmem:[#allocation4 + $0xb8] sm:$0xff] %v699
        %731 = vst [vmem:[#allocation4 + $0xc0] sm:$0xff] %v579
        %732 = vst [vmem:[#allocation4 + $0xc8] sm:$0xff] %v620
        %733 = vst [vmem:[#allocation4 + $0xd0] sm:$0xff] %v661
        %734 = vst [vmem:[#allocation4 + $0xd8] sm:$0xff] %v702
        %735 = vst [vmem:[#allocation4 + $0xe0] sm:$0xff] %v582
        %736 = vst [vmem:[#allocation4 + $0xe8] sm:$0xff] %v623
        %737 = vst [vmem:[#allocation4 + $0xf0] sm:$0xff] %v664
        %738 = vst [vmem:[#allocation4 + $0xf8] sm:$0xff] %v705
        %v739 = vld [vmem:[#allocation6] sm:$0xff]
        %v740 = vld [vmem:[#allocation6 + $0x8] sm:$0xff]
        %v741 = vld [vmem:[#allocation6 + $0x10] sm:$0xff]
        %v742 = vld [vmem:[#allocation6 + $0x18] sm:$0xff]
        %v743 = vld [vmem:[#allocation6 + $0x20] sm:$0xff]
        %v744 = vld [vmem:[#allocation6 + $0x28] sm:$0xff]
        %v745 = vld [vmem:[#allocation6 + $0x30] sm:$0xff]
        %v746 = vld [vmem:[#allocation6 + $0x38] sm:$0xff]
        %v747 = vld [vmem:[#allocation6 + $0x40] sm:$0xff]
        %v748 = vld [vmem:[#allocation6 + $0x48] sm:$0xff]
        %v749 = vld [vmem:[#allocation6 + $0x50] sm:$0xff]
        %v750 = vld [vmem:[#allocation6 + $0x58] sm:$0xff]
        %v751 = vld [vmem:[#allocation6 + $0x60] sm:$0xff]
        %v752 = vld [vmem:[#allocation6 + $0x68] sm:$0xff]
        %v753 = vld [vmem:[#allocation6 + $0x70] sm:$0xff]
        %v754 = vld [vmem:[#allocation6 + $0x78] sm:$0xff]
        %v755 = vld [vmem:[#allocation6 + $0x80] sm:$0xff]
        %v756 = vld [vmem:[#allocation6 + $0x88] sm:$0xff]
        %v757 = vld [vmem:[#allocation6 + $0x90] sm:$0xff]
        %v758 = vld [vmem:[#allocation6 + $0x98] sm:$0xff]
        %v759 = vld [vmem:[#allocation6 + $0xa0] sm:$0xff]
        %v760 = vld [vmem:[#allocation6 + $0xa8] sm:$0xff]
        %v761 = vld [vmem:[#allocation6 + $0xb0] sm:$0xff]
        %v762 = vld [vmem:[#allocation6 + $0xb8] sm:$0xff]
        %v763 = vld [vmem:[#allocation6 + $0xc0] sm:$0xff]
        %v764 = vld [vmem:[#allocation6 + $0xc8] sm:$0xff]
        %v765 = vld [vmem:[#allocation6 + $0xd0] sm:$0xff]
        %v766 = vld [vmem:[#allocation6 + $0xd8] sm:$0xff]
        %v767 = vld [vmem:[#allocation6 + $0xe0] sm:$0xff]
        %v768 = vld [vmem:[#allocation6 + $0xe8] sm:$0xff]
        %v769 = vld [vmem:[#allocation6 + $0xf0] sm:$0xff]
        %v770 = vld [vmem:[#allocation6 + $0xf8] sm:$0xff]
        %v771 = vld [vmem:[#allocation6 + $0x100] sm:$0xff]
        %v772 = vld [vmem:[#allocation6 + $0x108] sm:$0xff]
        %v773 = vld [vmem:[#allocation6 + $0x110] sm:$0xff]
        %v774 = vld [vmem:[#allocation6 + $0x118] sm:$0xff]
        %v775 = vld [vmem:[#allocation6 + $0x120] sm:$0xff]
        %v776 = vld [vmem:[#allocation6 + $0x128] sm:$0xff]
        %v777 = vld [vmem:[#allocation6 + $0x130] sm:$0xff]
        %v778 = vld [vmem:[#allocation6 + $0x138] sm:$0xff]
        %v779 = vld [vmem:[#allocation6 + $0x140] sm:$0xff]
        %v780 = vld [vmem:[#allocation6 + $0x148] sm:$0xff]
        %v781 = vld [vmem:[#allocation6 + $0x150] sm:$0xff]
        %v782 = vld [vmem:[#allocation6 + $0x158] sm:$0xff]
        %v783 = vld [vmem:[#allocation6 + $0x160] sm:$0xff]
        %v784 = vld [vmem:[#allocation6 + $0x168] sm:$0xff]
        %v785 = vld [vmem:[#allocation6 + $0x170] sm:$0xff]
        %v786 = vld [vmem:[#allocation6 + $0x178] sm:$0xff]
        %v787 = vld [vmem:[#allocation6 + $0x180] sm:$0xff]
        %v788 = vld [vmem:[#allocation6 + $0x188] sm:$0xff]
        %v789 = vld [vmem:[#allocation6 + $0x190] sm:$0xff]
        %v790 = vld [vmem:[#allocation6 + $0x198] sm:$0xff]
        %v791 = vld [vmem:[#allocation6 + $0x1a0] sm:$0xff]
        %v792 = vld [vmem:[#allocation6 + $0x1a8] sm:$0xff]
        %v793 = vld [vmem:[#allocation6 + $0x1b0] sm:$0xff]
        %v794 = vld [vmem:[#allocation6 + $0x1b8] sm:$0xff]
        %v795 = vld [vmem:[#allocation6 + $0x1c0] sm:$0xff]
        %v796 = vld [vmem:[#allocation6 + $0x1c8] sm:$0xff]
        %v797 = vld [vmem:[#allocation6 + $0x1d0] sm:$0xff]
        %v798 = vld [vmem:[#allocation6 + $0x1d8] sm:$0xff]
        %v799 = vld [vmem:[#allocation6 + $0x1e0] sm:$0xff]
        %v800 = vld [vmem:[#allocation6 + $0x1e8] sm:$0xff]
        %v801 = vld [vmem:[#allocation6 + $0x1f0] sm:$0xff]
        %v802 = vld [vmem:[#allocation6 + $0x1f8] sm:$0xff]
        %v803 = vld [vmem:[#allocation7] sm:$0xff]
        %v804 = vld [vmem:[#allocation7 + $0x8] sm:$0xff]
        %v805 = vld [vmem:[#allocation7 + $0x10] sm:$0xff]
        %v806 = vld [vmem:[#allocation7 + $0x18] sm:$0xff]
        %v807 = vld [vmem:[#allocation7 + $0x20] sm:$0xff]
        %v808 = vld [vmem:[#allocation7 + $0x28] sm:$0xff]
        %v809 = vld [vmem:[#allocation7 + $0x30] sm:$0xff]
        %v810 = vld [vmem:[#allocation7 + $0x38] sm:$0xff]
        %v811 = vld [vmem:[#allocation7 + $0x40] sm:$0xff]
        %v812 = vld [vmem:[#allocation7 + $0x48] sm:$0xff]
        %v813 = vld [vmem:[#allocation7 + $0x50] sm:$0xff]
        %v814 = vld [vmem:[#allocation7 + $0x58] sm:$0xff]
        %v815 = vld [vmem:[#allocation7 + $0x60] sm:$0xff]
        %v816 = vld [vmem:[#allocation7 + $0x68] sm:$0xff]
        %v817 = vld [vmem:[#allocation7 + $0x70] sm:$0xff]
        %v818 = vld [vmem:[#allocation7 + $0x78] sm:$0xff]
        %v819 = vld [vmem:[#allocation2] sm:$0xff]
        %v820 = vld [vmem:[#allocation3] sm:$0xff]
        %v821 = vld [vmem:[#allocation4] sm:$0xff]
        %v822 = vld [vmem:[#allocation4 + $0x8] sm:$0xff]
        %v823 = vld [vmem:[#allocation4 + $0x10] sm:$0xff]
        %v824 = vld [vmem:[#allocation4 + $0x18] sm:$0xff]
        %825 = vmatpush.msra.mxu0 %v799
        %826 = vmatpush.msra.mxu0 %v795
        %827 = vmatpush.msra.mxu0 %v791
        %828 = vmatpush.msra.mxu0 %v787
        %829 = vmatpush.msra.mxu0 %v783
        %830 = vmatpush.msra.mxu0 %v779
        %831 = vmatpush.msra.mxu0 %v775
        %832 = vmatpush.msra.mxu0 %v771
        %833 = vmatpush.msra.mxu0 %v767
        %834 = vmatpush.msra.mxu0 %v763
        %835 = vmatpush.msra.mxu0 %v759
        %836 = vmatpush.msra.mxu0 %v755
        %837 = vmatpush.msra.mxu0 %v751
        %838 = vmatpush.msra.mxu0 %v747
        %839 = vmatpush.msra.mxu0 %v743
        %840 = vmatpush.msra.mxu0 %v739
        %841 = vmatmul.f32.gmra.mxu0 %v819
        %v842 = vpop.f32.mrf.mxu0
        %v843 = vadd.f32 0.0, %v842
        %844 = vdwg.mxu0
        %845 = vmatpush.msra.mxu0 %v800
        %846 = vmatpush.msra.mxu0 %v796
        %847 = vmatpush.msra.mxu0 %v792
        %848 = vmatpush.msra.mxu0 %v788
        %849 = vmatpush.msra.mxu0 %v784
        %850 = vmatpush.msra.mxu0 %v780
        %851 = vmatpush.msra.mxu0 %v776
        %852 = vmatpush.msra.mxu0 %v772
        %853 = vmatpush.msra.mxu0 %v768
        %854 = vmatpush.msra.mxu0 %v764
        %855 = vmatpush.msra.mxu0 %v760
        %856 = vmatpush.msra.mxu0 %v756
        %857 = vmatpush.msra.mxu0 %v752
        %858 = vmatpush.msra.mxu0 %v748
        %859 = vmatpush.msra.mxu0 %v744
        %860 = vmatpush.msra.mxu0 %v740
        %861 = vmatmul.f32.gmra.mxu0 %v819
        %v862 = vpop.f32.mrf.mxu0
        %v863 = vadd.f32 0.0, %v862
        %864 = vdwg.mxu0
        %865 = vmatpush.msra.mxu0 %v801
        %866 = vmatpush.msra.mxu0 %v797
        %867 = vmatpush.msra.mxu0 %v793
        %868 = vmatpush.msra.mxu0 %v789
        %869 = vmatpush.msra.mxu0 %v785
        %870 = vmatpush.msra.mxu0 %v781
        %871 = vmatpush.msra.mxu0 %v777
        %872 = vmatpush.msra.mxu0 %v773
        %873 = vmatpush.msra.mxu0 %v769
        %874 = vmatpush.msra.mxu0 %v765
        %875 = vmatpush.msra.mxu0 %v761
        %876 = vmatpush.msra.mxu0 %v757
        %877 = vmatpush.msra.mxu0 %v753
        %878 = vmatpush.msra.mxu0 %v749
        %879 = vmatpush.msra.mxu0 %v745
        %880 = vmatpush.msra.mxu0 %v741
        %881 = vmatmul.f32.gmra.mxu0 %v819
        %v882 = vpop.f32.mrf.mxu0
        %v883 = vadd.f32 0.0, %v882
        %884 = vdwg.mxu0
        %885 = vmatpush.msra.mxu0 %v802
        %886 = vmatpush.msra.mxu0 %v798
        %887 = vmatpush.msra.mxu0 %v794
        %888 = vmatpush.msra.mxu0 %v790
        %889 = vmatpush.msra.mxu0 %v786
        %890 = vmatpush.msra.mxu0 %v782
        %891 = vmatpush.msra.mxu0 %v778
        %892 = vmatpush.msra.mxu0 %v774
        %893 = vmatpush.msra.mxu0 %v770
        %894 = vmatpush.msra.mxu0 %v766
        %895 = vmatpush.msra.mxu0 %v762
        %896 = vmatpush.msra.mxu0 %v758
        %897 = vmatpush.msra.mxu0 %v754
        %898 = vmatpush.msra.mxu0 %v750
        %899 = vmatpush.msra.mxu0 %v746
        %900 = vmatpush.msra.mxu0 %v742
        %901 = vmatmul.f32.gmra.mxu0 %v819
        %v902 = vpop.f32.mrf.mxu0
        %v903 = vadd.f32 0.0, %v902
        %904 = vdwg.mxu0
        %v905 = vadd.f32 %v821, %v843
        %v906 = vadd.f32 %v822, %v863
        %v907 = vadd.f32 %v823, %v883
        %v908 = vadd.f32 %v824, %v903
        %v909 = vxor.u32 %v905, 2147483648
        %v910 = vmul.f32 %v909, 1.442695
        %v911 = vpow.pop %v910
        %v912 = vadd.f32 %v911, 1.0
        %v913 = vrcp.pop %v912
        %v914 = vmul.f32 %v912, %v913
        %v915 = vsub.f32 1.0, %v914
        %v916 = vmul.f32 %v913, %v915
        %v917 = vadd.f32 %v913, %v916
        %vm918 = vweird.f32 %v912
        %vm919 = vweird.f32 %v913
        %vm920 = vmor %vm918, %vm919
        %v921 = vsel %vm920, %v913, %v917
        %v922 = vand.u32 2147483647, %v912
        %vm923 = vcmp.eq.f32.partialorder %v922, 8.507059e+37
        %v924 = vand.u32 %v912, 2147483648
        %v925 = vor.u32 1.1754944e-38, %v924
        %v926 = vsel %vm923, %v925, %v921
        %v927 = vmul.f32 1.0, %v926
        %v928 = vxor.u32 %v906, 2147483648
        %v929 = vmul.f32 %v928, 1.442695
        %v930 = vpow.pop %v929
        %v931 = vadd.f32 %v930, 1.0
        %v932 = vrcp.pop %v931
        %v933 = vmul.f32 %v931, %v932
        %v934 = vsub.f32 1.0, %v933
        %v935 = vmul.f32 %v932, %v934
        %v936 = vadd.f32 %v932, %v935
        %vm937 = vweird.f32 %v931
        %vm938 = vweird.f32 %v932
        %vm939 = vmor %vm937, %vm938
        %v940 = vsel %vm939, %v932, %v936
        %v941 = vand.u32 2147483647, %v931
        %vm942 = vcmp.eq.f32.partialorder %v941, 8.507059e+37
        %v943 = vand.u32 %v931, 2147483648
        %v944 = vor.u32 1.1754944e-38, %v943
        %v945 = vsel %vm942, %v944, %v940
        %v946 = vmul.f32 1.0, %v945
        %v947 = vtanh.pop %v907
        %v948 = vxor.u32 %v908, 2147483648
        %v949 = vmul.f32 %v948, 1.442695
        %v950 = vpow.pop %v949
        %v951 = vadd.f32 %v950, 1.0
        %v952 = vrcp.pop %v951
        %v953 = vmul.f32 %v951, %v952
        %v954 = vsub.f32 1.0, %v953
        %v955 = vmul.f32 %v952, %v954
        %v956 = vadd.f32 %v952, %v955
        %vm957 = vweird.f32 %v951
        %vm958 = vweird.f32 %v952
        %vm959 = vmor %vm957, %vm958
        %v960 = vsel %vm959, %v952, %v956
        %v961 = vand.u32 2147483647, %v951
        %vm962 = vcmp.eq.f32.partialorder %v961, 8.507059e+37
        %v963 = vand.u32 %v951, 2147483648
        %v964 = vor.u32 1.1754944e-38, %v963
        %v965 = vsel %vm962, %v964, %v960
        %v966 = vmul.f32 1.0, %v965
        %v967 = vmul.f32 %v946, %v820
        %v968 = vmul.f32 %v927, %v947
        %v969 = vadd.f32 %v967, %v968
        %v970 = vtanh.pop %v969
        %v971 = vmul.f32 %v966, %v970
        %972 = vmatpush.msra.mxu0 %v818
        %973 = vmatpush.msra.mxu0 %v817
        %974 = vmatpush.msra.mxu0 %v816
        %975 = vmatpush.msra.mxu0 %v815
        %976 = vmatpush.msra.mxu0 %v814
        %977 = vmatpush.msra.mxu0 %v813
        %978 = vmatpush.msra.mxu0 %v812
        %979 = vmatpush.msra.mxu0 %v811
        %980 = vmatpush.msra.mxu0 %v810
        %981 = vmatpush.msra.mxu0 %v809
        %982 = vmatpush.msra.mxu0 %v808
        %983 = vmatpush.msra.mxu0 %v807
        %984 = vmatpush.msra.mxu0 %v806
        %985 = vmatpush.msra.mxu0 %v805
        %986 = vmatpush.msra.mxu0 %v804
        %987 = vmatpush.msra.mxu0 %v803
        %988 = vmatmul.f32.gmra.mxu0 %v971
        %v989 = vpop.f32.mrf.mxu0
        %v990 = vadd.f32 0.0, %v989
        %991 = vdwg.mxu0
        %992 = vst [vmem:[%s386] sm:$0xff] %v990
        %s993 = smul.u32 %s39, 8
        %p994 = scmp.eq.s32.totalorder %s993, 11
        // Predicated region
        $region69: #{tpu_custom_call.1} parent=35 // pred_check
          %p995 = pneg %p994
        $region70: #{tpu_custom_call.1} parent=35 // pred_check_branch
          %997 = sbr.rel (%p995) target = $region72
        $region71: #{tpu_custom_call.1} parent=35 // pred_region
          %998 = vst [vmem:[%s393] sm:$0xff] %v990
          %999 = vst [vmem:[%s400] sm:$0xff] %v969
        $region72: #{tpu_custom_call.1} parent=35 // pred_fallthru
          _
        %s1000 = scalar_lea.vmem [#allocation4], 32
        %v1001 = vld [vmem:[%s1000] sm:$0xff]
        %v1002 = vld [vmem:[%s1000 + $0x8] sm:$0xff]
        %v1003 = vld [vmem:[%s1000 + $0x10] sm:$0xff]
        %v1004 = vld [vmem:[%s1000 + $0x18] sm:$0xff]
        %1005 = vmatpush.msra.mxu0 %v799
        %1006 = vmatpush.msra.mxu0 %v795
        %1007 = vmatpush.msra.mxu0 %v791
        %1008 = vmatpush.msra.mxu0 %v787
        %1009 = vmatpush.msra.mxu0 %v783
        %1010 = vmatpush.msra.mxu0 %v779
        %1011 = vmatpush.msra.mxu0 %v775
        %1012 = vmatpush.msra.mxu0 %v771
        %1013 = vmatpush.msra.mxu0 %v767
        %1014 = vmatpush.msra.mxu0 %v763
        %1015 = vmatpush.msra.mxu0 %v759
        %1016 = vmatpush.msra.mxu0 %v755
        %1017 = vmatpush.msra.mxu0 %v751
        %1018 = vmatpush.msra.mxu0 %v747
        %1019 = vmatpush.msra.mxu0 %v743
        %1020 = vmatpush.msra.mxu0 %v739
        %1021 = vmatmul.f32.gmra.mxu0 %v990
        %v1022 = vpop.f32.mrf.mxu0
        %v1023 = vadd.f32 0.0, %v1022
        %1024 = vdwg.mxu0
        %1025 = vmatpush.msra.mxu0 %v800
        %1026 = vmatpush.msra.mxu0 %v796
        %1027 = vmatpush.msra.mxu0 %v792
        %1028 = vmatpush.msra.mxu0 %v788
        %1029 = vmatpush.msra.mxu0 %v784
        %1030 = vmatpush.msra.mxu0 %v780
        %1031 = vmatpush.msra.mxu0 %v776
        %1032 = vmatpush.msra.mxu0 %v772
        %1033 = vmatpush.msra.mxu0 %v768
        %1034 = vmatpush.msra.mxu0 %v764
        %1035 = vmatpush.msra.mxu0 %v760
        %1036 = vmatpush.msra.mxu0 %v756
        %1037 = vmatpush.msra.mxu0 %v752
        %1038 = vmatpush.msra.mxu0 %v748
        %1039 = vmatpush.msra.mxu0 %v744
        %1040 = vmatpush.msra.mxu0 %v740
        %1041 = vmatmul.f32.gmra.mxu0 %v990
        %v1042 = vpop.f32.mrf.mxu0
        %v1043 = vadd.f32 0.0, %v1042
        %1044 = vdwg.mxu0
        %1045 = vmatpush.msra.mxu0 %v801
        %1046 = vmatpush.msra.mxu0 %v797
        %1047 = vmatpush.msra.mxu0 %v793
        %1048 = vmatpush.msra.mxu0 %v789
        %1049 = vmatpush.msra.mxu0 %v785
        %1050 = vmatpush.msra.mxu0 %v781
        %1051 = vmatpush.msra.mxu0 %v777
        %1052 = vmatpush.msra.mxu0 %v773
        %1053 = vmatpush.msra.mxu0 %v769
        %1054 = vmatpush.msra.mxu0 %v765
        %1055 = vmatpush.msra.mxu0 %v761
        %1056 = vmatpush.msra.mxu0 %v757
        %1057 = vmatpush.msra.mxu0 %v753
        %1058 = vmatpush.msra.mxu0 %v749
        %1059 = vmatpush.msra.mxu0 %v745
        %1060 = vmatpush.msra.mxu0 %v741
        %1061 = vmatmul.f32.gmra.mxu0 %v990
        %v1062 = vpop.f32.mrf.mxu0
        %v1063 = vadd.f32 0.0, %v1062
        %1064 = vdwg.mxu0
        %1065 = vmatpush.msra.mxu0 %v802
        %1066 = vmatpush.msra.mxu0 %v798
        %1067 = vmatpush.msra.mxu0 %v794
        %1068 = vmatpush.msra.mxu0 %v790
        %1069 = vmatpush.msra.mxu0 %v786
        %1070 = vmatpush.msra.mxu0 %v782
        %1071 = vmatpush.msra.mxu0 %v778
        %1072 = vmatpush.msra.mxu0 %v774
        %1073 = vmatpush.msra.mxu0 %v770
        %1074 = vmatpush.msra.mxu0 %v766
        %1075 = vmatpush.msra.mxu0 %v762
        %1076 = vmatpush.msra.mxu0 %v758
        %1077 = vmatpush.msra.mxu0 %v754
        %1078 = vmatpush.msra.mxu0 %v750
        %1079 = vmatpush.msra.mxu0 %v746
        %1080 = vmatpush.msra.mxu0 %v742
        %1081 = vmatmul.f32.gmra.mxu0 %v990
        %v1082 = vpop.f32.mrf.mxu0
        %v1083 = vadd.f32 0.0, %v1082
        %1084 = vdwg.mxu0
        %v1085 = vadd.f32 %v1001, %v1023
        %v1086 = vadd.f32 %v1002, %v1043
        %v1087 = vadd.f32 %v1003, %v1063
        %v1088 = vadd.f32 %v1004, %v1083
        %v1089 = vxor.u32 %v1085, 2147483648
        %v1090 = vmul.f32 %v1089, 1.442695
        %v1091 = vpow.pop %v1090
        %v1092 = vadd.f32 %v1091, 1.0
        %v1093 = vrcp.pop %v1092
        %v1094 = vmul.f32 %v1092, %v1093
        %v1095 = vsub.f32 1.0, %v1094
        %v1096 = vmul.f32 %v1093, %v1095
        %v1097 = vadd.f32 %v1093, %v1096
        %vm1098 = vweird.f32 %v1092
        %vm1099 = vweird.f32 %v1093
        %vm1100 = vmor %vm1098, %vm1099
        %v1101 = vsel %vm1100, %v1093, %v1097
        %v1102 = vand.u32 2147483647, %v1092
        %vm1103 = vcmp.eq.f32.partialorder %v1102, 8.507059e+37
        %v1104 = vand.u32 %v1092, 2147483648
        %v1105 = vor.u32 1.1754944e-38, %v1104
        %v1106 = vsel %vm1103, %v1105, %v1101
        %v1107 = vmul.f32 1.0, %v1106
        %v1108 = vxor.u32 %v1086, 2147483648
        %v1109 = vmul.f32 %v1108, 1.442695
        %v1110 = vpow.pop %v1109
        %v1111 = vadd.f32 %v1110, 1.0
        %v1112 = vrcp.pop %v1111
        %v1113 = vmul.f32 %v1111, %v1112
        %v1114 = vsub.f32 1.0, %v1113
        %v1115 = vmul.f32 %v1112, %v1114
        %v1116 = vadd.f32 %v1112, %v1115
        %vm1117 = vweird.f32 %v1111
        %vm1118 = vweird.f32 %v1112
        %vm1119 = vmor %vm1117, %vm1118
        %v1120 = vsel %vm1119, %v1112, %v1116
        %v1121 = vand.u32 2147483647, %v1111
        %vm1122 = vcmp.eq.f32.partialorder %v1121, 8.507059e+37
        %v1123 = vand.u32 %v1111, 2147483648
        %v1124 = vor.u32 1.1754944e-38, %v1123
        %v1125 = vsel %vm1122, %v1124, %v1120
        %v1126 = vmul.f32 1.0, %v1125
        %v1127 = vtanh.pop %v1087
        %v1128 = vxor.u32 %v1088, 2147483648
        %v1129 = vmul.f32 %v1128, 1.442695
        %v1130 = vpow.pop %v1129
        %v1131 = vadd.f32 %v1130, 1.0
        %v1132 = vrcp.pop %v1131
        %v1133 = vmul.f32 %v1131, %v1132
        %v1134 = vsub.f32 1.0, %v1133
        %v1135 = vmul.f32 %v1132, %v1134
        %v1136 = vadd.f32 %v1132, %v1135
        %vm1137 = vweird.f32 %v1131
        %vm1138 = vweird.f32 %v1132
        %vm1139 = vmor %vm1137, %vm1138
        %v1140 = vsel %vm1139, %v1132, %v1136
        %v1141 = vand.u32 2147483647, %v1131
        %vm1142 = vcmp.eq.f32.partialorder %v1141, 8.507059e+37
        %v1143 = vand.u32 %v1131, 2147483648
        %v1144 = vor.u32 1.1754944e-38, %v1143
        %v1145 = vsel %vm1142, %v1144, %v1140
        %v1146 = vmul.f32 1.0, %v1145
        %v1147 = vmul.f32 %v1126, %v969
        %v1148 = vmul.f32 %v1107, %v1127
        %v1149 = vadd.f32 %v1147, %v1148
        %v1150 = vtanh.pop %v1149
        %v1151 = vmul.f32 %v1146, %v1150
        %1152 = vmatpush.msra.mxu0 %v818
        %1153 = vmatpush.msra.mxu0 %v817
        %1154 = vmatpush.msra.mxu0 %v816
        %1155 = vmatpush.msra.mxu0 %v815
        %1156 = vmatpush.msra.mxu0 %v814
        %1157 = vmatpush.msra.mxu0 %v813
        %1158 = vmatpush.msra.mxu0 %v812
        %1159 = vmatpush.msra.mxu0 %v811
        %1160 = vmatpush.msra.mxu0 %v810
        %1161 = vmatpush.msra.mxu0 %v809
        %1162 = vmatpush.msra.mxu0 %v808
        %1163 = vmatpush.msra.mxu0 %v807
        %1164 = vmatpush.msra.mxu0 %v806
        %1165 = vmatpush.msra.mxu0 %v805
        %1166 = vmatpush.msra.mxu0 %v804
        %1167 = vmatpush.msra.mxu0 %v803
        %1168 = vmatmul.f32.gmra.mxu0 %v1151
        %v1169 = vpop.f32.mrf.mxu0
        %v1170 = vadd.f32 0.0, %v1169
        %1171 = vdwg.mxu0
        %s1172 = scalar_lea.vmem %s386, 8 [#allocation17]
        %1173 = vst [vmem:[%s1172] sm:$0xff] %v1170
        %s1174 = sadd.s32 %s993, 1
        %p1175 = scmp.eq.s32.totalorder %s1174, 11
        // Predicated region
        $region73: #{tpu_custom_call.1} parent=35 // pred_check
          %p1176 = pneg %p1175
        $region74: #{tpu_custom_call.1} parent=35 // pred_check_branch
          %1178 = sbr.rel (%p1176) target = $region76
        $region75: #{tpu_custom_call.1} parent=35 // pred_region
          %1179 = vst [vmem:[%s393] sm:$0xff] %v1170
          %1180 = vst [vmem:[%s400] sm:$0xff] %v1149
        $region76: #{tpu_custom_call.1} parent=35 // pred_fallthru
          _
        %s1181 = scalar_lea.vmem [#allocation4], 64
        %v1182 = vld [vmem:[%s1181] sm:$0xff]
        %v1183 = vld [vmem:[%s1181 + $0x8] sm:$0xff]
        %v1184 = vld [vmem:[%s1181 + $0x10] sm:$0xff]
        %v1185 = vld [vmem:[%s1181 + $0x18] sm:$0xff]
        %1186 = vmatpush.msra.mxu0 %v799
        %1187 = vmatpush.msra.mxu0 %v795
        %1188 = vmatpush.msra.mxu0 %v791
        %1189 = vmatpush.msra.mxu0 %v787
        %1190 = vmatpush.msra.mxu0 %v783
        %1191 = vmatpush.msra.mxu0 %v779
        %1192 = vmatpush.msra.mxu0 %v775
        %1193 = vmatpush.msra.mxu0 %v771
        %1194 = vmatpush.msra.mxu0 %v767
        %1195 = vmatpush.msra.mxu0 %v763
        %1196 = vmatpush.msra.mxu0 %v759
        %1197 = vmatpush.msra.mxu0 %v755
        %1198 = vmatpush.msra.mxu0 %v751
        %1199 = vmatpush.msra.mxu0 %v747
        %1200 = vmatpush.msra.mxu0 %v743
        %1201 = vmatpush.msra.mxu0 %v739
        %1202 = vmatmul.f32.gmra.mxu0 %v1170
        %v1203 = vpop.f32.mrf.mxu0
        %v1204 = vadd.f32 0.0, %v1203
        %1205 = vdwg.mxu0
        %1206 = vmatpush.msra.mxu0 %v800
        %1207 = vmatpush.msra.mxu0 %v796
        %1208 = vmatpush.msra.mxu0 %v792
        %1209 = vmatpush.msra.mxu0 %v788
        %1210 = vmatpush.msra.mxu0 %v784
        %1211 = vmatpush.msra.mxu0 %v780
        %1212 = vmatpush.msra.mxu0 %v776
        %1213 = vmatpush.msra.mxu0 %v772
        %1214 = vmatpush.msra.mxu0 %v768
        %1215 = vmatpush.msra.mxu0 %v764
        %1216 = vmatpush.msra.mxu0 %v760
        %1217 = vmatpush.msra.mxu0 %v756
        %1218 = vmatpush.msra.mxu0 %v752
        %1219 = vmatpush.msra.mxu0 %v748
        %1220 = vmatpush.msra.mxu0 %v744
        %1221 = vmatpush.msra.mxu0 %v740
        %1222 = vmatmul.f32.gmra.mxu0 %v1170
        %v1223 = vpop.f32.mrf.mxu0
        %v1224 = vadd.f32 0.0, %v1223
        %1225 = vdwg.mxu0
        %1226 = vmatpush.msra.mxu0 %v801
        %1227 = vmatpush.msra.mxu0 %v797
        %1228 = vmatpush.msra.mxu0 %v793
        %1229 = vmatpush.msra.mxu0 %v789
        %1230 = vmatpush.msra.mxu0 %v785
        %1231 = vmatpush.msra.mxu0 %v781
        %1232 = vmatpush.msra.mxu0 %v777
        %1233 = vmatpush.msra.mxu0 %v773
        %1234 = vmatpush.msra.mxu0 %v769
        %1235 = vmatpush.msra.mxu0 %v765
        %1236 = vmatpush.msra.mxu0 %v761
        %1237 = vmatpush.msra.mxu0 %v757
        %1238 = vmatpush.msra.mxu0 %v753
        %1239 = vmatpush.msra.mxu0 %v749
        %1240 = vmatpush.msra.mxu0 %v745
        %1241 = vmatpush.msra.mxu0 %v741
        %1242 = vmatmul.f32.gmra.mxu0 %v1170
        %v1243 = vpop.f32.mrf.mxu0
        %v1244 = vadd.f32 0.0, %v1243
        %1245 = vdwg.mxu0
        %1246 = vmatpush.msra.mxu0 %v802
        %1247 = vmatpush.msra.mxu0 %v798
        %1248 = vmatpush.msra.mxu0 %v794
        %1249 = vmatpush.msra.mxu0 %v790
        %1250 = vmatpush.msra.mxu0 %v786
        %1251 = vmatpush.msra.mxu0 %v782
        %1252 = vmatpush.msra.mxu0 %v778
        %1253 = vmatpush.msra.mxu0 %v774
        %1254 = vmatpush.msra.mxu0 %v770
        %1255 = vmatpush.msra.mxu0 %v766
        %1256 = vmatpush.msra.mxu0 %v762
        %1257 = vmatpush.msra.mxu0 %v758
        %1258 = vmatpush.msra.mxu0 %v754
        %1259 = vmatpush.msra.mxu0 %v750
        %1260 = vmatpush.msra.mxu0 %v746
        %1261 = vmatpush.msra.mxu0 %v742
        %1262 = vmatmul.f32.gmra.mxu0 %v1170
        %v1263 = vpop.f32.mrf.mxu0
        %v1264 = vadd.f32 0.0, %v1263
        %1265 = vdwg.mxu0
        %v1266 = vadd.f32 %v1182, %v1204
        %v1267 = vadd.f32 %v1183, %v1224
        %v1268 = vadd.f32 %v1184, %v1244
        %v1269 = vadd.f32 %v1185, %v1264
        %v1270 = vxor.u32 %v1266, 2147483648
        %v1271 = vmul.f32 %v1270, 1.442695
        %v1272 = vpow.pop %v1271
        %v1273 = vadd.f32 %v1272, 1.0
        %v1274 = vrcp.pop %v1273
        %v1275 = vmul.f32 %v1273, %v1274
        %v1276 = vsub.f32 1.0, %v1275
        %v1277 = vmul.f32 %v1274, %v1276
        %v1278 = vadd.f32 %v1274, %v1277
        %vm1279 = vweird.f32 %v1273
        %vm1280 = vweird.f32 %v1274
        %vm1281 = vmor %vm1279, %vm1280
        %v1282 = vsel %vm1281, %v1274, %v1278
        %v1283 = vand.u32 2147483647, %v1273
        %vm1284 = vcmp.eq.f32.partialorder %v1283, 8.507059e+37
        %v1285 = vand.u32 %v1273, 2147483648
        %v1286 = vor.u32 1.1754944e-38, %v1285
        %v1287 = vsel %vm1284, %v1286, %v1282
        %v1288 = vmul.f32 1.0, %v1287
        %v1289 = vxor.u32 %v1267, 2147483648
        %v1290 = vmul.f32 %v1289, 1.442695
        %v1291 = vpow.pop %v1290
        %v1292 = vadd.f32 %v1291, 1.0
        %v1293 = vrcp.pop %v1292
        %v1294 = vmul.f32 %v1292, %v1293
        %v1295 = vsub.f32 1.0, %v1294
        %v1296 = vmul.f32 %v1293, %v1295
        %v1297 = vadd.f32 %v1293, %v1296
        %vm1298 = vweird.f32 %v1292
        %vm1299 = vweird.f32 %v1293
        %vm1300 = vmor %vm1298, %vm1299
        %v1301 = vsel %vm1300, %v1293, %v1297
        %v1302 = vand.u32 2147483647, %v1292
        %vm1303 = vcmp.eq.f32.partialorder %v1302, 8.507059e+37
        %v1304 = vand.u32 %v1292, 2147483648
        %v1305 = vor.u32 1.1754944e-38, %v1304
        %v1306 = vsel %vm1303, %v1305, %v1301
        %v1307 = vmul.f32 1.0, %v1306
        %v1308 = vtanh.pop %v1268
        %v1309 = vxor.u32 %v1269, 2147483648
        %v1310 = vmul.f32 %v1309, 1.442695
        %v1311 = vpow.pop %v1310
        %v1312 = vadd.f32 %v1311, 1.0
        %v1313 = vrcp.pop %v1312
        %v1314 = vmul.f32 %v1312, %v1313
        %v1315 = vsub.f32 1.0, %v1314
        %v1316 = vmul.f32 %v1313, %v1315
        %v1317 = vadd.f32 %v1313, %v1316
        %vm1318 = vweird.f32 %v1312
        %vm1319 = vweird.f32 %v1313
        %vm1320 = vmor %vm1318, %vm1319
        %v1321 = vsel %vm1320, %v1313, %v1317
        %v1322 = vand.u32 2147483647, %v1312
        %vm1323 = vcmp.eq.f32.partialorder %v1322, 8.507059e+37
        %v1324 = vand.u32 %v1312, 2147483648
        %v1325 = vor.u32 1.1754944e-38, %v1324
        %v1326 = vsel %vm1323, %v1325, %v1321
        %v1327 = vmul.f32 1.0, %v1326
        %v1328 = vmul.f32 %v1307, %v1149
        %v1329 = vmul.f32 %v1288, %v1308
        %v1330 = vadd.f32 %v1328, %v1329
        %v1331 = vtanh.pop %v1330
        %v1332 = vmul.f32 %v1327, %v1331
        %1333 = vmatpush.msra.mxu0 %v818
        %1334 = vmatpush.msra.mxu0 %v817
        %1335 = vmatpush.msra.mxu0 %v816
        %1336 = vmatpush.msra.mxu0 %v815
        %1337 = vmatpush.msra.mxu0 %v814
        %1338 = vmatpush.msra.mxu0 %v813
        %1339 = vmatpush.msra.mxu0 %v812
        %1340 = vmatpush.msra.mxu0 %v811
        %1341 = vmatpush.msra.mxu0 %v810
        %1342 = vmatpush.msra.mxu0 %v809
        %1343 = vmatpush.msra.mxu0 %v808
        %1344 = vmatpush.msra.mxu0 %v807
        %1345 = vmatpush.msra.mxu0 %v806
        %1346 = vmatpush.msra.mxu0 %v805
        %1347 = vmatpush.msra.mxu0 %v804
        %1348 = vmatpush.msra.mxu0 %v803
        %1349 = vmatmul.f32.gmra.mxu0 %v1332
        %v1350 = vpop.f32.mrf.mxu0
        %v1351 = vadd.f32 0.0, %v1350
        %1352 = vdwg.mxu0
        %s1353 = scalar_lea.vmem %s386, 16 [#allocation17]
        %1354 = vst [vmem:[%s1353] sm:$0xff] %v1351
        %s1355 = sadd.s32 %s993, 2
        %p1356 = scmp.eq.s32.totalorder %s1355, 11
        // Predicated region
        $region77: #{tpu_custom_call.1} parent=35 // pred_check
          %p1357 = pneg %p1356
        $region78: #{tpu_custom_call.1} parent=35 // pred_check_branch
          %1359 = sbr.rel (%p1357) target = $region80
        $region79: #{tpu_custom_call.1} parent=35 // pred_region
          %1360 = vst [vmem:[%s393] sm:$0xff] %v1351
          %1361 = vst [vmem:[%s400] sm:$0xff] %v1330
        $region80: #{tpu_custom_call.1} parent=35 // pred_fallthru
          _
        %s1362 = scalar_lea.vmem [#allocation4], 96
        %v1363 = vld [vmem:[%s1362] sm:$0xff]
        %v1364 = vld [vmem:[%s1362 + $0x8] sm:$0xff]
        %v1365 = vld [vmem:[%s1362 + $0x10] sm:$0xff]
        %v1366 = vld [vmem:[%s1362 + $0x18] sm:$0xff]
        %1367 = vmatpush.msra.mxu0 %v799
        %1368 = vmatpush.msra.mxu0 %v795
        %1369 = vmatpush.msra.mxu0 %v791
        %1370 = vmatpush.msra.mxu0 %v787
        %1371 = vmatpush.msra.mxu0 %v783
        %1372 = vmatpush.msra.mxu0 %v779
        %1373 = vmatpush.msra.mxu0 %v775
        %1374 = vmatpush.msra.mxu0 %v771
        %1375 = vmatpush.msra.mxu0 %v767
        %1376 = vmatpush.msra.mxu0 %v763
        %1377 = vmatpush.msra.mxu0 %v759
        %1378 = vmatpush.msra.mxu0 %v755
        %1379 = vmatpush.msra.mxu0 %v751
        %1380 = vmatpush.msra.mxu0 %v747
        %1381 = vmatpush.msra.mxu0 %v743
        %1382 = vmatpush.msra.mxu0 %v739
        %1383 = vmatmul.f32.gmra.mxu0 %v1351
        %v1384 = vpop.f32.mrf.mxu0
        %v1385 = vadd.f32 0.0, %v1384
        %1386 = vdwg.mxu0
        %1387 = vmatpush.msra.mxu0 %v800
        %1388 = vmatpush.msra.mxu0 %v796
        %1389 = vmatpush.msra.mxu0 %v792
        %1390 = vmatpush.msra.mxu0 %v788
        %1391 = vmatpush.msra.mxu0 %v784
        %1392 = vmatpush.msra.mxu0 %v780
        %1393 = vmatpush.msra.mxu0 %v776
        %1394 = vmatpush.msra.mxu0 %v772
        %1395 = vmatpush.msra.mxu0 %v768
        %1396 = vmatpush.msra.mxu0 %v764
        %1397 = vmatpush.msra.mxu0 %v760
        %1398 = vmatpush.msra.mxu0 %v756
        %1399 = vmatpush.msra.mxu0 %v752
        %1400 = vmatpush.msra.mxu0 %v748
        %1401 = vmatpush.msra.mxu0 %v744
        %1402 = vmatpush.msra.mxu0 %v740
        %1403 = vmatmul.f32.gmra.mxu0 %v1351
        %v1404 = vpop.f32.mrf.mxu0
        %v1405 = vadd.f32 0.0, %v1404
        %1406 = vdwg.mxu0
        %1407 = vmatpush.msra.mxu0 %v801
        %1408 = vmatpush.msra.mxu0 %v797
        %1409 = vmatpush.msra.mxu0 %v793
        %1410 = vmatpush.msra.mxu0 %v789
        %1411 = vmatpush.msra.mxu0 %v785
        %1412 = vmatpush.msra.mxu0 %v781
        %1413 = vmatpush.msra.mxu0 %v777
        %1414 = vmatpush.msra.mxu0 %v773
        %1415 = vmatpush.msra.mxu0 %v769
        %1416 = vmatpush.msra.mxu0 %v765
        %1417 = vmatpush.msra.mxu0 %v761
        %1418 = vmatpush.msra.mxu0 %v757
        %1419 = vmatpush.msra.mxu0 %v753
        %1420 = vmatpush.msra.mxu0 %v749
        %1421 = vmatpush.msra.mxu0 %v745
        %1422 = vmatpush.msra.mxu0 %v741
        %1423 = vmatmul.f32.gmra.mxu0 %v1351
        %v1424 = vpop.f32.mrf.mxu0
        %v1425 = vadd.f32 0.0, %v1424
        %1426 = vdwg.mxu0
        %1427 = vmatpush.msra.mxu0 %v802
        %1428 = vmatpush.msra.mxu0 %v798
        %1429 = vmatpush.msra.mxu0 %v794
        %1430 = vmatpush.msra.mxu0 %v790
        %1431 = vmatpush.msra.mxu0 %v786
        %1432 = vmatpush.msra.mxu0 %v782
        %1433 = vmatpush.msra.mxu0 %v778
        %1434 = vmatpush.msra.mxu0 %v774
        %1435 = vmatpush.msra.mxu0 %v770
        %1436 = vmatpush.msra.mxu0 %v766
        %1437 = vmatpush.msra.mxu0 %v762
        %1438 = vmatpush.msra.mxu0 %v758
        %1439 = vmatpush.msra.mxu0 %v754
        %1440 = vmatpush.msra.mxu0 %v750
        %1441 = vmatpush.msra.mxu0 %v746
        %1442 = vmatpush.msra.mxu0 %v742
        %1443 = vmatmul.f32.gmra.mxu0 %v1351
        %v1444 = vpop.f32.mrf.mxu0
        %v1445 = vadd.f32 0.0, %v1444
        %1446 = vdwg.mxu0
        %v1447 = vadd.f32 %v1363, %v1385
        %v1448 = vadd.f32 %v1364, %v1405
        %v1449 = vadd.f32 %v1365, %v1425
        %v1450 = vadd.f32 %v1366, %v1445
        %v1451 = vxor.u32 %v1447, 2147483648
        %v1452 = vmul.f32 %v1451, 1.442695
        %v1453 = vpow.pop %v1452
        %v1454 = vadd.f32 %v1453, 1.0
        %v1455 = vrcp.pop %v1454
        %v1456 = vmul.f32 %v1454, %v1455
        %v1457 = vsub.f32 1.0, %v1456
        %v1458 = vmul.f32 %v1455, %v1457
        %v1459 = vadd.f32 %v1455, %v1458
        %vm1460 = vweird.f32 %v1454
        %vm1461 = vweird.f32 %v1455
        %vm1462 = vmor %vm1460, %vm1461
        %v1463 = vsel %vm1462, %v1455, %v1459
        %v1464 = vand.u32 2147483647, %v1454
        %vm1465 = vcmp.eq.f32.partialorder %v1464, 8.507059e+37
        %v1466 = vand.u32 %v1454, 2147483648
        %v1467 = vor.u32 1.1754944e-38, %v1466
        %v1468 = vsel %vm1465, %v1467, %v1463
        %v1469 = vmul.f32 1.0, %v1468
        %v1470 = vxor.u32 %v1448, 2147483648
        %v1471 = vmul.f32 %v1470, 1.442695
        %v1472 = vpow.pop %v1471
        %v1473 = vadd.f32 %v1472, 1.0
        %v1474 = vrcp.pop %v1473
        %v1475 = vmul.f32 %v1473, %v1474
        %v1476 = vsub.f32 1.0, %v1475
        %v1477 = vmul.f32 %v1474, %v1476
        %v1478 = vadd.f32 %v1474, %v1477
        %vm1479 = vweird.f32 %v1473
        %vm1480 = vweird.f32 %v1474
        %vm1481 = vmor %vm1479, %vm1480
        %v1482 = vsel %vm1481, %v1474, %v1478
        %v1483 = vand.u32 2147483647, %v1473
        %vm1484 = vcmp.eq.f32.partialorder %v1483, 8.507059e+37
        %v1485 = vand.u32 %v1473, 2147483648
        %v1486 = vor.u32 1.1754944e-38, %v1485
        %v1487 = vsel %vm1484, %v1486, %v1482
        %v1488 = vmul.f32 1.0, %v1487
        %v1489 = vtanh.pop %v1449
        %v1490 = vxor.u32 %v1450, 2147483648
        %v1491 = vmul.f32 %v1490, 1.442695
        %v1492 = vpow.pop %v1491
        %v1493 = vadd.f32 %v1492, 1.0
        %v1494 = vrcp.pop %v1493
        %v1495 = vmul.f32 %v1493, %v1494
        %v1496 = vsub.f32 1.0, %v1495
        %v1497 = vmul.f32 %v1494, %v1496
        %v1498 = vadd.f32 %v1494, %v1497
        %vm1499 = vweird.f32 %v1493
        %vm1500 = vweird.f32 %v1494
        %vm1501 = vmor %vm1499, %vm1500
        %v1502 = vsel %vm1501, %v1494, %v1498
        %v1503 = vand.u32 2147483647, %v1493
        %vm1504 = vcmp.eq.f32.partialorder %v1503, 8.507059e+37
        %v1505 = vand.u32 %v1493, 2147483648
        %v1506 = vor.u32 1.1754944e-38, %v1505
        %v1507 = vsel %vm1504, %v1506, %v1502
        %v1508 = vmul.f32 1.0, %v1507
        %v1509 = vmul.f32 %v1488, %v1330
        %v1510 = vmul.f32 %v1469, %v1489
        %v1511 = vadd.f32 %v1509, %v1510
        %v1512 = vtanh.pop %v1511
        %v1513 = vmul.f32 %v1508, %v1512
        %1514 = vmatpush.msra.mxu0 %v818
        %1515 = vmatpush.msra.mxu0 %v817
        %1516 = vmatpush.msra.mxu0 %v816
        %1517 = vmatpush.msra.mxu0 %v815
        %1518 = vmatpush.msra.mxu0 %v814
        %1519 = vmatpush.msra.mxu0 %v813
        %1520 = vmatpush.msra.mxu0 %v812
        %1521 = vmatpush.msra.mxu0 %v811
        %1522 = vmatpush.msra.mxu0 %v810
        %1523 = vmatpush.msra.mxu0 %v809
        %1524 = vmatpush.msra.mxu0 %v808
        %1525 = vmatpush.msra.mxu0 %v807
        %1526 = vmatpush.msra.mxu0 %v806
        %1527 = vmatpush.msra.mxu0 %v805
        %1528 = vmatpush.msra.mxu0 %v804
        %1529 = vmatpush.msra.mxu0 %v803
        %1530 = vmatmul.f32.gmra.mxu0 %v1513
        %v1531 = vpop.f32.mrf.mxu0
        %v1532 = vadd.f32 0.0, %v1531
        %1533 = vdwg.mxu0
        %s1534 = scalar_lea.vmem %s386, 24 [#allocation17]
        %1535 = vst [vmem:[%s1534] sm:$0xff] %v1532
        %s1536 = sadd.s32 %s993, 3
        %p1537 = scmp.eq.s32.totalorder %s1536, 11
        // Predicated region
        $region81: #{tpu_custom_call.1} parent=35 // pred_check
          %p1538 = pneg %p1537
        $region82: #{tpu_custom_call.1} parent=35 // pred_check_branch
          %1540 = sbr.rel (%p1538) target = $region84
        $region83: #{tpu_custom_call.1} parent=35 // pred_region
          %1541 = vst [vmem:[%s393] sm:$0xff] %v1532
          %1542 = vst [vmem:[%s400] sm:$0xff] %v1511
        $region84: #{tpu_custom_call.1} parent=35 // pred_fallthru
          _
        %s1543 = scalar_lea.vmem [#allocation4], 128
        %v1544 = vld [vmem:[%s1543] sm:$0xff]
        %v1545 = vld [vmem:[%s1543 + $0x8] sm:$0xff]
        %v1546 = vld [vmem:[%s1543 + $0x10] sm:$0xff]
        %v1547 = vld [vmem:[%s1543 + $0x18] sm:$0xff]
        %1548 = vmatpush.msra.mxu0 %v799
        %1549 = vmatpush.msra.mxu0 %v795
        %1550 = vmatpush.msra.mxu0 %v791
        %1551 = vmatpush.msra.mxu0 %v787
        %1552 = vmatpush.msra.mxu0 %v783
        %1553 = vmatpush.msra.mxu0 %v779
        %1554 = vmatpush.msra.mxu0 %v775
        %1555 = vmatpush.msra.mxu0 %v771
        %1556 = vmatpush.msra.mxu0 %v767
        %1557 = vmatpush.msra.mxu0 %v763
        %1558 = vmatpush.msra.mxu0 %v759
        %1559 = vmatpush.msra.mxu0 %v755
        %1560 = vmatpush.msra.mxu0 %v751
        %1561 = vmatpush.msra.mxu0 %v747
        %1562 = vmatpush.msra.mxu0 %v743
        %1563 = vmatpush.msra.mxu0 %v739
        %1564 = vmatmul.f32.gmra.mxu0 %v1532
        %v1565 = vpop.f32.mrf.mxu0
        %v1566 = vadd.f32 0.0, %v1565
        %1567 = vdwg.mxu0
        %1568 = vmatpush.msra.mxu0 %v800
        %1569 = vmatpush.msra.mxu0 %v796
        %1570 = vmatpush.msra.mxu0 %v792
        %1571 = vmatpush.msra.mxu0 %v788
        %1572 = vmatpush.msra.mxu0 %v784
        %1573 = vmatpush.msra.mxu0 %v780
        %1574 = vmatpush.msra.mxu0 %v776
        %1575 = vmatpush.msra.mxu0 %v772
        %1576 = vmatpush.msra.mxu0 %v768
        %1577 = vmatpush.msra.mxu0 %v764
        %1578 = vmatpush.msra.mxu0 %v760
        %1579 = vmatpush.msra.mxu0 %v756
        %1580 = vmatpush.msra.mxu0 %v752
        %1581 = vmatpush.msra.mxu0 %v748
        %1582 = vmatpush.msra.mxu0 %v744
        %1583 = vmatpush.msra.mxu0 %v740
        %1584 = vmatmul.f32.gmra.mxu0 %v1532
        %v1585 = vpop.f32.mrf.mxu0
        %v1586 = vadd.f32 0.0, %v1585
        %1587 = vdwg.mxu0
        %1588 = vmatpush.msra.mxu0 %v801
        %1589 = vmatpush.msra.mxu0 %v797
        %1590 = vmatpush.msra.mxu0 %v793
        %1591 = vmatpush.msra.mxu0 %v789
        %1592 = vmatpush.msra.mxu0 %v785
        %1593 = vmatpush.msra.mxu0 %v781
        %1594 = vmatpush.msra.mxu0 %v777
        %1595 = vmatpush.msra.mxu0 %v773
        %1596 = vmatpush.msra.mxu0 %v769
        %1597 = vmatpush.msra.mxu0 %v765
        %1598 = vmatpush.msra.mxu0 %v761
        %1599 = vmatpush.msra.mxu0 %v757
        %1600 = vmatpush.msra.mxu0 %v753
        %1601 = vmatpush.msra.mxu0 %v749
        %1602 = vmatpush.msra.mxu0 %v745
        %1603 = vmatpush.msra.mxu0 %v741
        %1604 = vmatmul.f32.gmra.mxu0 %v1532
        %v1605 = vpop.f32.mrf.mxu0
        %v1606 = vadd.f32 0.0, %v1605
        %1607 = vdwg.mxu0
        %1608 = vmatpush.msra.mxu0 %v802
        %1609 = vmatpush.msra.mxu0 %v798
        %1610 = vmatpush.msra.mxu0 %v794
        %1611 = vmatpush.msra.mxu0 %v790
        %1612 = vmatpush.msra.mxu0 %v786
        %1613 = vmatpush.msra.mxu0 %v782
        %1614 = vmatpush.msra.mxu0 %v778
        %1615 = vmatpush.msra.mxu0 %v774
        %1616 = vmatpush.msra.mxu0 %v770
        %1617 = vmatpush.msra.mxu0 %v766
        %1618 = vmatpush.msra.mxu0 %v762
        %1619 = vmatpush.msra.mxu0 %v758
        %1620 = vmatpush.msra.mxu0 %v754
        %1621 = vmatpush.msra.mxu0 %v750
        %1622 = vmatpush.msra.mxu0 %v746
        %1623 = vmatpush.msra.mxu0 %v742
        %1624 = vmatmul.f32.gmra.mxu0 %v1532
        %v1625 = vpop.f32.mrf.mxu0
        %v1626 = vadd.f32 0.0, %v1625
        %1627 = vdwg.mxu0
        %v1628 = vadd.f32 %v1544, %v1566
        %v1629 = vadd.f32 %v1545, %v1586
        %v1630 = vadd.f32 %v1546, %v1606
        %v1631 = vadd.f32 %v1547, %v1626
        %v1632 = vxor.u32 %v1628, 2147483648
        %v1633 = vmul.f32 %v1632, 1.442695
        %v1634 = vpow.pop %v1633
        %v1635 = vadd.f32 %v1634, 1.0
        %v1636 = vrcp.pop %v1635
        %v1637 = vmul.f32 %v1635, %v1636
        %v1638 = vsub.f32 1.0, %v1637
        %v1639 = vmul.f32 %v1636, %v1638
        %v1640 = vadd.f32 %v1636, %v1639
        %vm1641 = vweird.f32 %v1635
        %vm1642 = vweird.f32 %v1636
        %vm1643 = vmor %vm1641, %vm1642
        %v1644 = vsel %vm1643, %v1636, %v1640
        %v1645 = vand.u32 2147483647, %v1635
        %vm1646 = vcmp.eq.f32.partialorder %v1645, 8.507059e+37
        %v1647 = vand.u32 %v1635, 2147483648
        %v1648 = vor.u32 1.1754944e-38, %v1647
        %v1649 = vsel %vm1646, %v1648, %v1644
        %v1650 = vmul.f32 1.0, %v1649
        %v1651 = vxor.u32 %v1629, 2147483648
        %v1652 = vmul.f32 %v1651, 1.442695
        %v1653 = vpow.pop %v1652
        %v1654 = vadd.f32 %v1653, 1.0
        %v1655 = vrcp.pop %v1654
        %v1656 = vmul.f32 %v1654, %v1655
        %v1657 = vsub.f32 1.0, %v1656
        %v1658 = vmul.f32 %v1655, %v1657
        %v1659 = vadd.f32 %v1655, %v1658
        %vm1660 = vweird.f32 %v1654
        %vm1661 = vweird.f32 %v1655
        %vm1662 = vmor %vm1660, %vm1661
        %v1663 = vsel %vm1662, %v1655, %v1659
        %v1664 = vand.u32 2147483647, %v1654
        %vm1665 = vcmp.eq.f32.partialorder %v1664, 8.507059e+37
        %v1666 = vand.u32 %v1654, 2147483648
        %v1667 = vor.u32 1.1754944e-38, %v1666
        %v1668 = vsel %vm1665, %v1667, %v1663
        %v1669 = vmul.f32 1.0, %v1668
        %v1670 = vtanh.pop %v1630
        %v1671 = vxor.u32 %v1631, 2147483648
        %v1672 = vmul.f32 %v1671, 1.442695
        %v1673 = vpow.pop %v1672
        %v1674 = vadd.f32 %v1673, 1.0
        %v1675 = vrcp.pop %v1674
        %v1676 = vmul.f32 %v1674, %v1675
        %v1677 = vsub.f32 1.0, %v1676
        %v1678 = vmul.f32 %v1675, %v1677
        %v1679 = vadd.f32 %v1675, %v1678
        %vm1680 = vweird.f32 %v1674
        %vm1681 = vweird.f32 %v1675
        %vm1682 = vmor %vm1680, %vm1681
        %v1683 = vsel %vm1682, %v1675, %v1679
        %v1684 = vand.u32 2147483647, %v1674
        %vm1685 = vcmp.eq.f32.partialorder %v1684, 8.507059e+37
        %v1686 = vand.u32 %v1674, 2147483648
        %v1687 = vor.u32 1.1754944e-38, %v1686
        %v1688 = vsel %vm1685, %v1687, %v1683
        %v1689 = vmul.f32 1.0, %v1688
        %v1690 = vmul.f32 %v1669, %v1511
        %v1691 = vmul.f32 %v1650, %v1670
        %v1692 = vadd.f32 %v1690, %v1691
        %v1693 = vtanh.pop %v1692
        %v1694 = vmul.f32 %v1689, %v1693
        %1695 = vmatpush.msra.mxu0 %v818
        %1696 = vmatpush.msra.mxu0 %v817
        %1697 = vmatpush.msra.mxu0 %v816
        %1698 = vmatpush.msra.mxu0 %v815
        %1699 = vmatpush.msra.mxu0 %v814
        %1700 = vmatpush.msra.mxu0 %v813
        %1701 = vmatpush.msra.mxu0 %v812
        %1702 = vmatpush.msra.mxu0 %v811
        %1703 = vmatpush.msra.mxu0 %v810
        %1704 = vmatpush.msra.mxu0 %v809
        %1705 = vmatpush.msra.mxu0 %v808
        %1706 = vmatpush.msra.mxu0 %v807
        %1707 = vmatpush.msra.mxu0 %v806
        %1708 = vmatpush.msra.mxu0 %v805
        %1709 = vmatpush.msra.mxu0 %v804
        %1710 = vmatpush.msra.mxu0 %v803
        %1711 = vmatmul.f32.gmra.mxu0 %v1694
        %v1712 = vpop.f32.mrf.mxu0
        %v1713 = vadd.f32 0.0, %v1712
        %1714 = vdwg.mxu0
        %s1715 = scalar_lea.vmem %s386, 32 [#allocation17]
        %1716 = vst [vmem:[%s1715] sm:$0xff] %v1713
        %s1717 = sadd.s32 %s993, 4
        %p1718 = scmp.eq.s32.totalorder %s1717, 11
        // Predicated region
        $region85: #{tpu_custom_call.1} parent=35 // pred_check
          %p1719 = pneg %p1718
        $region86: #{tpu_custom_call.1} parent=35 // pred_check_branch
          %1721 = sbr.rel (%p1719) target = $region88
        $region87: #{tpu_custom_call.1} parent=35 // pred_region
          %1722 = vst [vmem:[%s393] sm:$0xff] %v1713
          %1723 = vst [vmem:[%s400] sm:$0xff] %v1692
        $region88: #{tpu_custom_call.1} parent=35 // pred_fallthru
          _
        %s1724 = scalar_lea.vmem [#allocation4], 160
        %v1725 = vld [vmem:[%s1724] sm:$0xff]
        %v1726 = vld [vmem:[%s1724 + $0x8] sm:$0xff]
        %v1727 = vld [vmem:[%s1724 + $0x10] sm:$0xff]
        %v1728 = vld [vmem:[%s1724 + $0x18] sm:$0xff]
        %1729 = vmatpush.msra.mxu0 %v799
        %1730 = vmatpush.msra.mxu0 %v795
        %1731 = vmatpush.msra.mxu0 %v791
        %1732 = vmatpush.msra.mxu0 %v787
        %1733 = vmatpush.msra.mxu0 %v783
        %1734 = vmatpush.msra.mxu0 %v779
        %1735 = vmatpush.msra.mxu0 %v775
        %1736 = vmatpush.msra.mxu0 %v771
        %1737 = vmatpush.msra.mxu0 %v767
        %1738 = vmatpush.msra.mxu0 %v763
        %1739 = vmatpush.msra.mxu0 %v759
        %1740 = vmatpush.msra.mxu0 %v755
        %1741 = vmatpush.msra.mxu0 %v751
        %1742 = vmatpush.msra.mxu0 %v747
        %1743 = vmatpush.msra.mxu0 %v743
        %1744 = vmatpush.msra.mxu0 %v739
        %1745 = vmatmul.f32.gmra.mxu0 %v1713
        %v1746 = vpop.f32.mrf.mxu0
        %v1747 = vadd.f32 0.0, %v1746
        %1748 = vdwg.mxu0
        %1749 = vmatpush.msra.mxu0 %v800
        %1750 = vmatpush.msra.mxu0 %v796
        %1751 = vmatpush.msra.mxu0 %v792
        %1752 = vmatpush.msra.mxu0 %v788
        %1753 = vmatpush.msra.mxu0 %v784
        %1754 = vmatpush.msra.mxu0 %v780
        %1755 = vmatpush.msra.mxu0 %v776
        %1756 = vmatpush.msra.mxu0 %v772
        %1757 = vmatpush.msra.mxu0 %v768
        %1758 = vmatpush.msra.mxu0 %v764
        %1759 = vmatpush.msra.mxu0 %v760
        %1760 = vmatpush.msra.mxu0 %v756
        %1761 = vmatpush.msra.mxu0 %v752
        %1762 = vmatpush.msra.mxu0 %v748
        %1763 = vmatpush.msra.mxu0 %v744
        %1764 = vmatpush.msra.mxu0 %v740
        %1765 = vmatmul.f32.gmra.mxu0 %v1713
        %v1766 = vpop.f32.mrf.mxu0
        %v1767 = vadd.f32 0.0, %v1766
        %1768 = vdwg.mxu0
        %1769 = vmatpush.msra.mxu0 %v801
        %1770 = vmatpush.msra.mxu0 %v797
        %1771 = vmatpush.msra.mxu0 %v793
        %1772 = vmatpush.msra.mxu0 %v789
        %1773 = vmatpush.msra.mxu0 %v785
        %1774 = vmatpush.msra.mxu0 %v781
        %1775 = vmatpush.msra.mxu0 %v777
        %1776 = vmatpush.msra.mxu0 %v773
        %1777 = vmatpush.msra.mxu0 %v769
        %1778 = vmatpush.msra.mxu0 %v765
        %1779 = vmatpush.msra.mxu0 %v761
        %1780 = vmatpush.msra.mxu0 %v757
        %1781 = vmatpush.msra.mxu0 %v753
        %1782 = vmatpush.msra.mxu0 %v749
        %1783 = vmatpush.msra.mxu0 %v745
        %1784 = vmatpush.msra.mxu0 %v741
        %1785 = vmatmul.f32.gmra.mxu0 %v1713
        %v1786 = vpop.f32.mrf.mxu0
        %v1787 = vadd.f32 0.0, %v1786
        %1788 = vdwg.mxu0
        %1789 = vmatpush.msra.mxu0 %v802
        %1790 = vmatpush.msra.mxu0 %v798
        %1791 = vmatpush.msra.mxu0 %v794
        %1792 = vmatpush.msra.mxu0 %v790
        %1793 = vmatpush.msra.mxu0 %v786
        %1794 = vmatpush.msra.mxu0 %v782
        %1795 = vmatpush.msra.mxu0 %v778
        %1796 = vmatpush.msra.mxu0 %v774
        %1797 = vmatpush.msra.mxu0 %v770
        %1798 = vmatpush.msra.mxu0 %v766
        %1799 = vmatpush.msra.mxu0 %v762
        %1800 = vmatpush.msra.mxu0 %v758
        %1801 = vmatpush.msra.mxu0 %v754
        %1802 = vmatpush.msra.mxu0 %v750
        %1803 = vmatpush.msra.mxu0 %v746
        %1804 = vmatpush.msra.mxu0 %v742
        %1805 = vmatmul.f32.gmra.mxu0 %v1713
        %v1806 = vpop.f32.mrf.mxu0
        %v1807 = vadd.f32 0.0, %v1806
        %1808 = vdwg.mxu0
        %v1809 = vadd.f32 %v1725, %v1747
        %v1810 = vadd.f32 %v1726, %v1767
        %v1811 = vadd.f32 %v1727, %v1787
        %v1812 = vadd.f32 %v1728, %v1807
        %v1813 = vxor.u32 %v1809, 2147483648
        %v1814 = vmul.f32 %v1813, 1.442695
        %v1815 = vpow.pop %v1814
        %v1816 = vadd.f32 %v1815, 1.0
        %v1817 = vrcp.pop %v1816
        %v1818 = vmul.f32 %v1816, %v1817
        %v1819 = vsub.f32 1.0, %v1818
        %v1820 = vmul.f32 %v1817, %v1819
        %v1821 = vadd.f32 %v1817, %v1820
        %vm1822 = vweird.f32 %v1816
        %vm1823 = vweird.f32 %v1817
        %vm1824 = vmor %vm1822, %vm1823
        %v1825 = vsel %vm1824, %v1817, %v1821
        %v1826 = vand.u32 2147483647, %v1816
        %vm1827 = vcmp.eq.f32.partialorder %v1826, 8.507059e+37
        %v1828 = vand.u32 %v1816, 2147483648
        %v1829 = vor.u32 1.1754944e-38, %v1828
        %v1830 = vsel %vm1827, %v1829, %v1825
        %v1831 = vmul.f32 1.0, %v1830
        %v1832 = vxor.u32 %v1810, 2147483648
        %v1833 = vmul.f32 %v1832, 1.442695
        %v1834 = vpow.pop %v1833
        %v1835 = vadd.f32 %v1834, 1.0
        %v1836 = vrcp.pop %v1835
        %v1837 = vmul.f32 %v1835, %v1836
        %v1838 = vsub.f32 1.0, %v1837
        %v1839 = vmul.f32 %v1836, %v1838
        %v1840 = vadd.f32 %v1836, %v1839
        %vm1841 = vweird.f32 %v1835
        %vm1842 = vweird.f32 %v1836
        %vm1843 = vmor %vm1841, %vm1842
        %v1844 = vsel %vm1843, %v1836, %v1840
        %v1845 = vand.u32 2147483647, %v1835
        %vm1846 = vcmp.eq.f32.partialorder %v1845, 8.507059e+37
        %v1847 = vand.u32 %v1835, 2147483648
        %v1848 = vor.u32 1.1754944e-38, %v1847
        %v1849 = vsel %vm1846, %v1848, %v1844
        %v1850 = vmul.f32 1.0, %v1849
        %v1851 = vtanh.pop %v1811
        %v1852 = vxor.u32 %v1812, 2147483648
        %v1853 = vmul.f32 %v1852, 1.442695
        %v1854 = vpow.pop %v1853
        %v1855 = vadd.f32 %v1854, 1.0
        %v1856 = vrcp.pop %v1855
        %v1857 = vmul.f32 %v1855, %v1856
        %v1858 = vsub.f32 1.0, %v1857
        %v1859 = vmul.f32 %v1856, %v1858
        %v1860 = vadd.f32 %v1856, %v1859
        %vm1861 = vweird.f32 %v1855
        %vm1862 = vweird.f32 %v1856
        %vm1863 = vmor %vm1861, %vm1862
        %v1864 = vsel %vm1863, %v1856, %v1860
        %v1865 = vand.u32 2147483647, %v1855
        %vm1866 = vcmp.eq.f32.partialorder %v1865, 8.507059e+37
        %v1867 = vand.u32 %v1855, 2147483648
        %v1868 = vor.u32 1.1754944e-38, %v1867
        %v1869 = vsel %vm1866, %v1868, %v1864
        %v1870 = vmul.f32 1.0, %v1869
        %v1871 = vmul.f32 %v1850, %v1692
        %v1872 = vmul.f32 %v1831, %v1851
        %v1873 = vadd.f32 %v1871, %v1872
        %v1874 = vtanh.pop %v1873
        %v1875 = vmul.f32 %v1870, %v1874
        %1876 = vmatpush.msra.mxu0 %v818
        %1877 = vmatpush.msra.mxu0 %v817
        %1878 = vmatpush.msra.mxu0 %v816
        %1879 = vmatpush.msra.mxu0 %v815
        %1880 = vmatpush.msra.mxu0 %v814
        %1881 = vmatpush.msra.mxu0 %v813
        %1882 = vmatpush.msra.mxu0 %v812
        %1883 = vmatpush.msra.mxu0 %v811
        %1884 = vmatpush.msra.mxu0 %v810
        %1885 = vmatpush.msra.mxu0 %v809
        %1886 = vmatpush.msra.mxu0 %v808
        %1887 = vmatpush.msra.mxu0 %v807
        %1888 = vmatpush.msra.mxu0 %v806
        %1889 = vmatpush.msra.mxu0 %v805
        %1890 = vmatpush.msra.mxu0 %v804
        %1891 = vmatpush.msra.mxu0 %v803
        %1892 = vmatmul.f32.gmra.mxu0 %v1875
        %v1893 = vpop.f32.mrf.mxu0
        %v1894 = vadd.f32 0.0, %v1893
        %1895 = vdwg.mxu0
        %s1896 = scalar_lea.vmem %s386, 40 [#allocation17]
        %1897 = vst [vmem:[%s1896] sm:$0xff] %v1894
        %s1898 = sadd.s32 %s993, 5
        %p1899 = scmp.eq.s32.totalorder %s1898, 11
        // Predicated region
        $region89: #{tpu_custom_call.1} parent=35 // pred_check
          %p1900 = pneg %p1899
        $region90: #{tpu_custom_call.1} parent=35 // pred_check_branch
          %1902 = sbr.rel (%p1900) target = $region92
        $region91: #{tpu_custom_call.1} parent=35 // pred_region
          %1903 = vst [vmem:[%s393] sm:$0xff] %v1894
          %1904 = vst [vmem:[%s400] sm:$0xff] %v1873
        $region92: #{tpu_custom_call.1} parent=35 // pred_fallthru
          _
        %s1905 = scalar_lea.vmem [#allocation4], 192
        %v1906 = vld [vmem:[%s1905] sm:$0xff]
        %v1907 = vld [vmem:[%s1905 + $0x8] sm:$0xff]
        %v1908 = vld [vmem:[%s1905 + $0x10] sm:$0xff]
        %v1909 = vld [vmem:[%s1905 + $0x18] sm:$0xff]
        %1910 = vmatpush.msra.mxu0 %v799
        %1911 = vmatpush.msra.mxu0 %v795
        %1912 = vmatpush.msra.mxu0 %v791
        %1913 = vmatpush.msra.mxu0 %v787
        %1914 = vmatpush.msra.mxu0 %v783
        %1915 = vmatpush.msra.mxu0 %v779
        %1916 = vmatpush.msra.mxu0 %v775
        %1917 = vmatpush.msra.mxu0 %v771
        %1918 = vmatpush.msra.mxu0 %v767
        %1919 = vmatpush.msra.mxu0 %v763
        %1920 = vmatpush.msra.mxu0 %v759
        %1921 = vmatpush.msra.mxu0 %v755
        %1922 = vmatpush.msra.mxu0 %v751
        %1923 = vmatpush.msra.mxu0 %v747
        %1924 = vmatpush.msra.mxu0 %v743
        %1925 = vmatpush.msra.mxu0 %v739
        %1926 = vmatmul.f32.gmra.mxu0 %v1894
        %v1927 = vpop.f32.mrf.mxu0
        %v1928 = vadd.f32 0.0, %v1927
        %1929 = vdwg.mxu0
        %1930 = vmatpush.msra.mxu0 %v800
        %1931 = vmatpush.msra.mxu0 %v796
        %1932 = vmatpush.msra.mxu0 %v792
        %1933 = vmatpush.msra.mxu0 %v788
        %1934 = vmatpush.msra.mxu0 %v784
        %1935 = vmatpush.msra.mxu0 %v780
        %1936 = vmatpush.msra.mxu0 %v776
        %1937 = vmatpush.msra.mxu0 %v772
        %1938 = vmatpush.msra.mxu0 %v768
        %1939 = vmatpush.msra.mxu0 %v764
        %1940 = vmatpush.msra.mxu0 %v760
        %1941 = vmatpush.msra.mxu0 %v756
        %1942 = vmatpush.msra.mxu0 %v752
        %1943 = vmatpush.msra.mxu0 %v748
        %1944 = vmatpush.msra.mxu0 %v744
        %1945 = vmatpush.msra.mxu0 %v740
        %1946 = vmatmul.f32.gmra.mxu0 %v1894
        %v1947 = vpop.f32.mrf.mxu0
        %v1948 = vadd.f32 0.0, %v1947
        %1949 = vdwg.mxu0
        %1950 = vmatpush.msra.mxu0 %v801
        %1951 = vmatpush.msra.mxu0 %v797
        %1952 = vmatpush.msra.mxu0 %v793
        %1953 = vmatpush.msra.mxu0 %v789
        %1954 = vmatpush.msra.mxu0 %v785
        %1955 = vmatpush.msra.mxu0 %v781
        %1956 = vmatpush.msra.mxu0 %v777
        %1957 = vmatpush.msra.mxu0 %v773
        %1958 = vmatpush.msra.mxu0 %v769
        %1959 = vmatpush.msra.mxu0 %v765
        %1960 = vmatpush.msra.mxu0 %v761
        %1961 = vmatpush.msra.mxu0 %v757
        %1962 = vmatpush.msra.mxu0 %v753
        %1963 = vmatpush.msra.mxu0 %v749
        %1964 = vmatpush.msra.mxu0 %v745
        %1965 = vmatpush.msra.mxu0 %v741
        %1966 = vmatmul.f32.gmra.mxu0 %v1894
        %v1967 = vpop.f32.mrf.mxu0
        %v1968 = vadd.f32 0.0, %v1967
        %1969 = vdwg.mxu0
        %1970 = vmatpush.msra.mxu0 %v802
        %1971 = vmatpush.msra.mxu0 %v798
        %1972 = vmatpush.msra.mxu0 %v794
        %1973 = vmatpush.msra.mxu0 %v790
        %1974 = vmatpush.msra.mxu0 %v786
        %1975 = vmatpush.msra.mxu0 %v782
        %1976 = vmatpush.msra.mxu0 %v778
        %1977 = vmatpush.msra.mxu0 %v774
        %1978 = vmatpush.msra.mxu0 %v770
        %1979 = vmatpush.msra.mxu0 %v766
        %1980 = vmatpush.msra.mxu0 %v762
        %1981 = vmatpush.msra.mxu0 %v758
        %1982 = vmatpush.msra.mxu0 %v754
        %1983 = vmatpush.msra.mxu0 %v750
        %1984 = vmatpush.msra.mxu0 %v746
        %1985 = vmatpush.msra.mxu0 %v742
        %1986 = vmatmul.f32.gmra.mxu0 %v1894
        %v1987 = vpop.f32.mrf.mxu0
        %v1988 = vadd.f32 0.0, %v1987
        %1989 = vdwg.mxu0
        %v1990 = vadd.f32 %v1906, %v1928
        %v1991 = vadd.f32 %v1907, %v1948
        %v1992 = vadd.f32 %v1908, %v1968
        %v1993 = vadd.f32 %v1909, %v1988
        %v1994 = vxor.u32 %v1990, 2147483648
        %v1995 = vmul.f32 %v1994, 1.442695
        %v1996 = vpow.pop %v1995
        %v1997 = vadd.f32 %v1996, 1.0
        %v1998 = vrcp.pop %v1997
        %v1999 = vmul.f32 %v1997, %v1998
        %v2000 = vsub.f32 1.0, %v1999
        %v2001 = vmul.f32 %v1998, %v2000
        %v2002 = vadd.f32 %v1998, %v2001
        %vm2003 = vweird.f32 %v1997
        %vm2004 = vweird.f32 %v1998
        %vm2005 = vmor %vm2003, %vm2004
        %v2006 = vsel %vm2005, %v1998, %v2002
        %v2007 = vand.u32 2147483647, %v1997
        %vm2008 = vcmp.eq.f32.partialorder %v2007, 8.507059e+37
        %v2009 = vand.u32 %v1997, 2147483648
        %v2010 = vor.u32 1.1754944e-38, %v2009
        %v2011 = vsel %vm2008, %v2010, %v2006
        %v2012 = vmul.f32 1.0, %v2011
        %v2013 = vxor.u32 %v1991, 2147483648
        %v2014 = vmul.f32 %v2013, 1.442695
        %v2015 = vpow.pop %v2014
        %v2016 = vadd.f32 %v2015, 1.0
        %v2017 = vrcp.pop %v2016
        %v2018 = vmul.f32 %v2016, %v2017
        %v2019 = vsub.f32 1.0, %v2018
        %v2020 = vmul.f32 %v2017, %v2019
        %v2021 = vadd.f32 %v2017, %v2020
        %vm2022 = vweird.f32 %v2016
        %vm2023 = vweird.f32 %v2017
        %vm2024 = vmor %vm2022, %vm2023
        %v2025 = vsel %vm2024, %v2017, %v2021
        %v2026 = vand.u32 2147483647, %v2016
        %vm2027 = vcmp.eq.f32.partialorder %v2026, 8.507059e+37
        %v2028 = vand.u32 %v2016, 2147483648
        %v2029 = vor.u32 1.1754944e-38, %v2028
        %v2030 = vsel %vm2027, %v2029, %v2025
        %v2031 = vmul.f32 1.0, %v2030
        %v2032 = vtanh.pop %v1992
        %v2033 = vxor.u32 %v1993, 2147483648
        %v2034 = vmul.f32 %v2033, 1.442695
        %v2035 = vpow.pop %v2034
        %v2036 = vadd.f32 %v2035, 1.0
        %v2037 = vrcp.pop %v2036
        %v2038 = vmul.f32 %v2036, %v2037
        %v2039 = vsub.f32 1.0, %v2038
        %v2040 = vmul.f32 %v2037, %v2039
        %v2041 = vadd.f32 %v2037, %v2040
        %vm2042 = vweird.f32 %v2036
        %vm2043 = vweird.f32 %v2037
        %vm2044 = vmor %vm2042, %vm2043
        %v2045 = vsel %vm2044, %v2037, %v2041
        %v2046 = vand.u32 2147483647, %v2036
        %vm2047 = vcmp.eq.f32.partialorder %v2046, 8.507059e+37
        %v2048 = vand.u32 %v2036, 2147483648
        %v2049 = vor.u32 1.1754944e-38, %v2048
        %v2050 = vsel %vm2047, %v2049, %v2045
        %v2051 = vmul.f32 1.0, %v2050
        %v2052 = vmul.f32 %v2031, %v1873
        %v2053 = vmul.f32 %v2012, %v2032
        %v2054 = vadd.f32 %v2052, %v2053
        %v2055 = vtanh.pop %v2054
        %v2056 = vmul.f32 %v2051, %v2055
        %2057 = vmatpush.msra.mxu0 %v818
        %2058 = vmatpush.msra.mxu0 %v817
        %2059 = vmatpush.msra.mxu0 %v816
        %2060 = vmatpush.msra.mxu0 %v815
        %2061 = vmatpush.msra.mxu0 %v814
        %2062 = vmatpush.msra.mxu0 %v813
        %2063 = vmatpush.msra.mxu0 %v812
        %2064 = vmatpush.msra.mxu0 %v811
        %2065 = vmatpush.msra.mxu0 %v810
        %2066 = vmatpush.msra.mxu0 %v809
        %2067 = vmatpush.msra.mxu0 %v808
        %2068 = vmatpush.msra.mxu0 %v807
        %2069 = vmatpush.msra.mxu0 %v806
        %2070 = vmatpush.msra.mxu0 %v805
        %2071 = vmatpush.msra.mxu0 %v804
        %2072 = vmatpush.msra.mxu0 %v803
        %2073 = vmatmul.f32.gmra.mxu0 %v2056
        %v2074 = vpop.f32.mrf.mxu0
        %v2075 = vadd.f32 0.0, %v2074
        %2076 = vdwg.mxu0
        %s2077 = scalar_lea.vmem %s386, 48 [#allocation17]
        %2078 = vst [vmem:[%s2077] sm:$0xff] %v2075
        %s2079 = sadd.s32 %s993, 6
        %p2080 = scmp.eq.s32.totalorder %s2079, 11
        // Predicated region
        $region93: #{tpu_custom_call.1} parent=35 // pred_check
          %p2081 = pneg %p2080
        $region94: #{tpu_custom_call.1} parent=35 // pred_check_branch
          %2083 = sbr.rel (%p2081) target = $region96
        $region95: #{tpu_custom_call.1} parent=35 // pred_region
          %2084 = vst [vmem:[%s393] sm:$0xff] %v2075
          %2085 = vst [vmem:[%s400] sm:$0xff] %v2054
        $region96: #{tpu_custom_call.1} parent=35 // pred_fallthru
          _
        %s2086 = scalar_lea.vmem [#allocation4], 224
        %v2087 = vld [vmem:[%s2086] sm:$0xff]
        %v2088 = vld [vmem:[%s2086 + $0x8] sm:$0xff]
        %v2089 = vld [vmem:[%s2086 + $0x10] sm:$0xff]
        %v2090 = vld [vmem:[%s2086 + $0x18] sm:$0xff]
        %2091 = vmatpush.msra.mxu0 %v799
        %2092 = vmatpush.msra.mxu0 %v795
        %2093 = vmatpush.msra.mxu0 %v791
        %2094 = vmatpush.msra.mxu0 %v787
        %2095 = vmatpush.msra.mxu0 %v783
        %2096 = vmatpush.msra.mxu0 %v779
        %2097 = vmatpush.msra.mxu0 %v775
        %2098 = vmatpush.msra.mxu0 %v771
        %2099 = vmatpush.msra.mxu0 %v767
        %2100 = vmatpush.msra.mxu0 %v763
        %2101 = vmatpush.msra.mxu0 %v759
        %2102 = vmatpush.msra.mxu0 %v755
        %2103 = vmatpush.msra.mxu0 %v751
        %2104 = vmatpush.msra.mxu0 %v747
        %2105 = vmatpush.msra.mxu0 %v743
        %2106 = vmatpush.msra.mxu0 %v739
        %2107 = vmatmul.f32.gmra.mxu0 %v2075
        %v2108 = vpop.f32.mrf.mxu0
        %v2109 = vadd.f32 0.0, %v2108
        %2110 = vdwg.mxu0
        %2111 = vmatpush.msra.mxu0 %v800
        %2112 = vmatpush.msra.mxu0 %v796
        %2113 = vmatpush.msra.mxu0 %v792
        %2114 = vmatpush.msra.mxu0 %v788
        %2115 = vmatpush.msra.mxu0 %v784
        %2116 = vmatpush.msra.mxu0 %v780
        %2117 = vmatpush.msra.mxu0 %v776
        %2118 = vmatpush.msra.mxu0 %v772
        %2119 = vmatpush.msra.mxu0 %v768
        %2120 = vmatpush.msra.mxu0 %v764
        %2121 = vmatpush.msra.mxu0 %v760
        %2122 = vmatpush.msra.mxu0 %v756
        %2123 = vmatpush.msra.mxu0 %v752
        %2124 = vmatpush.msra.mxu0 %v748
        %2125 = vmatpush.msra.mxu0 %v744
        %2126 = vmatpush.msra.mxu0 %v740
        %2127 = vmatmul.f32.gmra.mxu0 %v2075
        %v2128 = vpop.f32.mrf.mxu0
        %v2129 = vadd.f32 0.0, %v2128
        %2130 = vdwg.mxu0
        %2131 = vmatpush.msra.mxu0 %v801
        %2132 = vmatpush.msra.mxu0 %v797
        %2133 = vmatpush.msra.mxu0 %v793
        %2134 = vmatpush.msra.mxu0 %v789
        %2135 = vmatpush.msra.mxu0 %v785
        %2136 = vmatpush.msra.mxu0 %v781
        %2137 = vmatpush.msra.mxu0 %v777
        %2138 = vmatpush.msra.mxu0 %v773
        %2139 = vmatpush.msra.mxu0 %v769
        %2140 = vmatpush.msra.mxu0 %v765
        %2141 = vmatpush.msra.mxu0 %v761
        %2142 = vmatpush.msra.mxu0 %v757
        %2143 = vmatpush.msra.mxu0 %v753
        %2144 = vmatpush.msra.mxu0 %v749
        %2145 = vmatpush.msra.mxu0 %v745
        %2146 = vmatpush.msra.mxu0 %v741
        %2147 = vmatmul.f32.gmra.mxu0 %v2075
        %v2148 = vpop.f32.mrf.mxu0
        %v2149 = vadd.f32 0.0, %v2148
        %2150 = vdwg.mxu0
        %2151 = vmatpush.msra.mxu0 %v802
        %2152 = vmatpush.msra.mxu0 %v798
        %2153 = vmatpush.msra.mxu0 %v794
        %2154 = vmatpush.msra.mxu0 %v790
        %2155 = vmatpush.msra.mxu0 %v786
        %2156 = vmatpush.msra.mxu0 %v782
        %2157 = vmatpush.msra.mxu0 %v778
        %2158 = vmatpush.msra.mxu0 %v774
        %2159 = vmatpush.msra.mxu0 %v770
        %2160 = vmatpush.msra.mxu0 %v766
        %2161 = vmatpush.msra.mxu0 %v762
        %2162 = vmatpush.msra.mxu0 %v758
        %2163 = vmatpush.msra.mxu0 %v754
        %2164 = vmatpush.msra.mxu0 %v750
        %2165 = vmatpush.msra.mxu0 %v746
        %2166 = vmatpush.msra.mxu0 %v742
        %2167 = vmatmul.f32.gmra.mxu0 %v2075
        %v2168 = vpop.f32.mrf.mxu0
        %v2169 = vadd.f32 0.0, %v2168
        %2170 = vdwg.mxu0
        %v2171 = vadd.f32 %v2087, %v2109
        %v2172 = vadd.f32 %v2088, %v2129
        %v2173 = vadd.f32 %v2089, %v2149
        %v2174 = vadd.f32 %v2090, %v2169
        %v2175 = vxor.u32 %v2171, 2147483648
        %v2176 = vmul.f32 %v2175, 1.442695
        %v2177 = vpow.pop %v2176
        %v2178 = vadd.f32 %v2177, 1.0
        %v2179 = vrcp.pop %v2178
        %v2180 = vmul.f32 %v2178, %v2179
        %v2181 = vsub.f32 1.0, %v2180
        %v2182 = vmul.f32 %v2179, %v2181
        %v2183 = vadd.f32 %v2179, %v2182
        %vm2184 = vweird.f32 %v2178
        %vm2185 = vweird.f32 %v2179
        %vm2186 = vmor %vm2184, %vm2185
        %v2187 = vsel %vm2186, %v2179, %v2183
        %v2188 = vand.u32 2147483647, %v2178
        %vm2189 = vcmp.eq.f32.partialorder %v2188, 8.507059e+37
        %v2190 = vand.u32 %v2178, 2147483648
        %v2191 = vor.u32 1.1754944e-38, %v2190
        %v2192 = vsel %vm2189, %v2191, %v2187
        %v2193 = vmul.f32 1.0, %v2192
        %v2194 = vxor.u32 %v2172, 2147483648
        %v2195 = vmul.f32 %v2194, 1.442695
        %v2196 = vpow.pop %v2195
        %v2197 = vadd.f32 %v2196, 1.0
        %v2198 = vrcp.pop %v2197
        %v2199 = vmul.f32 %v2197, %v2198
        %v2200 = vsub.f32 1.0, %v2199
        %v2201 = vmul.f32 %v2198, %v2200
        %v2202 = vadd.f32 %v2198, %v2201
        %vm2203 = vweird.f32 %v2197
        %vm2204 = vweird.f32 %v2198
        %vm2205 = vmor %vm2203, %vm2204
        %v2206 = vsel %vm2205, %v2198, %v2202
        %v2207 = vand.u32 2147483647, %v2197
        %vm2208 = vcmp.eq.f32.partialorder %v2207, 8.507059e+37
        %v2209 = vand.u32 %v2197, 2147483648
        %v2210 = vor.u32 1.1754944e-38, %v2209
        %v2211 = vsel %vm2208, %v2210, %v2206
        %v2212 = vmul.f32 1.0, %v2211
        %v2213 = vtanh.pop %v2173
        %v2214 = vxor.u32 %v2174, 2147483648
        %v2215 = vmul.f32 %v2214, 1.442695
        %v2216 = vpow.pop %v2215
        %v2217 = vadd.f32 %v2216, 1.0
        %v2218 = vrcp.pop %v2217
        %v2219 = vmul.f32 %v2217, %v2218
        %v2220 = vsub.f32 1.0, %v2219
        %v2221 = vmul.f32 %v2218, %v2220
        %v2222 = vadd.f32 %v2218, %v2221
        %vm2223 = vweird.f32 %v2217
        %vm2224 = vweird.f32 %v2218
        %vm2225 = vmor %vm2223, %vm2224
        %v2226 = vsel %vm2225, %v2218, %v2222
        %v2227 = vand.u32 2147483647, %v2217
        %vm2228 = vcmp.eq.f32.partialorder %v2227, 8.507059e+37
        %v2229 = vand.u32 %v2217, 2147483648
        %v2230 = vor.u32 1.1754944e-38, %v2229
        %v2231 = vsel %vm2228, %v2230, %v2226
        %v2232 = vmul.f32 1.0, %v2231
        %v2233 = vmul.f32 %v2212, %v2054
        %v2234 = vmul.f32 %v2193, %v2213
        %v2235 = vadd.f32 %v2233, %v2234
        %v2236 = vtanh.pop %v2235
        %v2237 = vmul.f32 %v2232, %v2236
        %2238 = vmatpush.msra.mxu0 %v818
        %2239 = vmatpush.msra.mxu0 %v817
        %2240 = vmatpush.msra.mxu0 %v816
        %2241 = vmatpush.msra.mxu0 %v815
        %2242 = vmatpush.msra.mxu0 %v814
        %2243 = vmatpush.msra.mxu0 %v813
        %2244 = vmatpush.msra.mxu0 %v812
        %2245 = vmatpush.msra.mxu0 %v811
        %2246 = vmatpush.msra.mxu0 %v810
        %2247 = vmatpush.msra.mxu0 %v809
        %2248 = vmatpush.msra.mxu0 %v808
        %2249 = vmatpush.msra.mxu0 %v807
        %2250 = vmatpush.msra.mxu0 %v806
        %2251 = vmatpush.msra.mxu0 %v805
        %2252 = vmatpush.msra.mxu0 %v804
        %2253 = vmatpush.msra.mxu0 %v803
        %2254 = vmatmul.f32.gmra.mxu0 %v2237
        %v2255 = vpop.f32.mrf.mxu0
        %v2256 = vadd.f32 0.0, %v2255
        %2257 = vdwg.mxu0
        %s2258 = scalar_lea.vmem %s386, 56 [#allocation17]
        %2259 = vst [vmem:[%s2258] sm:$0xff] %v2256
        %s2260 = sadd.s32 %s993, 7
        %p2261 = scmp.eq.s32.totalorder %s2260, 11
        // Predicated region
        $region97: #{tpu_custom_call.1} parent=35 // pred_check
          %p2262 = pneg %p2261
        $region98: #{tpu_custom_call.1} parent=35 // pred_check_branch
          %2264 = sbr.rel (%p2262) target = $region100
        $region99: #{tpu_custom_call.1} parent=35 // pred_region
          %2265 = vst [vmem:[%s393] sm:$0xff] %v2256
          %2266 = vst [vmem:[%s400] sm:$0xff] %v2235
        $region100: #{tpu_custom_call.1} parent=35 // pred_fallthru
          _
        %2267 = vst [vmem:[#allocation2] sm:$0xff] %v2256
        %2268 = vst [vmem:[#allocation3] sm:$0xff] %v2235
        %s2269 = sand.u32 %s157, 1
        %s2270 = scalar_lea.sflag [#allocation11], %s2269
        %s2271 = sand.u32 %s157, 1
        %s2272 = smul.addr %s2271, 64
        %s2273 = scalar_lea.vmem [#allocation17], %s2272
        %s2274 = sand.u32 %s34, 1
        %s2275 = scalar_lea.sflag [#allocation19], %s2274
        %s2276 = sand.u32 %s183, 1
        %s2277 = smul.addr %s2276, 8
        %s2278 = scalar_lea.vmem [#allocation18], %s2277
        %s2279 = sand.u32 %s34, 1
        %s2280 = scalar_lea.sflag [#allocation19], %s2279
        %s2281 = sand.u32 %s209, 1
        %s2282 = smul.addr %s2281, 8
        %s2283 = scalar_lea.vmem [#allocation20], %s2282
        // Predicated region
        $region101: #{tpu_custom_call.1} parent=35 // pred_check
          %p2284 = pneg %p167
        $region102: #{tpu_custom_call.1} parent=35 // pred_check_branch
          %2286 = sbr.rel (%p2284) target = $region104
        $region103: #{tpu_custom_call.1} parent=35 // pred_region
          %s2287 = smul.u32 8, %s39
          %2289 = vsyncadd %s2270, 0
          %s2290 = smul.addr %s2287, 2
          %s2291 = sadd.s32 %s38, %s2290
          %s2292 = smul.addr %s2291, 8
          %s2293 = scalar_lea.hbm %s7, %s2292
          %s2294 = sshll.u32 %s2273, 4
          %s2295 = int_to_ptr.vmem [resolvable:$true] %s2294
          %s2296 = sshll.u32 %s2293, 4
          %s2297 = int_to_ptr.hbm [resolvable:$true] %s2296
          %2302 = dma.vmem_to_hbm [thread:$0]  %s2295, 1024, %s2297, %s2270, 128, 256, 8
        $region104: #{tpu_custom_call.1} parent=35 // pred_fallthru
          _
        // Predicated region
        $region105: #{tpu_custom_call.1} parent=35 // pred_check
          %p2303 = pneg %p193
        $region106: #{tpu_custom_call.1} parent=35 // pred_check_branch
          %2305 = sbr.rel (%p2303) target = $region108
        $region107: #{tpu_custom_call.1} parent=35 // pred_region
          %2307 = vsyncadd %s2275, 0
          %s2308 = smul.addr %s38, 8
          %s2309 = scalar_lea.hbm %s8, %s2308
          %s2311 = sshll.u32 %s2278, 4
          %s2312 = int_to_ptr.vmem [resolvable:$true] %s2311
          %s2313 = sshll.u32 %s2309, 4
          %s2314 = int_to_ptr.hbm [resolvable:$true] %s2313
          %2316 = dma.vmem_to_hbm [thread:$0]  %s2312, 128, %s2314, %s2275
        $region108: #{tpu_custom_call.1} parent=35 // pred_fallthru
          _
        // Predicated region
        $region109: #{tpu_custom_call.1} parent=35 // pred_check
          %p2317 = pneg %p219
        $region110: #{tpu_custom_call.1} parent=35 // pred_check_branch
          %2319 = sbr.rel (%p2317) target = $region112
        $region111: #{tpu_custom_call.1} parent=35 // pred_region
          %2321 = vsyncadd %s2280, 0
          %s2322 = smul.addr %s38, 8
          %s2323 = scalar_lea.hbm %s9, %s2322
          %s2325 = sshll.u32 %s2283, 4
          %s2326 = int_to_ptr.vmem [resolvable:$true] %s2325
          %s2327 = sshll.u32 %s2323, 4
          %s2328 = int_to_ptr.hbm [resolvable:$true] %s2327
          %2330 = dma.vmem_to_hbm [thread:$0]  %s2326, 128, %s2328, %s2280
        $region112: #{tpu_custom_call.1} parent=35 // pred_fallthru
          _
      $region36: #{tpu_custom_call.1} parent=5 // pred_fallthru
        _
      %p2331 = scmp.le.s32.totalorder 2, %s29
      // Predicated region
      $region113: #{tpu_custom_call.1} parent=5 // pred_check
        %p2332 = pneg %p2331
      $region114: #{tpu_custom_call.1} parent=5 // pred_check_branch
        %2334 = sbr.rel (%p2332) target = $region116
      $region115: #{tpu_custom_call.1} parent=5 // pred_region
        %s2335 = ssub.s32 %s29, 2
        // Predicated region
        $region117: #{tpu_custom_call.1} parent=115 // pred_check
          %p2336 = pneg %p173
        $region118: #{tpu_custom_call.1} parent=115 // pred_check_branch
          %2338 = sbr.rel (%p2336) target = $region120
        $region119: #{tpu_custom_call.1} parent=115 // pred_region
          %s2339 = sand.u32 %s158, 1
          %s2340 = scalar_lea.sflag [#allocation11], %s2339
          %s2341 = sand.u32 %s158, 1
          %s2342 = smul.addr %s2341, 64
          %s2343 = scalar_lea.vmem [#allocation17], %s2342
          %2345 = dma.done %s2340, 1024
        $region120: #{tpu_custom_call.1} parent=115 // pred_fallthru
          _
        // Predicated region
        $region121: #{tpu_custom_call.1} parent=115 // pred_check
          %p2346 = pneg %p199
        $region122: #{tpu_custom_call.1} parent=115 // pred_check_branch
          %2348 = sbr.rel (%p2346) target = $region124
        $region123: #{tpu_custom_call.1} parent=115 // pred_region
          %s2349 = sand.u32 %s35, 1
          %s2350 = scalar_lea.sflag [#allocation19], %s2349
          %s2351 = sand.u32 %s184, 1
          %s2352 = smul.addr %s2351, 8
          %s2353 = scalar_lea.vmem [#allocation18], %s2352
          %2355 = dma.done %s2350, 128
        $region124: #{tpu_custom_call.1} parent=115 // pred_fallthru
          _
        // Predicated region
        $region125: #{tpu_custom_call.1} parent=115 // pred_check
          %p2356 = pneg %p225
        $region126: #{tpu_custom_call.1} parent=115 // pred_check_branch
          %2358 = sbr.rel (%p2356) target = $region128
        $region127: #{tpu_custom_call.1} parent=115 // pred_region
          %s2359 = sand.u32 %s35, 1
          %s2360 = scalar_lea.sflag [#allocation19], %s2359
          %s2361 = sand.u32 %s210, 1
          %s2362 = smul.addr %s2361, 8
          %s2363 = scalar_lea.vmem [#allocation20], %s2362
          %2365 = dma.done %s2360, 128
        $region128: #{tpu_custom_call.1} parent=115 // pred_fallthru
          _
      $region116: #{tpu_custom_call.1} parent=5 // pred_fallthru
        _
    $region6: #{tpu_custom_call.1} parent=1 // loop_footer
      %s33 = sadd.s32 1, %s29
    $region7: #{tpu_custom_call.1} parent=1 // loop_footer_branch
      %28 = sbr.rel target = $region3
    $region8: #{tpu_custom_call.1} parent=1 // loop_exit
      _
    %2366 = vsyncpa [#allocation10], 1
    %s2367 = scalar_lea.sflag [#allocation10], 1
    %2368 = vsyncpa %s2367, 1
    %2369 = vsyncpa [#allocation13], 1
    %s2370 = scalar_lea.sflag [#allocation13], 1
    %2371 = vsyncpa %s2370, 1
    %2372 = vsyncpa [#allocation16], 1
    %2373 = vsyncpa [#allocation11], 1
    %s2374 = scalar_lea.sflag [#allocation11], 1
    %2375 = vsyncpa %s2374, 1
    %2376 = vsyncpa [#allocation19], 1
    %s2377 = scalar_lea.sflag [#allocation19], 1
    %2378 = vsyncpa %s2377, 1
  %2379 = vsyncmov [#allocation8]
  %s2380 = vpop.sfrf %2379
  %p2381 = scmp.eq.s32.totalorder %s2380, 0
  %p2382 = pneg %p2381
  %2384 = shalt.err (%p2382)
  %s2385 = scalar_lea.sflag [#allocation8], 1
  %2386 = vsyncmov %s2385
  %s2387 = vpop.sfrf %2386
  %p2388 = scmp.eq.s32.totalorder %s2387, 0
  %p2389 = pneg %p2388
  %2391 = shalt.err (%p2389)
  %s2392 = scalar_lea.sflag [#allocation8], 2
  %2393 = vsyncmov %s2392
  %s2394 = vpop.sfrf %2393
  %p2395 = scmp.eq.s32.totalorder %s2394, 0
  %p2396 = pneg %p2395
  %2398 = shalt.err (%p2396)

</llo_original>
